<compile_context>
chip_gen: v7x
topology: tpu7x:2x2x1
jax: 0.10.0
libtpu: 0.0.40
codegen_flags: <defaults>
</compile_context>

<pallas_src>
import jax
import jax.numpy as jnp
import numpy as np
from jax.experimental import pallas as pl
from jax.experimental.pallas import tpu as pltpu

# ----------------------------- small config ---------------------------------
DIM = 32              # embed_dim == hidden_dim (all if_* flags False)
NUM_LAYER = 3         # encoder depth (module default 6; kept small)
NODE = 16             # num_nodes
INPUT_DIM = 4         # channels used from history data
INPUT_LEN = 8         # history length L
ALIGN_DIM = 64        # hidden_align_layer out channels
OUTPUT_LEN = 1        # regression_layer out channels
STATUS = [3] * 23
STATUS_NUM = sum(STATUS)   # 69
B = 2                 # batch
C_TOTAL = 5           # raw history channels (>= INPUT_DIM)
ROWS = B * NODE       # 32 rows -> one tile, one grid step
FEAT_IN = INPUT_LEN * INPUT_DIM


# ----------------------------- Pallas kernel ---------------------------------
def stid_fused_kernel(x_ref, wts_ref, bts_ref, w1_ref, b1_ref, w2_ref, b2_ref,
                      wp_ref, bp_ref, wf_ref, bf_ref, sel_ref,
                      pred_ref, status_ref):
    """Full STID forward for all B*N tokens in one grid step.

    x_ref:   (B*N, L*C_in)        flattened history per node
    wts/bts: time_series_emb_layer as [in,out] matmul weights
    w1/b1, w2/b2: stacked encoder MLP weights (NUM_LAYER, DIM, DIM)/(NUM_LAYER, 1, DIM)
    wp/bp:   regression head folded through hidden_align: (DIM, 1)/(1, 1)
    wf/bf:   classifier folded through hidden_align: (NODE, DIM, S)/(1, S)
    sel:     (NODE, B, B*N) one-hot row selectors; sel[n] @ h == h rows {b*N+n}_b
    """
    # time_series_emb_layer: Conv2d(L*C_in -> DIM, 1x1)
    h = jnp.dot(x_ref[...], wts_ref[...],
                preferred_element_type=jnp.float32) + bts_ref[...]

    # encoder: NUM_LAYER x (fc1 -> ReLU -> dropout(identity at inference) -> fc2 -> residual)
    for l in range(NUM_LAYER):
        z = jnp.dot(h, w1_ref[l], preferred_element_type=jnp.float32) + b1_ref[l]
        z = jnp.maximum(z, 0.0)
        z = jnp.dot(z, w2_ref[l], preferred_element_type=jnp.float32) + b2_ref[l]
        h = h + z

    # regression_layer folded through hidden_align_layer (both linear, no act):
    # pred = (h @ W_a + b_a) @ W_r + b_r = h @ (W_a @ W_r) + (b_a @ W_r + b_r)
    pred_ref[...] = jnp.dot(h, wp_ref[...],
                            preferred_element_type=jnp.float32) + bp_ref[...]

    # classifier folded through hidden_align_layer, fused into this kernel.
    # status[b, :] = sum_n h[b*N + n, :] @ wf[n] + bf
    acc = jnp.zeros(status_ref.shape, jnp.float32)
    for n in range(NODE):
        hn = jnp.dot(sel_ref[n], h, preferred_element_type=jnp.float32)      # (B, DIM)
        acc = acc + jnp.dot(hn, wf_ref[n], preferred_element_type=jnp.float32)
    status_ref[...] = acc + bf_ref[...]


# ----------------------------- wrapper ---------------------------------------
def stid_forward(history_data, fp):
    """history_data: [B, L, N, C_total] -> (prediction [B,1,N,1], status [B, STATUS_NUM])."""
    Bq, L, N, _ = history_data.shape
    # input_data = history_data[..., :input_dim]; transpose(1,2); view(B,N,-1)
    x = history_data[..., :INPUT_DIM]
    x = jnp.transpose(x, (0, 2, 1, 3)).reshape(Bq * N, L * INPUT_DIM)  # col = l*C_in + c

    pred_rows, status = pl.pallas_call(
        stid_fused_kernel,
        out_shape=(jax.ShapeDtypeStruct((Bq * N, OUTPUT_LEN), jnp.float32),
                   jax.ShapeDtypeStruct((Bq, STATUS_NUM), jnp.float32)),
        grid=(1,),
        in_specs=[
            pl.BlockSpec((Bq * N, L * INPUT_DIM), lambda i: (0, 0)),          # x
            pl.BlockSpec((L * INPUT_DIM, DIM), lambda i: (0, 0)),             # w_ts
            pl.BlockSpec((1, DIM), lambda i: (0, 0)),                         # b_ts
            pl.BlockSpec((NUM_LAYER, DIM, DIM), lambda i: (0, 0, 0)),         # w1
            pl.BlockSpec((NUM_LAYER, 1, DIM), lambda i: (0, 0, 0)),           # b1
            pl.BlockSpec((NUM_LAYER, DIM, DIM), lambda i: (0, 0, 0)),         # w2
            pl.BlockSpec((NUM_LAYER, 1, DIM), lambda i: (0, 0, 0)),           # b2
            pl.BlockSpec((DIM, OUTPUT_LEN), lambda i: (0, 0)),                # w_pred (folded)
            pl.BlockSpec((1, OUTPUT_LEN), lambda i: (0, 0)),                  # b_pred (folded)
            pl.BlockSpec((N, DIM, STATUS_NUM), lambda i: (0, 0, 0)),          # w_cls_fold
            pl.BlockSpec((1, STATUS_NUM), lambda i: (0, 0)),                  # b_cls_fold
            pl.BlockSpec((N, Bq, Bq * N), lambda i: (0, 0, 0)),               # sel
        ],
        out_specs=(pl.BlockSpec((Bq * N, OUTPUT_LEN), lambda i: (0, 0)),
                   pl.BlockSpec((Bq, STATUS_NUM), lambda i: (0, 0))),
        compiler_params=pltpu.CompilerParams(dimension_semantics=("arbitrary",)),
    )(x, fp["w_ts"], fp["b_ts"], fp["w1"], fp["b1"], fp["w2"], fp["b2"],
      fp["w_pred"], fp["b_pred"], fp["w_cls_fold"], fp["b_cls_fold"], fp["sel"])

    # regression output [B*N, 1] (row = b*N + n) -> NCHW [B, 1, N, 1].
    # NOTE: this reshape relies on OUTPUT_LEN == 1 (matches the module default).
    prediction = pred_rows.reshape(Bq, OUTPUT_LEN, N, 1)
    return prediction, status


# ----------------------------- reference & init ------------------------------
def stid_reference(history_data, params):
    """Pure-JAX reference following the original (unfolded) PyTorch computation."""
    Bq, L, N, _ = history_data.shape
    x = history_data[..., :INPUT_DIM]
    x = jnp.transpose(x, (0, 2, 1, 3)).reshape(Bq * N, L * INPUT_DIM)
    h = x @ params["w_ts"] + params["b_ts"]
    for l in range(NUM_LAYER):
        z = jnp.maximum(h @ params["w1"][l] + params["b1"][l], 0.0)
        z = z @ params["w2"][l] + params["b2"][l]
        h = h + z
    a = h @ params["w_align"] + params["b_align"]                     # (B*N, 64)
    pred = (a @ params["w_reg"] + params["b_reg"]).reshape(Bq, OUTPUT_LEN, N, 1)
    # torch.flatten([B, 64, N, 1], start_dim=1) -> index c*N + n
    flat = a.reshape(Bq, N, ALIGN_DIM).transpose(0, 2, 1).reshape(Bq, ALIGN_DIM * N)
    status = flat @ params["w_cls"] + params["b_cls"]
    return pred, status


def init_params(key):
    ks = jax.random.split(key, 11)

    def glorot(k, shape):
        fan_in, fan_out = shape[-2], shape[-1]
        lim = (6.0 / (fan_in + fan_out)) ** 0.5
        return jax.random.uniform(k, shape, jnp.float32, -lim, lim)

    return dict(
        w_ts=glorot(ks[0], (INPUT_LEN * INPUT_DIM, DIM)),
        b_ts=0.01 * jax.random.normal(ks[1], (1, DIM), jnp.float32),
        w1=glorot(ks[2], (NUM_LAYER, DIM, DIM)),
        b1=0.01 * jax.random.normal(ks[3], (NUM_LAYER, 1, DIM), jnp.float32),
        w2=glorot(ks[4], (NUM_LAYER, DIM, DIM)),
        b2=0.01 * jax.random.normal(ks[5], (NUM_LAYER, 1, DIM), jnp.float32),
        w_align=glorot(ks[6], (DIM, ALIGN_DIM)),
        b_align=0.01 * jax.random.normal(ks[7], (1, ALIGN_DIM), jnp.float32),
        w_reg=glorot(ks[8], (ALIGN_DIM, OUTPUT_LEN)),
        b_reg=jnp.zeros((1, OUTPUT_LEN), jnp.float32),
        w_cls=glorot(ks[9], (ALIGN_DIM * NODE, STATUS_NUM)),   # row index = c*N + n
        b_cls=0.01 * jax.random.normal(ks[10], (1, STATUS_NUM), jnp.float32),
    )


def fold_params(params):
    """One-time algebraic folding of the linear heads through hidden_align."""
    wa, ba = params["w_align"], params["b_align"]        # (DIM, 64), (1, 64)
    wr, br = params["w_reg"], params["b_reg"]            # (64, 1),  (1, 1)
    wc, bc = params["w_cls"], params["b_cls"]            # (64*N, S), (1, S)

    # classifier weight in PyTorch flatten order (row = c*N + n) -> per-node (N, 64, S)
    wc3 = wc.reshape(ALIGN_DIM, NODE, STATUS_NUM).transpose(1, 0, 2)
    w_cls_fold = jnp.einsum("dc,ncs->nds", wa, wc3)       # (N, DIM, S)
    b_cls_fold = ba @ wc3.sum(axis=0) + bc                # (1, S)

    w_pred = wa @ wr                                      # (DIM, 1)
    b_pred = ba @ wr + br                                 # (1, 1)

    # one-hot row selectors: sel[n, b, b*N + n] = 1
    sel = np.zeros((NODE, B, B * NODE), np.float32)
    for n in range(NODE):
        for b in range(B):
            sel[n, b, b * NODE + n] = 1.0

    return dict(
        w_ts=params["w_ts"], b_ts=params["b_ts"],
        w1=params["w1"], b1=params["b1"],
        w2=params["w2"], b2=params["b2"],
        w_pred=w_pred, b_pred=b_pred,
        w_cls_fold=w_cls_fold, b_cls_fold=b_cls_fold,
        sel=jnp.asarray(sel),
    )


# ----------------------------- main ------------------------------------------
if __name__ == "__main__":
    key = jax.random.PRNGKey(0)
    pkey, dkey = jax.random.split(key)
    params = init_params(pkey)
    folded = fold_params(params)
    history = jax.random.normal(dkey, (B, INPUT_LEN, NODE, C_TOTAL), jnp.float32)

    fwd = jax.jit(stid_forward)
    prediction, status = fwd(history, folded)
    jax.block_until_ready((prediction, status))

    assert prediction.shape == (B, OUTPUT_LEN, NODE, 1)
    assert status.shape == (B, STATUS_NUM)

    ref_pred, ref_status = stid_reference(history, params)
    np.testing.assert_allclose(np.asarray(prediction), np.asarray(ref_pred),
                               rtol=1e-4, atol=1e-4)
    np.testing.assert_allclose(np.asarray(status), np.asarray(ref_status),
                               rtol=1e-4, atol=1e-4)

    print("KERNEL_OK")
</pallas_src>

<mosaic_0001>
module attributes {stable_mosaic.version = 11 : i64} {
  func.func @stid_fused_kernel(%arg0: i32, %arg1: memref<32x32xf32, #tpu.memory_space<vmem>>, %arg2: memref<32x32xf32, #tpu.memory_space<vmem>>, %arg3: memref<1x32xf32, #tpu.memory_space<vmem>>, %arg4: memref<3x32x32xf32, #tpu.memory_space<vmem>>, %arg5: memref<3x1x32xf32, #tpu.memory_space<vmem>>, %arg6: memref<3x32x32xf32, #tpu.memory_space<vmem>>, %arg7: memref<3x1x32xf32, #tpu.memory_space<vmem>>, %arg8: memref<32x1xf32, #tpu.memory_space<vmem>>, %arg9: memref<1x1xf32, #tpu.memory_space<vmem>>, %arg10: memref<16x32x69xf32, #tpu.memory_space<vmem>>, %arg11: memref<1x69xf32, #tpu.memory_space<vmem>>, %arg12: memref<16x2x32xf32, #tpu.memory_space<vmem>>, %arg13: memref<32x1xf32, #tpu.memory_space<vmem>>, %arg14: memref<2x69xf32, #tpu.memory_space<vmem>>) attributes {dimension_semantics = [#tpu.dimension_semantics<arbitrary>], iteration_bounds = array<i64: 1>, scalar_prefetch = 0 : i64, scratch_operands = 0 : i64, tpu.core_type = #tpu.core_type<tc>, window_params = [{pipeline_mode = #tpu.pipeline_mode<synchronous>, transform_indices = @transform_0, window_bounds = array<i64: 32, 32>}, {pipeline_mode = #tpu.pipeline_mode<synchronous>, transform_indices = @transform_1, window_bounds = array<i64: 32, 32>}, {pipeline_mode = #tpu.pipeline_mode<synchronous>, transform_indices = @transform_2, window_bounds = array<i64: 1, 32>}, {pipeline_mode = #tpu.pipeline_mode<synchronous>, transform_indices = @transform_3, window_bounds = array<i64: 3, 32, 32>}, {pipeline_mode = #tpu.pipeline_mode<synchronous>, transform_indices = @transform_4, window_bounds = array<i64: 3, 1, 32>}, {pipeline_mode = #tpu.pipeline_mode<synchronous>, transform_indices = @transform_5, window_bounds = array<i64: 3, 32, 32>}, {pipeline_mode = #tpu.pipeline_mode<synchronous>, transform_indices = @transform_6, window_bounds = array<i64: 3, 1, 32>}, {pipeline_mode = #tpu.pipeline_mode<synchronous>, transform_indices = @transform_7, window_bounds = array<i64: 32, 1>}, {pipeline_mode = #tpu.pipeline_mode<synchronous>, transform_indices = @transform_8, window_bounds = array<i64: 1, 1>}, {pipeline_mode = #tpu.pipeline_mode<synchronous>, transform_indices = @transform_9, window_bounds = array<i64: 16, 32, 69>}, {pipeline_mode = #tpu.pipeline_mode<synchronous>, transform_indices = @transform_10, window_bounds = array<i64: 1, 69>}, {pipeline_mode = #tpu.pipeline_mode<synchronous>, transform_indices = @transform_11, window_bounds = array<i64: 16, 2, 32>}, {pipeline_mode = #tpu.pipeline_mode<synchronous>, transform_indices = @transform_12, window_bounds = array<i64: 32, 1>}, {pipeline_mode = #tpu.pipeline_mode<synchronous>, transform_indices = @transform_13, window_bounds = array<i64: 2, 69>}]} {
    %c0 = arith.constant 0 : index
    %c0_0 = arith.constant 0 : index
    %0 = vector.load %arg1[%c0, %c0_0] : memref<32x32xf32, #tpu.memory_space<vmem>>, vector<32x32xf32>
    %c0_1 = arith.constant 0 : index
    %c0_2 = arith.constant 0 : index
    %1 = vector.load %arg2[%c0_1, %c0_2] : memref<32x32xf32, #tpu.memory_space<vmem>>, vector<32x32xf32>
    %cst = arith.constant dense<0.000000e+00> : vector<32x32xf32>
    %2 = tpu.matmul %0, %1, %cst {dimension_numbers = #tpu.dot_dimension_numbers<[1], [0], [0], [1], [0, 0, 1, 1], [], []>} : vector<32x32xf32>, vector<32x32xf32>, vector<32x32xf32> -> vector<32x32xf32>
    %c0_3 = arith.constant 0 : index
    %c0_4 = arith.constant 0 : index
    %3 = vector.load %arg3[%c0_3, %c0_4] : memref<1x32xf32, #tpu.memory_space<vmem>>, vector<1x32xf32>
    %4 = vector.broadcast %3 : vector<1x32xf32> to vector<32x32xf32>
    %5 = arith.addf %2, %4 : vector<32x32xf32>
    %c0_5 = arith.constant 0 : index
    %c0_6 = arith.constant 0 : index
    %c0_7 = arith.constant 0 : index
    %6 = vector.load %arg4[%c0_5, %c0_6, %c0_7] : memref<3x32x32xf32, #tpu.memory_space<vmem>>, vector<1x32x32xf32>
    %7 = vector.shape_cast %6 : vector<1x32x32xf32> to vector<32x32xf32>
    %cst_8 = arith.constant dense<0.000000e+00> : vector<32x32xf32>
    %8 = tpu.matmul %5, %7, %cst_8 {dimension_numbers = #tpu.dot_dimension_numbers<[1], [0], [0], [1], [0, 0, 1, 1], [], []>} : vector<32x32xf32>, vector<32x32xf32>, vector<32x32xf32> -> vector<32x32xf32>
    %c0_9 = arith.constant 0 : index
    %c0_10 = arith.constant 0 : index
    %c0_11 = arith.constant 0 : index
    %9 = vector.load %arg5[%c0_9, %c0_10, %c0_11] : memref<3x1x32xf32, #tpu.memory_space<vmem>>, vector<1x1x32xf32>
    %10 = vector.shape_cast %9 : vector<1x1x32xf32> to vector<1x32xf32>
    %11 = vector.broadcast %10 : vector<1x32xf32> to vector<32x32xf32>
    %12 = arith.addf %8, %11 : vector<32x32xf32>
    %cst_12 = arith.constant 0.000000e+00 : f32
    %13 = vector.broadcast %cst_12 : f32 to vector<32x32xf32>
    %14 = arith.maximumf %12, %13 : vector<32x32xf32>
    %c0_13 = arith.constant 0 : index
    %c0_14 = arith.constant 0 : index
    %c0_15 = arith.constant 0 : index
    %15 = vector.load %arg6[%c0_13, %c0_14, %c0_15] : memref<3x32x32xf32, #tpu.memory_space<vmem>>, vector<1x32x32xf32>
    %16 = vector.shape_cast %15 : vector<1x32x32xf32> to vector<32x32xf32>
    %cst_16 = arith.constant dense<0.000000e+00> : vector<32x32xf32>
    %17 = tpu.matmul %14, %16, %cst_16 {dimension_numbers = #tpu.dot_dimension_numbers<[1], [0], [0], [1], [0, 0, 1, 1], [], []>} : vector<32x32xf32>, vector<32x32xf32>, vector<32x32xf32> -> vector<32x32xf32>
    %c0_17 = arith.constant 0 : index
    %c0_18 = arith.constant 0 : index
    %c0_19 = arith.constant 0 : index
    %18 = vector.load %arg7[%c0_17, %c0_18, %c0_19] : memref<3x1x32xf32, #tpu.memory_space<vmem>>, vector<1x1x32xf32>
    %19 = vector.shape_cast %18 : vector<1x1x32xf32> to vector<1x32xf32>
    %20 = vector.broadcast %19 : vector<1x32xf32> to vector<32x32xf32>
    %21 = arith.addf %17, %20 : vector<32x32xf32>
    %22 = arith.addf %5, %21 : vector<32x32xf32>
    %c1 = arith.constant 1 : index
    %c0_20 = arith.constant 0 : index
    %c0_21 = arith.constant 0 : index
    %23 = vector.load %arg4[%c1, %c0_20, %c0_21] : memref<3x32x32xf32, #tpu.memory_space<vmem>>, vector<1x32x32xf32>
    %24 = vector.shape_cast %23 : vector<1x32x32xf32> to vector<32x32xf32>
    %cst_22 = arith.constant dense<0.000000e+00> : vector<32x32xf32>
    %25 = tpu.matmul %22, %24, %cst_22 {dimension_numbers = #tpu.dot_dimension_numbers<[1], [0], [0], [1], [0, 0, 1, 1], [], []>} : vector<32x32xf32>, vector<32x32xf32>, vector<32x32xf32> -> vector<32x32xf32>
    %c1_23 = arith.constant 1 : index
    %c0_24 = arith.constant 0 : index
    %c0_25 = arith.constant 0 : index
    %26 = vector.load %arg5[%c1_23, %c0_24, %c0_25] : memref<3x1x32xf32, #tpu.memory_space<vmem>>, vector<1x1x32xf32>
    %27 = vector.shape_cast %26 : vector<1x1x32xf32> to vector<1x32xf32>
    %28 = vector.broadcast %27 : vector<1x32xf32> to vector<32x32xf32>
    %29 = arith.addf %25, %28 : vector<32x32xf32>
    %cst_26 = arith.constant 0.000000e+00 : f32
    %30 = vector.broadcast %cst_26 : f32 to vector<32x32xf32>
    %31 = arith.maximumf %29, %30 : vector<32x32xf32>
    %c1_27 = arith.constant 1 : index
    %c0_28 = arith.constant 0 : index
    %c0_29 = arith.constant 0 : index
    %32 = vector.load %arg6[%c1_27, %c0_28, %c0_29] : memref<3x32x32xf32, #tpu.memory_space<vmem>>, vector<1x32x32xf32>
    %33 = vector.shape_cast %32 : vector<1x32x32xf32> to vector<32x32xf32>
    %cst_30 = arith.constant dense<0.000000e+00> : vector<32x32xf32>
    %34 = tpu.matmul %31, %33, %cst_30 {dimension_numbers = #tpu.dot_dimension_numbers<[1], [0], [0], [1], [0, 0, 1, 1], [], []>} : vector<32x32xf32>, vector<32x32xf32>, vector<32x32xf32> -> vector<32x32xf32>
    %c1_31 = arith.constant 1 : index
    %c0_32 = arith.constant 0 : index
    %c0_33 = arith.constant 0 : index
    %35 = vector.load %arg7[%c1_31, %c0_32, %c0_33] : memref<3x1x32xf32, #tpu.memory_space<vmem>>, vector<1x1x32xf32>
    %36 = vector.shape_cast %35 : vector<1x1x32xf32> to vector<1x32xf32>
    %37 = vector.broadcast %36 : vector<1x32xf32> to vector<32x32xf32>
    %38 = arith.addf %34, %37 : vector<32x32xf32>
    %39 = arith.addf %22, %38 : vector<32x32xf32>
    %c2 = arith.constant 2 : index
    %c0_34 = arith.constant 0 : index
    %c0_35 = arith.constant 0 : index
    %40 = vector.load %arg4[%c2, %c0_34, %c0_35] : memref<3x32x32xf32, #tpu.memory_space<vmem>>, vector<1x32x32xf32>
    %41 = vector.shape_cast %40 : vector<1x32x32xf32> to vector<32x32xf32>
    %cst_36 = arith.constant dense<0.000000e+00> : vector<32x32xf32>
    %42 = tpu.matmul %39, %41, %cst_36 {dimension_numbers = #tpu.dot_dimension_numbers<[1], [0], [0], [1], [0, 0, 1, 1], [], []>} : vector<32x32xf32>, vector<32x32xf32>, vector<32x32xf32> -> vector<32x32xf32>
    %c2_37 = arith.constant 2 : index
    %c0_38 = arith.constant 0 : index
    %c0_39 = arith.constant 0 : index
    %43 = vector.load %arg5[%c2_37, %c0_38, %c0_39] : memref<3x1x32xf32, #tpu.memory_space<vmem>>, vector<1x1x32xf32>
    %44 = vector.shape_cast %43 : vector<1x1x32xf32> to vector<1x32xf32>
    %45 = vector.broadcast %44 : vector<1x32xf32> to vector<32x32xf32>
    %46 = arith.addf %42, %45 : vector<32x32xf32>
    %cst_40 = arith.constant 0.000000e+00 : f32
    %47 = vector.broadcast %cst_40 : f32 to vector<32x32xf32>
    %48 = arith.maximumf %46, %47 : vector<32x32xf32>
    %c2_41 = arith.constant 2 : index
    %c0_42 = arith.constant 0 : index
    %c0_43 = arith.constant 0 : index
    %49 = vector.load %arg6[%c2_41, %c0_42, %c0_43] : memref<3x32x32xf32, #tpu.memory_space<vmem>>, vector<1x32x32xf32>
    %50 = vector.shape_cast %49 : vector<1x32x32xf32> to vector<32x32xf32>
    %cst_44 = arith.constant dense<0.000000e+00> : vector<32x32xf32>
    %51 = tpu.matmul %48, %50, %cst_44 {dimension_numbers = #tpu.dot_dimension_numbers<[1], [0], [0], [1], [0, 0, 1, 1], [], []>} : vector<32x32xf32>, vector<32x32xf32>, vector<32x32xf32> -> vector<32x32xf32>
    %c2_45 = arith.constant 2 : index
    %c0_46 = arith.constant 0 : index
    %c0_47 = arith.constant 0 : index
    %52 = vector.load %arg7[%c2_45, %c0_46, %c0_47] : memref<3x1x32xf32, #tpu.memory_space<vmem>>, vector<1x1x32xf32>
    %53 = vector.shape_cast %52 : vector<1x1x32xf32> to vector<1x32xf32>
    %54 = vector.broadcast %53 : vector<1x32xf32> to vector<32x32xf32>
    %55 = arith.addf %51, %54 : vector<32x32xf32>
    %56 = arith.addf %39, %55 : vector<32x32xf32>
    %c0_48 = arith.constant 0 : index
    %c0_49 = arith.constant 0 : index
    %57 = vector.load %arg8[%c0_48, %c0_49] : memref<32x1xf32, #tpu.memory_space<vmem>>, vector<32x1xf32>
    %cst_50 = arith.constant dense<0.000000e+00> : vector<32x1xf32>
    %58 = tpu.matmul %56, %57, %cst_50 {dimension_numbers = #tpu.dot_dimension_numbers<[1], [0], [0], [1], [0, 0, 1, 1], [], []>} : vector<32x32xf32>, vector<32x1xf32>, vector<32x1xf32> -> vector<32x1xf32>
    %c0_51 = arith.constant 0 : index
    %c0_52 = arith.constant 0 : index
    %59 = vector.load %arg9[%c0_51, %c0_52] : memref<1x1xf32, #tpu.memory_space<vmem>>, vector<1x1xf32>
    %60 = vector.broadcast %59 : vector<1x1xf32> to vector<32x1xf32>
    %61 = arith.addf %58, %60 : vector<32x1xf32>
    %c0_53 = arith.constant 0 : index
    %c0_54 = arith.constant 0 : index
    %62 = vector.load %arg13[%c0_53, %c0_54] : memref<32x1xf32, #tpu.memory_space<vmem>>, vector<32x1xf32>
    tpu.vector_store %arg13[%c0_53, %c0_54], %61 {strides = array<i32>} : memref<32x1xf32, #tpu.memory_space<vmem>>, vector<32x1xf32>,
    %cst_55 = arith.constant 0.000000e+00 : f32
    %63 = vector.broadcast %cst_55 : f32 to vector<2x69xf32>
    %c0_56 = arith.constant 0 : index
    %c0_57 = arith.constant 0 : index
    %c0_58 = arith.constant 0 : index
    %64 = vector.load %arg12[%c0_56, %c0_57, %c0_58] : memref<16x2x32xf32, #tpu.memory_space<vmem>>, vector<1x2x32xf32>
    %65 = vector.shape_cast %64 : vector<1x2x32xf32> to vector<2x32xf32>
    %cst_59 = arith.constant dense<0.000000e+00> : vector<2x32xf32>
    %66 = tpu.matmul %65, %56, %cst_59 {dimension_numbers = #tpu.dot_dimension_numbers<[1], [0], [0], [1], [0, 0, 1, 1], [], []>} : vector<2x32xf32>, vector<32x32xf32>, vector<2x32xf32> -> vector<2x32xf32>
    %c0_60 = arith.constant 0 : index
    %c0_61 = arith.constant 0 : index
    %c0_62 = arith.constant 0 : index
    %67 = vector.load %arg10[%c0_60, %c0_61, %c0_62] : memref<16x32x69xf32, #tpu.memory_space<vmem>>, vector<1x32x69xf32>
    %68 = vector.shape_cast %67 : vector<1x32x69xf32> to vector<32x69xf32>
    %cst_63 = arith.constant dense<0.000000e+00> : vector<2x69xf32>
    %69 = tpu.matmul %66, %68, %cst_63 {dimension_numbers = #tpu.dot_dimension_numbers<[1], [0], [0], [1], [0, 0, 1, 1], [], []>} : vector<2x32xf32>, vector<32x69xf32>, vector<2x69xf32> -> vector<2x69xf32>
    %70 = arith.addf %63, %69 : vector<2x69xf32>
    %c1_64 = arith.constant 1 : index
    %c0_65 = arith.constant 0 : index
    %c0_66 = arith.constant 0 : index
    %71 = vector.load %arg12[%c1_64, %c0_65, %c0_66] : memref<16x2x32xf32, #tpu.memory_space<vmem>>, vector<1x2x32xf32>
    %72 = vector.shape_cast %71 : vector<1x2x32xf32> to vector<2x32xf32>
    %cst_67 = arith.constant dense<0.000000e+00> : vector<2x32xf32>
    %73 = tpu.matmul %72, %56, %cst_67 {dimension_numbers = #tpu.dot_dimension_numbers<[1], [0], [0], [1], [0, 0, 1, 1], [], []>} : vector<2x32xf32>, vector<32x32xf32>, vector<2x32xf32> -> vector<2x32xf32>
    %c1_68 = arith.constant 1 : index
    %c0_69 = arith.constant 0 : index
    %c0_70 = arith.constant 0 : index
    %74 = vector.load %arg10[%c1_68, %c0_69, %c0_70] : memref<16x32x69xf32, #tpu.memory_space<vmem>>, vector<1x32x69xf32>
    %75 = vector.shape_cast %74 : vector<1x32x69xf32> to vector<32x69xf32>
    %cst_71 = arith.constant dense<0.000000e+00> : vector<2x69xf32>
    %76 = tpu.matmul %73, %75, %cst_71 {dimension_numbers = #tpu.dot_dimension_numbers<[1], [0], [0], [1], [0, 0, 1, 1], [], []>} : vector<2x32xf32>, vector<32x69xf32>, vector<2x69xf32> -> vector<2x69xf32>
    %77 = arith.addf %70, %76 : vector<2x69xf32>
    %c2_72 = arith.constant 2 : index
    %c0_73 = arith.constant 0 : index
    %c0_74 = arith.constant 0 : index
    %78 = vector.load %arg12[%c2_72, %c0_73, %c0_74] : memref<16x2x32xf32, #tpu.memory_space<vmem>>, vector<1x2x32xf32>
    %79 = vector.shape_cast %78 : vector<1x2x32xf32> to vector<2x32xf32>
    %cst_75 = arith.constant dense<0.000000e+00> : vector<2x32xf32>
    %80 = tpu.matmul %79, %56, %cst_75 {dimension_numbers = #tpu.dot_dimension_numbers<[1], [0], [0], [1], [0, 0, 1, 1], [], []>} : vector<2x32xf32>, vector<32x32xf32>, vector<2x32xf32> -> vector<2x32xf32>
    %c2_76 = arith.constant 2 : index
    %c0_77 = arith.constant 0 : index
    %c0_78 = arith.constant 0 : index
    %81 = vector.load %arg10[%c2_76, %c0_77, %c0_78] : memref<16x32x69xf32, #tpu.memory_space<vmem>>, vector<1x32x69xf32>
    %82 = vector.shape_cast %81 : vector<1x32x69xf32> to vector<32x69xf32>
    %cst_79 = arith.constant dense<0.000000e+00> : vector<2x69xf32>
    %83 = tpu.matmul %80, %82, %cst_79 {dimension_numbers = #tpu.dot_dimension_numbers<[1], [0], [0], [1], [0, 0, 1, 1], [], []>} : vector<2x32xf32>, vector<32x69xf32>, vector<2x69xf32> -> vector<2x69xf32>
    %84 = arith.addf %77, %83 : vector<2x69xf32>
    %c3 = arith.constant 3 : index
    %c0_80 = arith.constant 0 : index
    %c0_81 = arith.constant 0 : index
    %85 = vector.load %arg12[%c3, %c0_80, %c0_81] : memref<16x2x32xf32, #tpu.memory_space<vmem>>, vector<1x2x32xf32>
    %86 = vector.shape_cast %85 : vector<1x2x32xf32> to vector<2x32xf32>
    %cst_82 = arith.constant dense<0.000000e+00> : vector<2x32xf32>
    %87 = tpu.matmul %86, %56, %cst_82 {dimension_numbers = #tpu.dot_dimension_numbers<[1], [0], [0], [1], [0, 0, 1, 1], [], []>} : vector<2x32xf32>, vector<32x32xf32>, vector<2x32xf32> -> vector<2x32xf32>
    %c3_83 = arith.constant 3 : index
    %c0_84 = arith.constant 0 : index
    %c0_85 = arith.constant 0 : index
    %88 = vector.load %arg10[%c3_83, %c0_84, %c0_85] : memref<16x32x69xf32, #tpu.memory_space<vmem>>, vector<1x32x69xf32>
    %89 = vector.shape_cast %88 : vector<1x32x69xf32> to vector<32x69xf32>
    %cst_86 = arith.constant dense<0.000000e+00> : vector<2x69xf32>
    %90 = tpu.matmul %87, %89, %cst_86 {dimension_numbers = #tpu.dot_dimension_numbers<[1], [0], [0], [1], [0, 0, 1, 1], [], []>} : vector<2x32xf32>, vector<32x69xf32>, vector<2x69xf32> -> vector<2x69xf32>
    %91 = arith.addf %84, %90 : vector<2x69xf32>
    %c4 = arith.constant 4 : index
    %c0_87 = arith.constant 0 : index
    %c0_88 = arith.constant 0 : index
    %92 = vector.load %arg12[%c4, %c0_87, %c0_88] : memref<16x2x32xf32, #tpu.memory_space<vmem>>, vector<1x2x32xf32>
    %93 = vector.shape_cast %92 : vector<1x2x32xf32> to vector<2x32xf32>
    %cst_89 = arith.constant dense<0.000000e+00> : vector<2x32xf32>
    %94 = tpu.matmul %93, %56, %cst_89 {dimension_numbers = #tpu.dot_dimension_numbers<[1], [0], [0], [1], [0, 0, 1, 1], [], []>} : vector<2x32xf32>, vector<32x32xf32>, vector<2x32xf32> -> vector<2x32xf32>
    %c4_90 = arith.constant 4 : index
    %c0_91 = arith.constant 0 : index
    %c0_92 = arith.constant 0 : index
    %95 = vector.load %arg10[%c4_90, %c0_91, %c0_92] : memref<16x32x69xf32, #tpu.memory_space<vmem>>, vector<1x32x69xf32>
    %96 = vector.shape_cast %95 : vector<1x32x69xf32> to vector<32x69xf32>
    %cst_93 = arith.constant dense<0.000000e+00> : vector<2x69xf32>
    %97 = tpu.matmul %94, %96, %cst_93 {dimension_numbers = #tpu.dot_dimension_numbers<[1], [0], [0], [1], [0, 0, 1, 1], [], []>} : vector<2x32xf32>, vector<32x69xf32>, vector<2x69xf32> -> vector<2x69xf32>
    %98 = arith.addf %91, %97 : vector<2x69xf32>
    %c5 = arith.constant 5 : index
    %c0_94 = arith.constant 0 : index
    %c0_95 = arith.constant 0 : index
    %99 = vector.load %arg12[%c5, %c0_94, %c0_95] : memref<16x2x32xf32, #tpu.memory_space<vmem>>, vector<1x2x32xf32>
    %100 = vector.shape_cast %99 : vector<1x2x32xf32> to vector<2x32xf32>
    %cst_96 = arith.constant dense<0.000000e+00> : vector<2x32xf32>
    %101 = tpu.matmul %100, %56, %cst_96 {dimension_numbers = #tpu.dot_dimension_numbers<[1], [0], [0], [1], [0, 0, 1, 1], [], []>} : vector<2x32xf32>, vector<32x32xf32>, vector<2x32xf32> -> vector<2x32xf32>
    %c5_97 = arith.constant 5 : index
    %c0_98 = arith.constant 0 : index
    %c0_99 = arith.constant 0 : index
    %102 = vector.load %arg10[%c5_97, %c0_98, %c0_99] : memref<16x32x69xf32, #tpu.memory_space<vmem>>, vector<1x32x69xf32>
    %103 = vector.shape_cast %102 : vector<1x32x69xf32> to vector<32x69xf32>
    %cst_100 = arith.constant dense<0.000000e+00> : vector<2x69xf32>
    %104 = tpu.matmul %101, %103, %cst_100 {dimension_numbers = #tpu.dot_dimension_numbers<[1], [0], [0], [1], [0, 0, 1, 1], [], []>} : vector<2x32xf32>, vector<32x69xf32>, vector<2x69xf32> -> vector<2x69xf32>
    %105 = arith.addf %98, %104 : vector<2x69xf32>
    %c6 = arith.constant 6 : index
    %c0_101 = arith.constant 0 : index
    %c0_102 = arith.constant 0 : index
    %106 = vector.load %arg12[%c6, %c0_101, %c0_102] : memref<16x2x32xf32, #tpu.memory_space<vmem>>, vector<1x2x32xf32>
    %107 = vector.shape_cast %106 : vector<1x2x32xf32> to vector<2x32xf32>
    %cst_103 = arith.constant dense<0.000000e+00> : vector<2x32xf32>
    %108 = tpu.matmul %107, %56, %cst_103 {dimension_numbers = #tpu.dot_dimension_numbers<[1], [0], [0], [1], [0, 0, 1, 1], [], []>} : vector<2x32xf32>, vector<32x32xf32>, vector<2x32xf32> -> vector<2x32xf32>
    %c6_104 = arith.constant 6 : index
    %c0_105 = arith.constant 0 : index
    %c0_106 = arith.constant 0 : index
    %109 = vector.load %arg10[%c6_104, %c0_105, %c0_106] : memref<16x32x69xf32, #tpu.memory_space<vmem>>, vector<1x32x69xf32>
    %110 = vector.shape_cast %109 : vector<1x32x69xf32> to vector<32x69xf32>
    %cst_107 = arith.constant dense<0.000000e+00> : vector<2x69xf32>
    %111 = tpu.matmul %108, %110, %cst_107 {dimension_numbers = #tpu.dot_dimension_numbers<[1], [0], [0], [1], [0, 0, 1, 1], [], []>} : vector<2x32xf32>, vector<32x69xf32>, vector<2x69xf32> -> vector<2x69xf32>
    %112 = arith.addf %105, %111 : vector<2x69xf32>
    %c7 = arith.constant 7 : index
    %c0_108 = arith.constant 0 : index
    %c0_109 = arith.constant 0 : index
    %113 = vector.load %arg12[%c7, %c0_108, %c0_109] : memref<16x2x32xf32, #tpu.memory_space<vmem>>, vector<1x2x32xf32>
    %114 = vector.shape_cast %113 : vector<1x2x32xf32> to vector<2x32xf32>
    %cst_110 = arith.constant dense<0.000000e+00> : vector<2x32xf32>
    %115 = tpu.matmul %114, %56, %cst_110 {dimension_numbers = #tpu.dot_dimension_numbers<[1], [0], [0], [1], [0, 0, 1, 1], [], []>} : vector<2x32xf32>, vector<32x32xf32>, vector<2x32xf32> -> vector<2x32xf32>
    %c7_111 = arith.constant 7 : index
    %c0_112 = arith.constant 0 : index
    %c0_113 = arith.constant 0 : index
    %116 = vector.load %arg10[%c7_111, %c0_112, %c0_113] : memref<16x32x69xf32, #tpu.memory_space<vmem>>, vector<1x32x69xf32>
    %117 = vector.shape_cast %116 : vector<1x32x69xf32> to vector<32x69xf32>
    %cst_114 = arith.constant dense<0.000000e+00> : vector<2x69xf32>
    %118 = tpu.matmul %115, %117, %cst_114 {dimension_numbers = #tpu.dot_dimension_numbers<[1], [0], [0], [1], [0, 0, 1, 1], [], []>} : vector<2x32xf32>, vector<32x69xf32>, vector<2x69xf32> -> vector<2x69xf32>
    %119 = arith.addf %112, %118 : vector<2x69xf32>
    %c8 = arith.constant 8 : index
    %c0_115 = arith.constant 0 : index
    %c0_116 = arith.constant 0 : index
    %120 = vector.load %arg12[%c8, %c0_115, %c0_116] : memref<16x2x32xf32, #tpu.memory_space<vmem>>, vector<1x2x32xf32>
    %121 = vector.shape_cast %120 : vector<1x2x32xf32> to vector<2x32xf32>
    %cst_117 = arith.constant dense<0.000000e+00> : vector<2x32xf32>
    %122 = tpu.matmul %121, %56, %cst_117 {dimension_numbers = #tpu.dot_dimension_numbers<[1], [0], [0], [1], [0, 0, 1, 1], [], []>} : vector<2x32xf32>, vector<32x32xf32>, vector<2x32xf32> -> vector<2x32xf32>
    %c8_118 = arith.constant 8 : index
    %c0_119 = arith.constant 0 : index
    %c0_120 = arith.constant 0 : index
    %123 = vector.load %arg10[%c8_118, %c0_119, %c0_120] : memref<16x32x69xf32, #tpu.memory_space<vmem>>, vector<1x32x69xf32>
    %124 = vector.shape_cast %123 : vector<1x32x69xf32> to vector<32x69xf32>
    %cst_121 = arith.constant dense<0.000000e+00> : vector<2x69xf32>
    %125 = tpu.matmul %122, %124, %cst_121 {dimension_numbers = #tpu.dot_dimension_numbers<[1], [0], [0], [1], [0, 0, 1, 1], [], []>} : vector<2x32xf32>, vector<32x69xf32>, vector<2x69xf32> -> vector<2x69xf32>
    %126 = arith.addf %119, %125 : vector<2x69xf32>
    %c9 = arith.constant 9 : index
    %c0_122 = arith.constant 0 : index
    %c0_123 = arith.constant 0 : index
    %127 = vector.load %arg12[%c9, %c0_122, %c0_123] : memref<16x2x32xf32, #tpu.memory_space<vmem>>, vector<1x2x32xf32>
    %128 = vector.shape_cast %127 : vector<1x2x32xf32> to vector<2x32xf32>
    %cst_124 = arith.constant dense<0.000000e+00> : vector<2x32xf32>
    %129 = tpu.matmul %128, %56, %cst_124 {dimension_numbers = #tpu.dot_dimension_numbers<[1], [0], [0], [1], [0, 0, 1, 1], [], []>} : vector<2x32xf32>, vector<32x32xf32>, vector<2x32xf32> -> vector<2x32xf32>
    %c9_125 = arith.constant 9 : index
    %c0_126 = arith.constant 0 : index
    %c0_127 = arith.constant 0 : index
    %130 = vector.load %arg10[%c9_125, %c0_126, %c0_127] : memref<16x32x69xf32, #tpu.memory_space<vmem>>, vector<1x32x69xf32>
    %131 = vector.shape_cast %130 : vector<1x32x69xf32> to vector<32x69xf32>
    %cst_128 = arith.constant dense<0.000000e+00> : vector<2x69xf32>
    %132 = tpu.matmul %129, %131, %cst_128 {dimension_numbers = #tpu.dot_dimension_numbers<[1], [0], [0], [1], [0, 0, 1, 1], [], []>} : vector<2x32xf32>, vector<32x69xf32>, vector<2x69xf32> -> vector<2x69xf32>
    %133 = arith.addf %126, %132 : vector<2x69xf32>
    %c10 = arith.constant 10 : index
    %c0_129 = arith.constant 0 : index
    %c0_130 = arith.constant 0 : index
    %134 = vector.load %arg12[%c10, %c0_129, %c0_130] : memref<16x2x32xf32, #tpu.memory_space<vmem>>, vector<1x2x32xf32>
    %135 = vector.shape_cast %134 : vector<1x2x32xf32> to vector<2x32xf32>
    %cst_131 = arith.constant dense<0.000000e+00> : vector<2x32xf32>
    %136 = tpu.matmul %135, %56, %cst_131 {dimension_numbers = #tpu.dot_dimension_numbers<[1], [0], [0], [1], [0, 0, 1, 1], [], []>} : vector<2x32xf32>, vector<32x32xf32>, vector<2x32xf32> -> vector<2x32xf32>
    %c10_132 = arith.constant 10 : index
    %c0_133 = arith.constant 0 : index
    %c0_134 = arith.constant 0 : index
    %137 = vector.load %arg10[%c10_132, %c0_133, %c0_134] : memref<16x32x69xf32, #tpu.memory_space<vmem>>, vector<1x32x69xf32>
    %138 = vector.shape_cast %137 : vector<1x32x69xf32> to vector<32x69xf32>
    %cst_135 = arith.constant dense<0.000000e+00> : vector<2x69xf32>
    %139 = tpu.matmul %136, %138, %cst_135 {dimension_numbers = #tpu.dot_dimension_numbers<[1], [0], [0], [1], [0, 0, 1, 1], [], []>} : vector<2x32xf32>, vector<32x69xf32>, vector<2x69xf32> -> vector<2x69xf32>
    %140 = arith.addf %133, %139 : vector<2x69xf32>
    %c11 = arith.constant 11 : index
    %c0_136 = arith.constant 0 : index
    %c0_137 = arith.constant 0 : index
    %141 = vector.load %arg12[%c11, %c0_136, %c0_137] : memref<16x2x32xf32, #tpu.memory_space<vmem>>, vector<1x2x32xf32>
    %142 = vector.shape_cast %141 : vector<1x2x32xf32> to vector<2x32xf32>
    %cst_138 = arith.constant dense<0.000000e+00> : vector<2x32xf32>
    %143 = tpu.matmul %142, %56, %cst_138 {dimension_numbers = #tpu.dot_dimension_numbers<[1], [0], [0], [1], [0, 0, 1, 1], [], []>} : vector<2x32xf32>, vector<32x32xf32>, vector<2x32xf32> -> vector<2x32xf32>
    %c11_139 = arith.constant 11 : index
    %c0_140 = arith.constant 0 : index
    %c0_141 = arith.constant 0 : index
    %144 = vector.load %arg10[%c11_139, %c0_140, %c0_141] : memref<16x32x69xf32, #tpu.memory_space<vmem>>, vector<1x32x69xf32>
    %145 = vector.shape_cast %144 : vector<1x32x69xf32> to vector<32x69xf32>
    %cst_142 = arith.constant dense<0.000000e+00> : vector<2x69xf32>
    %146 = tpu.matmul %143, %145, %cst_142 {dimension_numbers = #tpu.dot_dimension_numbers<[1], [0], [0], [1], [0, 0, 1, 1], [], []>} : vector<2x32xf32>, vector<32x69xf32>, vector<2x69xf32> -> vector<2x69xf32>
    %147 = arith.addf %140, %146 : vector<2x69xf32>
    %c12 = arith.constant 12 : index
    %c0_143 = arith.constant 0 : index
    %c0_144 = arith.constant 0 : index
    %148 = vector.load %arg12[%c12, %c0_143, %c0_144] : memref<16x2x32xf32, #tpu.memory_space<vmem>>, vector<1x2x32xf32>
    %149 = vector.shape_cast %148 : vector<1x2x32xf32> to vector<2x32xf32>
    %cst_145 = arith.constant dense<0.000000e+00> : vector<2x32xf32>
    %150 = tpu.matmul %149, %56, %cst_145 {dimension_numbers = #tpu.dot_dimension_numbers<[1], [0], [0], [1], [0, 0, 1, 1], [], []>} : vector<2x32xf32>, vector<32x32xf32>, vector<2x32xf32> -> vector<2x32xf32>
    %c12_146 = arith.constant 12 : index
    %c0_147 = arith.constant 0 : index
    %c0_148 = arith.constant 0 : index
    %151 = vector.load %arg10[%c12_146, %c0_147, %c0_148] : memref<16x32x69xf32, #tpu.memory_space<vmem>>, vector<1x32x69xf32>
    %152 = vector.shape_cast %151 : vector<1x32x69xf32> to vector<32x69xf32>
    %cst_149 = arith.constant dense<0.000000e+00> : vector<2x69xf32>
    %153 = tpu.matmul %150, %152, %cst_149 {dimension_numbers = #tpu.dot_dimension_numbers<[1], [0], [0], [1], [0, 0, 1, 1], [], []>} : vector<2x32xf32>, vector<32x69xf32>, vector<2x69xf32> -> vector<2x69xf32>
    %154 = arith.addf %147, %153 : vector<2x69xf32>
    %c13 = arith.constant 13 : index
    %c0_150 = arith.constant 0 : index
    %c0_151 = arith.constant 0 : index
    %155 = vector.load %arg12[%c13, %c0_150, %c0_151] : memref<16x2x32xf32, #tpu.memory_space<vmem>>, vector<1x2x32xf32>
    %156 = vector.shape_cast %155 : vector<1x2x32xf32> to vector<2x32xf32>
    %cst_152 = arith.constant dense<0.000000e+00> : vector<2x32xf32>
    %157 = tpu.matmul %156, %56, %cst_152 {dimension_numbers = #tpu.dot_dimension_numbers<[1], [0], [0], [1], [0, 0, 1, 1], [], []>} : vector<2x32xf32>, vector<32x32xf32>, vector<2x32xf32> -> vector<2x32xf32>
    %c13_153 = arith.constant 13 : index
    %c0_154 = arith.constant 0 : index
    %c0_155 = arith.constant 0 : index
    %158 = vector.load %arg10[%c13_153, %c0_154, %c0_155] : memref<16x32x69xf32, #tpu.memory_space<vmem>>, vector<1x32x69xf32>
    %159 = vector.shape_cast %158 : vector<1x32x69xf32> to vector<32x69xf32>
    %cst_156 = arith.constant dense<0.000000e+00> : vector<2x69xf32>
    %160 = tpu.matmul %157, %159, %cst_156 {dimension_numbers = #tpu.dot_dimension_numbers<[1], [0], [0], [1], [0, 0, 1, 1], [], []>} : vector<2x32xf32>, vector<32x69xf32>, vector<2x69xf32> -> vector<2x69xf32>
    %161 = arith.addf %154, %160 : vector<2x69xf32>
    %c14 = arith.constant 14 : index
    %c0_157 = arith.constant 0 : index
    %c0_158 = arith.constant 0 : index
    %162 = vector.load %arg12[%c14, %c0_157, %c0_158] : memref<16x2x32xf32, #tpu.memory_space<vmem>>, vector<1x2x32xf32>
    %163 = vector.shape_cast %162 : vector<1x2x32xf32> to vector<2x32xf32>
    %cst_159 = arith.constant dense<0.000000e+00> : vector<2x32xf32>
    %164 = tpu.matmul %163, %56, %cst_159 {dimension_numbers = #tpu.dot_dimension_numbers<[1], [0], [0], [1], [0, 0, 1, 1], [], []>} : vector<2x32xf32>, vector<32x32xf32>, vector<2x32xf32> -> vector<2x32xf32>
    %c14_160 = arith.constant 14 : index
    %c0_161 = arith.constant 0 : index
    %c0_162 = arith.constant 0 : index
    %165 = vector.load %arg10[%c14_160, %c0_161, %c0_162] : memref<16x32x69xf32, #tpu.memory_space<vmem>>, vector<1x32x69xf32>
    %166 = vector.shape_cast %165 : vector<1x32x69xf32> to vector<32x69xf32>
    %cst_163 = arith.constant dense<0.000000e+00> : vector<2x69xf32>
    %167 = tpu.matmul %164, %166, %cst_163 {dimension_numbers = #tpu.dot_dimension_numbers<[1], [0], [0], [1], [0, 0, 1, 1], [], []>} : vector<2x32xf32>, vector<32x69xf32>, vector<2x69xf32> -> vector<2x69xf32>
    %168 = arith.addf %161, %167 : vector<2x69xf32>
    %c15 = arith.constant 15 : index
    %c0_164 = arith.constant 0 : index
    %c0_165 = arith.constant 0 : index
    %169 = vector.load %arg12[%c15, %c0_164, %c0_165] : memref<16x2x32xf32, #tpu.memory_space<vmem>>, vector<1x2x32xf32>
    %170 = vector.shape_cast %169 : vector<1x2x32xf32> to vector<2x32xf32>
    %cst_166 = arith.constant dense<0.000000e+00> : vector<2x32xf32>
    %171 = tpu.matmul %170, %56, %cst_166 {dimension_numbers = #tpu.dot_dimension_numbers<[1], [0], [0], [1], [0, 0, 1, 1], [], []>} : vector<2x32xf32>, vector<32x32xf32>, vector<2x32xf32> -> vector<2x32xf32>
    %c15_167 = arith.constant 15 : index
    %c0_168 = arith.constant 0 : index
    %c0_169 = arith.constant 0 : index
    %172 = vector.load %arg10[%c15_167, %c0_168, %c0_169] : memref<16x32x69xf32, #tpu.memory_space<vmem>>, vector<1x32x69xf32>
    %173 = vector.shape_cast %172 : vector<1x32x69xf32> to vector<32x69xf32>
    %cst_170 = arith.constant dense<0.000000e+00> : vector<2x69xf32>
    %174 = tpu.matmul %171, %173, %cst_170 {dimension_numbers = #tpu.dot_dimension_numbers<[1], [0], [0], [1], [0, 0, 1, 1], [], []>} : vector<2x32xf32>, vector<32x69xf32>, vector<2x69xf32> -> vector<2x69xf32>
    %175 = arith.addf %168, %174 : vector<2x69xf32>
    %c0_171 = arith.constant 0 : index
    %c0_172 = arith.constant 0 : index
    %176 = vector.load %arg11[%c0_171, %c0_172] : memref<1x69xf32, #tpu.memory_space<vmem>>, vector<1x69xf32>
    %177 = vector.broadcast %176 : vector<1x69xf32> to vector<2x69xf32>
    %178 = arith.addf %175, %177 : vector<2x69xf32>
    %c0_173 = arith.constant 0 : index
    %c0_174 = arith.constant 0 : index
    %179 = vector.load %arg14[%c0_173, %c0_174] : memref<2x69xf32, #tpu.memory_space<vmem>>, vector<2x69xf32>
    tpu.vector_store %arg14[%c0_173, %c0_174], %178 {strides = array<i32>} : memref<2x69xf32, #tpu.memory_space<vmem>>, vector<2x69xf32>,
    return
  }
  func.func @transform_0(%arg0: i32) -> (i32, i32) {
    %c0_i32 = arith.constant 0 : i32
    %c0_i32_0 = arith.constant 0 : i32
    %c0_i32_1 = arith.constant 0 : i32
    return %c0_i32, %c0_i32_0 : i32, i32
  }
  func.func @transform_1(%arg0: i32) -> (i32, i32) {
    %c0_i32 = arith.constant 0 : i32
    %c0_i32_0 = arith.constant 0 : i32
    %c0_i32_1 = arith.constant 0 : i32
    return %c0_i32, %c0_i32_0 : i32, i32
  }
  func.func @transform_2(%arg0: i32) -> (i32, i32) {
    %c0_i32 = arith.constant 0 : i32
    %c0_i32_0 = arith.constant 0 : i32
    %c0_i32_1 = arith.constant 0 : i32
    return %c0_i32, %c0_i32_0 : i32, i32
  }
  func.func @transform_3(%arg0: i32) -> (i32, i32, i32) {
    %c0_i32 = arith.constant 0 : i32
    %c0_i32_0 = arith.constant 0 : i32
    %c0_i32_1 = arith.constant 0 : i32
    %c0_i32_2 = arith.constant 0 : i32
    return %c0_i32, %c0_i32_0, %c0_i32_1 : i32, i32, i32
  }
  func.func @transform_4(%arg0: i32) -> (i32, i32, i32) {
    %c0_i32 = arith.constant 0 : i32
    %c0_i32_0 = arith.constant 0 : i32
    %c0_i32_1 = arith.constant 0 : i32
    %c0_i32_2 = arith.constant 0 : i32
    return %c0_i32, %c0_i32_0, %c0_i32_1 : i32, i32, i32
  }
  func.func @transform_5(%arg0: i32) -> (i32, i32, i32) {
    %c0_i32 = arith.constant 0 : i32
    %c0_i32_0 = arith.constant 0 : i32
    %c0_i32_1 = arith.constant 0 : i32
    %c0_i32_2 = arith.constant 0 : i32
    return %c0_i32, %c0_i32_0, %c0_i32_1 : i32, i32, i32
  }
  func.func @transform_6(%arg0: i32) -> (i32, i32, i32) {
    %c0_i32 = arith.constant 0 : i32
    %c0_i32_0 = arith.constant 0 : i32
    %c0_i32_1 = arith.constant 0 : i32
    %c0_i32_2 = arith.constant 0 : i32
    return %c0_i32, %c0_i32_0, %c0_i32_1 : i32, i32, i32
  }
  func.func @transform_7(%arg0: i32) -> (i32, i32) {
    %c0_i32 = arith.constant 0 : i32
    %c0_i32_0 = arith.constant 0 : i32
    %c0_i32_1 = arith.constant 0 : i32
    return %c0_i32, %c0_i32_0 : i32, i32
  }
  func.func @transform_8(%arg0: i32) -> (i32, i32) {
    %c0_i32 = arith.constant 0 : i32
    %c0_i32_0 = arith.constant 0 : i32
    %c0_i32_1 = arith.constant 0 : i32
    return %c0_i32, %c0_i32_0 : i32, i32
  }
  func.func @transform_9(%arg0: i32) -> (i32, i32, i32) {
    %c0_i32 = arith.constant 0 : i32
    %c0_i32_0 = arith.constant 0 : i32
    %c0_i32_1 = arith.constant 0 : i32
    %c0_i32_2 = arith.constant 0 : i32
    return %c0_i32, %c0_i32_0, %c0_i32_1 : i32, i32, i32
  }
  func.func @transform_10(%arg0: i32) -> (i32, i32) {
    %c0_i32 = arith.constant 0 : i32
    %c0_i32_0 = arith.constant 0 : i32
    %c0_i32_1 = arith.constant 0 : i32
    return %c0_i32, %c0_i32_0 : i32, i32
  }
  func.func @transform_11(%arg0: i32) -> (i32, i32, i32) {
    %c0_i32 = arith.constant 0 : i32
    %c0_i32_0 = arith.constant 0 : i32
    %c0_i32_1 = arith.constant 0 : i32
    %c0_i32_2 = arith.constant 0 : i32
    return %c0_i32, %c0_i32_0, %c0_i32_1 : i32, i32, i32
  }
  func.func @transform_12(%arg0: i32) -> (i32, i32) {
    %c0_i32 = arith.constant 0 : i32
    %c0_i32_0 = arith.constant 0 : i32
    %c0_i32_1 = arith.constant 0 : i32
    return %c0_i32, %c0_i32_0 : i32, i32
  }
  func.func @transform_13(%arg0: i32) -> (i32, i32) {
    %c0_i32 = arith.constant 0 : i32
    %c0_i32_0 = arith.constant 0 : i32
    %c0_i32_1 = arith.constant 0 : i32
    return %c0_i32, %c0_i32_0 : i32, i32
  }
}

</mosaic_0001>

<llo_original>
// kernel: stid_forward.1
$region0: #{stid_forward.1}
  #allocation0 [shape = 'u32[]', space=smem, size = 0x4, offset = 0x4, fixed_abs, tag = 'smem constant byte address 0x4 - core index']
  #allocation1 [shape = 'u32[144,128]{1,0:T(1,128)}', space=vmem, size = 0x12000, scoped, tag = 'internal scratch']
  #allocation2 [shape = 'f32[1,1]{1,0:T(1,128)S(1)}', space=vmem, size = 0x200, scoped, tag = 'scoped memory for stid_forward.1']
  %s0 = inlined_call_operand.vmem [shape: f32[32,32], index: 0, kind: input, shape index: {}]
  %s1 = inlined_call_operand.vmem [shape: f32[32,32], index: 1, kind: input, shape index: {}]
  %s2 = inlined_call_operand.vmem [shape: f32[1,32], index: 2, kind: input, shape index: {}]
  %s3 = inlined_call_operand.vmem [shape: f32[3,32,32], index: 3, kind: input, shape index: {}]
  %s4 = inlined_call_operand.vmem [shape: f32[3,1,32], index: 4, kind: input, shape index: {}]
  %s5 = inlined_call_operand.vmem [shape: f32[3,32,32], index: 5, kind: input, shape index: {}]
  %s6 = inlined_call_operand.vmem [shape: f32[3,1,32], index: 6, kind: input, shape index: {}]
  %s7 = inlined_call_operand.vmem [shape: f32[32,1], index: 7, kind: input, shape index: {}]
  %s8 = inlined_call_operand.<no memory space> [shape: f32[1,1], index: 8, kind: input, shape index: {}]
  %s9 = inlined_call_operand.hbm [shape: f32[16,32,69], index: 9, kind: input, shape index: {}]
  %s10 = inlined_call_operand.vmem [shape: f32[1,69], index: 10, kind: input, shape index: {}]
  %s11 = inlined_call_operand.vmem [shape: f32[16,2,32], index: 11, kind: input, shape index: {}]
  %s12 = inlined_call_operand.vmem [shape: f32[32,1], index: 12, kind: output, shape index: {0}]
  %s13 = inlined_call_operand.hbm [shape: f32[2,69], index: 13, kind: output, shape index: {1}]
  %14 = xla_tuple %s12, %s13
  %s15 = sld [smem:[#allocation0]]
  $region70: #{stid_forward.1} parent=0
    _
  %s17 = ssub.s32 1, %s15
  %s18 = scalar_select 0, %s17, %s15
  %v19 = vstv %s8
  %20 = vst [vmem:[#allocation2] sm:$0x1] %v19
  $region1: #{stid_forward.1} parent=0
    #allocation3 [shape = 'u8[262144]{0}', space=vmem, size = 0x40000, scoped, tag = 'input window, operand 9, single buffered']
    #allocation4 [shape = 's32[1]{0}', space=sflag, size = 0x4, scoped, tag = 'scoped memory for stid_forward.1']
    #allocation5 [shape = 's32[1]{0}', space=sflag, size = 0x4, scoped, tag = 'scoped memory for stid_forward.1']
    #allocation6 [shape = 'u8[1024]{0}', space=vmem, size = 0x400, scoped, tag = 'output window, operand 1, single buffered']
    %21 = vsyncpa [#allocation4], 0
    %22 = vsyncpa [#allocation5], 0
    // Predicated region
    $region2: #{stid_forward.1} parent=1 // pred_check
      _
    $region3: #{stid_forward.1} parent=1 // pred_check_branch
      %24 = sbr.rel (0) target = $region5
    $region4: #{stid_forward.1} parent=1 // pred_region
      _
    $region5: #{stid_forward.1} parent=1 // pred_fallthru
      _
    // Predicated region
    $region6: #{stid_forward.1} parent=1 // pred_check
      _
    $region7: #{stid_forward.1} parent=1 // pred_check_branch
      %26 = sbr.rel (0) target = $region9
    $region8: #{stid_forward.1} parent=1 // pred_region
      _
    $region9: #{stid_forward.1} parent=1 // pred_fallthru
      _
    // Predicated region
    $region10: #{stid_forward.1} parent=1 // pred_check
      _
    $region11: #{stid_forward.1} parent=1 // pred_check_branch
      %28 = sbr.rel (0) target = $region13
    $region12: #{stid_forward.1} parent=1 // pred_region
      _
    $region13: #{stid_forward.1} parent=1 // pred_fallthru
      _
    // Predicated region
    $region14: #{stid_forward.1} parent=1 // pred_check
      _
    $region15: #{stid_forward.1} parent=1 // pred_check_branch
      %30 = sbr.rel (0) target = $region17
    $region16: #{stid_forward.1} parent=1 // pred_region
      _
    $region17: #{stid_forward.1} parent=1 // pred_fallthru
      _
    // Predicated region
    $region18: #{stid_forward.1} parent=1 // pred_check
      _
    $region19: #{stid_forward.1} parent=1 // pred_check_branch
      %32 = sbr.rel (0) target = $region21
    $region20: #{stid_forward.1} parent=1 // pred_region
      _
    $region21: #{stid_forward.1} parent=1 // pred_fallthru
      _
    // Predicated region
    $region22: #{stid_forward.1} parent=1 // pred_check
      _
    $region23: #{stid_forward.1} parent=1 // pred_check_branch
      %34 = sbr.rel (0) target = $region25
    $region24: #{stid_forward.1} parent=1 // pred_region
      _
    $region25: #{stid_forward.1} parent=1 // pred_fallthru
      _
    // Predicated region
    $region26: #{stid_forward.1} parent=1 // pred_check
      _
    $region27: #{stid_forward.1} parent=1 // pred_check_branch
      %36 = sbr.rel (0) target = $region29
    $region28: #{stid_forward.1} parent=1 // pred_region
      _
    $region29: #{stid_forward.1} parent=1 // pred_fallthru
      _
    // Predicated region
    $region30: #{stid_forward.1} parent=1 // pred_check
      _
    $region31: #{stid_forward.1} parent=1 // pred_check_branch
      %38 = sbr.rel (0) target = $region33
    $region32: #{stid_forward.1} parent=1 // pred_region
      _
    $region33: #{stid_forward.1} parent=1 // pred_fallthru
      _
    // Predicated region
    $region34: #{stid_forward.1} parent=1 // pred_check
      _
    $region35: #{stid_forward.1} parent=1 // pred_check_branch
      %40 = sbr.rel (0) target = $region37
    $region36: #{stid_forward.1} parent=1 // pred_region
      _
    $region37: #{stid_forward.1} parent=1 // pred_fallthru
      _
    // Predicated region
    $region38: #{stid_forward.1} parent=1 // pred_check
      _
    $region39: #{stid_forward.1} parent=1 // pred_check_branch
      %42 = sbr.rel (0) target = $region41
    $region40: #{stid_forward.1} parent=1 // pred_region
      %s44 = ssub.s32 8192, 8192
      %45 = vsyncadd [#allocation4], %s44
      %s46 = sshll.u32 [#allocation3], 4
      %s47 = int_to_ptr.vmem [resolvable:$true] %s46
      %52 = dma.hbm_to_vmem [thread:$0]  %s9, 8192, %s47, [#allocation4], 128, 128, 8
    $region41: #{stid_forward.1} parent=1 // pred_fallthru
      _
    // Predicated region
    $region42: #{stid_forward.1} parent=1 // pred_check
      _
    $region43: #{stid_forward.1} parent=1 // pred_check_branch
      %54 = sbr.rel (0) target = $region45
    $region44: #{stid_forward.1} parent=1 // pred_region
      _
    $region45: #{stid_forward.1} parent=1 // pred_fallthru
      _
    // Predicated region
    $region46: #{stid_forward.1} parent=1 // pred_check
      _
    $region47: #{stid_forward.1} parent=1 // pred_check_branch
      %56 = sbr.rel (0) target = $region49
    $region48: #{stid_forward.1} parent=1 // pred_region
      _
    $region49: #{stid_forward.1} parent=1 // pred_fallthru
      _
    // Predicated region
    $region50: #{stid_forward.1} parent=1 // pred_check
      _
    $region51: #{stid_forward.1} parent=1 // pred_check_branch
      %58 = sbr.rel (0) target = $region53
    $region52: #{stid_forward.1} parent=1 // pred_region
      %59 = dma.done [#allocation4], 8192
    $region53: #{stid_forward.1} parent=1 // pred_fallthru
      _
    %v60 = vld [vmem:[%s0] sm:$0xff]
    %v61 = vld [vmem:[%s0 + $0x8] sm:$0xff]
    %v62 = vld [vmem:[%s0 + $0x10] sm:$0xff]
    %v63 = vld [vmem:[%s0 + $0x18] sm:$0xff]
    %v64 = vld [vmem:[%s1] sm:$0xff]
    %v65 = vld [vmem:[%s1 + $0x8] sm:$0xff]
    %v66 = vld [vmem:[%s1 + $0x10] sm:$0xff]
    %v67 = vld [vmem:[%s1 + $0x18] sm:$0xff]
    %v68 = vld [vmem:[%s2] sm:$0x1]
    %v70 = vlaneseq
    %v71 = vshrl.u32 %v70, 7
    %v72 = vsub.s32 0, %v71
    %v73 = vrot.slane %v68, %v72
    %vm75 = vcmask 261120
    %v77 = vsel %vm75, %v60, 0
    %v80 = vsel %vm75, %v61, 0
    %v83 = vsel %vm75, %v62, 0
    %v86 = vsel %vm75, %v63, 0
    %88 = vmatprep.subr.mxu0 0.0
    %89 = vmatpush1.msra.mxu0 %v64
    %90 = vmatprep.subr.mxu0 0.0
    %91 = vmatpush1.msra.mxu0 %v65
    %92 = vmatprep.subr.mxu0 0.0
    %93 = vmatpush1.msra.mxu0 %v66
    %94 = vmatprep.subr.mxu0 0.0
    %95 = vmatpush1.msra.mxu0 %v67
    %96 = vmatprep.subr.mxu0 0.0
    %97 = vmatpush1.msra.mxu0 0.0
    %98 = vmatprep.subr.mxu0 0.0
    %99 = vmatpush1.msra.mxu0 0.0
    %100 = vmatprep.subr.mxu0 0.0
    %101 = vmatpush1.msra.mxu0 0.0
    %102 = vmatprep.subr.mxu0 0.0
    %103 = vmatpush1.msra.mxu0 0.0
    %104 = vmatprep.subr.mxu0 0.0
    %105 = vmatpush1.msra.mxu0 0.0
    %106 = vmatprep.subr.mxu0 0.0
    %107 = vmatpush1.msra.mxu0 0.0
    %108 = vmatprep.subr.mxu0 0.0
    %109 = vmatpush1.msra.mxu0 0.0
    %110 = vmatprep.subr.mxu0 0.0
    %111 = vmatpush1.msra.mxu0 0.0
    %112 = vmatprep.subr.mxu0 0.0
    %113 = vmatpush1.msra.mxu0 0.0
    %114 = vmatprep.subr.mxu0 0.0
    %115 = vmatpush1.msra.mxu0 0.0
    %116 = vmatprep.subr.mxu0 0.0
    %117 = vmatpush1.msra.mxu0 0.0
    %118 = vmatprep.subr.mxu0 0.0
    %119 = vmatpush1.msra.mxu0 0.0
    %120 = vmatprep.subr.mxu0 0.0
    %121 = vmatpush1.msra.mxu0 0.0
    %122 = vmatprep.subr.mxu0 0.0
    %123 = vmatpush1.msra.mxu0 0.0
    %124 = vmatprep.subr.mxu0 0.0
    %125 = vmatpush1.msra.mxu0 0.0
    %126 = vmatprep.subr.mxu0 0.0
    %127 = vmatpush1.msra.mxu0 0.0
    %128 = vmatprep.subr.mxu0 0.0
    %129 = vmatpush1.msra.mxu0 0.0
    %130 = vmatprep.subr.mxu0 0.0
    %131 = vmatpush1.msra.mxu0 0.0
    %132 = vmatprep.subr.mxu0 0.0
    %133 = vmatpush1.msra.mxu0 0.0
    %134 = vmatprep.subr.mxu0 0.0
    %135 = vmatpush1.msra.mxu0 0.0
    %136 = vmatprep.subr.mxu0 0.0
    %137 = vmatpush1.msra.mxu0 0.0
    %138 = vmatprep.subr.mxu0 0.0
    %139 = vmatpush1.msra.mxu0 0.0
    %140 = vmatprep.subr.mxu0 0.0
    %141 = vmatpush1.msra.mxu0 0.0
    %142 = vmatprep.subr.mxu0 0.0
    %143 = vmatpush1.msra.mxu0 0.0
    %144 = vmatprep.subr.mxu0 0.0
    %145 = vmatpush1.msra.mxu0 0.0
    %146 = vmatprep.subr.mxu0 0.0
    %147 = vmatpush1.msra.mxu0 0.0
    %148 = vmatprep.subr.mxu0 0.0
    %149 = vmatpush1.msra.mxu0 0.0
    %150 = vmatprep.subr.mxu0 0.0
    %151 = vmatpush1.msra.mxu0 0.0
    %152 = vmatprep.mubr.f32.mxu0 0.0
    %153 = vmatmul.mubr.f32.gmra.mrb[0].mxu0 %v77
    %v154 = vpop.f32.mrb[0].mxu0
    %v155 = vadd.f32 %v73, %v154
    %v156 = vpop.f32.mrb[0].mxu0
    %157 = vmatprep.mubr.f32.mxu0 0.0
    %158 = vmatmul.mubr.f32.gmra.mrb[0].mxu0 %v80
    %v159 = vpop.f32.mrb[0].mxu0
    %v160 = vadd.f32 %v73, %v159
    %v161 = vpop.f32.mrb[0].mxu0
    %162 = vmatprep.mubr.f32.mxu0 0.0
    %163 = vmatmul.mubr.f32.gmra.mrb[0].mxu0 %v83
    %v164 = vpop.f32.mrb[0].mxu0
    %v165 = vadd.f32 %v73, %v164
    %v166 = vpop.f32.mrb[0].mxu0
    %167 = vmatprep.mubr.f32.mxu0 0.0
    %168 = vmatmul.mubr.f32.gmra.mrb[0].mxu0 %v86
    %v169 = vpop.f32.mrb[0].mxu0
    %v170 = vadd.f32 %v73, %v169
    %v171 = vpop.f32.mrb[0].mxu0
    %172 = vdwg.mxu0
    %v173 = vld [vmem:[%s3] sm:$0xff]
    %v174 = vld [vmem:[%s3 + $0x8] sm:$0xff]
    %v175 = vld [vmem:[%s3 + $0x10] sm:$0xff]
    %v176 = vld [vmem:[%s3 + $0x18] sm:$0xff]
    %v177 = vld [vmem:[%s4] sm:$0x1]
    %v179 = vlaneseq
    %v180 = vshrl.u32 %v179, 7
    %v181 = vsub.s32 0, %v180
    %v182 = vrot.slane %v177, %v181
    %v185 = vsel %vm75, %v155, 0
    %v188 = vsel %vm75, %v160, 0
    %v191 = vsel %vm75, %v165, 0
    %v194 = vsel %vm75, %v170, 0
    %196 = vmatprep.subr.mxu0 0.0
    %197 = vmatpush1.msra.mxu0 %v173
    %198 = vmatprep.subr.mxu0 0.0
    %199 = vmatpush1.msra.mxu0 %v174
    %200 = vmatprep.subr.mxu0 0.0
    %201 = vmatpush1.msra.mxu0 %v175
    %202 = vmatprep.subr.mxu0 0.0
    %203 = vmatpush1.msra.mxu0 %v176
    %204 = vmatprep.subr.mxu0 0.0
    %205 = vmatpush1.msra.mxu0 0.0
    %206 = vmatprep.subr.mxu0 0.0
    %207 = vmatpush1.msra.mxu0 0.0
    %208 = vmatprep.subr.mxu0 0.0
    %209 = vmatpush1.msra.mxu0 0.0
    %210 = vmatprep.subr.mxu0 0.0
    %211 = vmatpush1.msra.mxu0 0.0
    %212 = vmatprep.subr.mxu0 0.0
    %213 = vmatpush1.msra.mxu0 0.0
    %214 = vmatprep.subr.mxu0 0.0
    %215 = vmatpush1.msra.mxu0 0.0
    %216 = vmatprep.subr.mxu0 0.0
    %217 = vmatpush1.msra.mxu0 0.0
    %218 = vmatprep.subr.mxu0 0.0
    %219 = vmatpush1.msra.mxu0 0.0
    %220 = vmatprep.subr.mxu0 0.0
    %221 = vmatpush1.msra.mxu0 0.0
    %222 = vmatprep.subr.mxu0 0.0
    %223 = vmatpush1.msra.mxu0 0.0
    %224 = vmatprep.subr.mxu0 0.0
    %225 = vmatpush1.msra.mxu0 0.0
    %226 = vmatprep.subr.mxu0 0.0
    %227 = vmatpush1.msra.mxu0 0.0
    %228 = vmatprep.subr.mxu0 0.0
    %229 = vmatpush1.msra.mxu0 0.0
    %230 = vmatprep.subr.mxu0 0.0
    %231 = vmatpush1.msra.mxu0 0.0
    %232 = vmatprep.subr.mxu0 0.0
    %233 = vmatpush1.msra.mxu0 0.0
    %234 = vmatprep.subr.mxu0 0.0
    %235 = vmatpush1.msra.mxu0 0.0
    %236 = vmatprep.subr.mxu0 0.0
    %237 = vmatpush1.msra.mxu0 0.0
    %238 = vmatprep.subr.mxu0 0.0
    %239 = vmatpush1.msra.mxu0 0.0
    %240 = vmatprep.subr.mxu0 0.0
    %241 = vmatpush1.msra.mxu0 0.0
    %242 = vmatprep.subr.mxu0 0.0
    %243 = vmatpush1.msra.mxu0 0.0
    %244 = vmatprep.subr.mxu0 0.0
    %245 = vmatpush1.msra.mxu0 0.0
    %246 = vmatprep.subr.mxu0 0.0
    %247 = vmatpush1.msra.mxu0 0.0
    %248 = vmatprep.subr.mxu0 0.0
    %249 = vmatpush1.msra.mxu0 0.0
    %250 = vmatprep.subr.mxu0 0.0
    %251 = vmatpush1.msra.mxu0 0.0
    %252 = vmatprep.subr.mxu0 0.0
    %253 = vmatpush1.msra.mxu0 0.0
    %254 = vmatprep.subr.mxu0 0.0
    %255 = vmatpush1.msra.mxu0 0.0
    %256 = vmatprep.subr.mxu0 0.0
    %257 = vmatpush1.msra.mxu0 0.0
    %258 = vmatprep.subr.mxu0 0.0
    %259 = vmatpush1.msra.mxu0 0.0
    %260 = vmatprep.mubr.f32.mxu0 0.0
    %261 = vmatmul.mubr.f32.gmra.mrb[0].mxu0 %v185
    %v262 = vpop.f32.mrb[0].mxu0
    %v263 = vadd.f32 %v182, %v262
    %v264 = vpop.f32.mrb[0].mxu0
    %265 = vmatprep.mubr.f32.mxu0 0.0
    %266 = vmatmul.mubr.f32.gmra.mrb[0].mxu0 %v188
    %v267 = vpop.f32.mrb[0].mxu0
    %v268 = vadd.f32 %v182, %v267
    %v269 = vpop.f32.mrb[0].mxu0
    %270 = vmatprep.mubr.f32.mxu0 0.0
    %271 = vmatmul.mubr.f32.gmra.mrb[0].mxu0 %v191
    %v272 = vpop.f32.mrb[0].mxu0
    %v273 = vadd.f32 %v182, %v272
    %v274 = vpop.f32.mrb[0].mxu0
    %275 = vmatprep.mubr.f32.mxu0 0.0
    %276 = vmatmul.mubr.f32.gmra.mrb[0].mxu0 %v194
    %v277 = vpop.f32.mrb[0].mxu0
    %v278 = vadd.f32 %v182, %v277
    %v279 = vpop.f32.mrb[0].mxu0
    %280 = vdwg.mxu0
    %v281 = vmax.f32 %v263, 0.0
    %v282 = vmax.f32 %v268, 0.0
    %v283 = vmax.f32 %v273, 0.0
    %v284 = vmax.f32 %v278, 0.0
    %v285 = vld [vmem:[%s5] sm:$0xff]
    %v286 = vld [vmem:[%s5 + $0x8] sm:$0xff]
    %v287 = vld [vmem:[%s5 + $0x10] sm:$0xff]
    %v288 = vld [vmem:[%s5 + $0x18] sm:$0xff]
    %v289 = vld [vmem:[%s6] sm:$0x1]
    %v291 = vlaneseq
    %v292 = vshrl.u32 %v291, 7
    %v293 = vsub.s32 0, %v292
    %v294 = vrot.slane %v289, %v293
    %v297 = vsel %vm75, %v281, 0
    %v300 = vsel %vm75, %v282, 0
    %v303 = vsel %vm75, %v283, 0
    %v306 = vsel %vm75, %v284, 0
    %308 = vmatprep.subr.mxu0 0.0
    %309 = vmatpush1.msra.mxu0 %v285
    %310 = vmatprep.subr.mxu0 0.0
    %311 = vmatpush1.msra.mxu0 %v286
    %312 = vmatprep.subr.mxu0 0.0
    %313 = vmatpush1.msra.mxu0 %v287
    %314 = vmatprep.subr.mxu0 0.0
    %315 = vmatpush1.msra.mxu0 %v288
    %316 = vmatprep.subr.mxu0 0.0
    %317 = vmatpush1.msra.mxu0 0.0
    %318 = vmatprep.subr.mxu0 0.0
    %319 = vmatpush1.msra.mxu0 0.0
    %320 = vmatprep.subr.mxu0 0.0
    %321 = vmatpush1.msra.mxu0 0.0
    %322 = vmatprep.subr.mxu0 0.0
    %323 = vmatpush1.msra.mxu0 0.0
    %324 = vmatprep.subr.mxu0 0.0
    %325 = vmatpush1.msra.mxu0 0.0
    %326 = vmatprep.subr.mxu0 0.0
    %327 = vmatpush1.msra.mxu0 0.0
    %328 = vmatprep.subr.mxu0 0.0
    %329 = vmatpush1.msra.mxu0 0.0
    %330 = vmatprep.subr.mxu0 0.0
    %331 = vmatpush1.msra.mxu0 0.0
    %332 = vmatprep.subr.mxu0 0.0
    %333 = vmatpush1.msra.mxu0 0.0
    %334 = vmatprep.subr.mxu0 0.0
    %335 = vmatpush1.msra.mxu0 0.0
    %336 = vmatprep.subr.mxu0 0.0
    %337 = vmatpush1.msra.mxu0 0.0
    %338 = vmatprep.subr.mxu0 0.0
    %339 = vmatpush1.msra.mxu0 0.0
    %340 = vmatprep.subr.mxu0 0.0
    %341 = vmatpush1.msra.mxu0 0.0
    %342 = vmatprep.subr.mxu0 0.0
    %343 = vmatpush1.msra.mxu0 0.0
    %344 = vmatprep.subr.mxu0 0.0
    %345 = vmatpush1.msra.mxu0 0.0
    %346 = vmatprep.subr.mxu0 0.0
    %347 = vmatpush1.msra.mxu0 0.0
    %348 = vmatprep.subr.mxu0 0.0
    %349 = vmatpush1.msra.mxu0 0.0
    %350 = vmatprep.subr.mxu0 0.0
    %351 = vmatpush1.msra.mxu0 0.0
    %352 = vmatprep.subr.mxu0 0.0
    %353 = vmatpush1.msra.mxu0 0.0
    %354 = vmatprep.subr.mxu0 0.0
    %355 = vmatpush1.msra.mxu0 0.0
    %356 = vmatprep.subr.mxu0 0.0
    %357 = vmatpush1.msra.mxu0 0.0
    %358 = vmatprep.subr.mxu0 0.0
    %359 = vmatpush1.msra.mxu0 0.0
    %360 = vmatprep.subr.mxu0 0.0
    %361 = vmatpush1.msra.mxu0 0.0
    %362 = vmatprep.subr.mxu0 0.0
    %363 = vmatpush1.msra.mxu0 0.0
    %364 = vmatprep.subr.mxu0 0.0
    %365 = vmatpush1.msra.mxu0 0.0
    %366 = vmatprep.subr.mxu0 0.0
    %367 = vmatpush1.msra.mxu0 0.0
    %368 = vmatprep.subr.mxu0 0.0
    %369 = vmatpush1.msra.mxu0 0.0
    %370 = vmatprep.subr.mxu0 0.0
    %371 = vmatpush1.msra.mxu0 0.0
    %372 = vmatprep.mubr.f32.mxu0 0.0
    %373 = vmatmul.mubr.f32.gmra.mrb[0].mxu0 %v297
    %v374 = vpop.f32.mrb[0].mxu0
    %v375 = vadd.f32 %v294, %v374
    %v376 = vpop.f32.mrb[0].mxu0
    %377 = vmatprep.mubr.f32.mxu0 0.0
    %378 = vmatmul.mubr.f32.gmra.mrb[0].mxu0 %v300
    %v379 = vpop.f32.mrb[0].mxu0
    %v380 = vadd.f32 %v294, %v379
    %v381 = vpop.f32.mrb[0].mxu0
    %382 = vmatprep.mubr.f32.mxu0 0.0
    %383 = vmatmul.mubr.f32.gmra.mrb[0].mxu0 %v303
    %v384 = vpop.f32.mrb[0].mxu0
    %v385 = vadd.f32 %v294, %v384
    %v386 = vpop.f32.mrb[0].mxu0
    %387 = vmatprep.mubr.f32.mxu0 0.0
    %388 = vmatmul.mubr.f32.gmra.mrb[0].mxu0 %v306
    %v389 = vpop.f32.mrb[0].mxu0
    %v390 = vadd.f32 %v294, %v389
    %v391 = vpop.f32.mrb[0].mxu0
    %392 = vdwg.mxu0
    %v393 = vadd.f32 %v155, %v375
    %v394 = vadd.f32 %v160, %v380
    %v395 = vadd.f32 %v165, %v385
    %v396 = vadd.f32 %v170, %v390
    %s397 = scalar_lea.vmem %s3, 32
    %v398 = vld [vmem:[%s397] sm:$0xff]
    %v399 = vld [vmem:[%s397 + $0x8] sm:$0xff]
    %v400 = vld [vmem:[%s397 + $0x10] sm:$0xff]
    %v401 = vld [vmem:[%s397 + $0x18] sm:$0xff]
    %s402 = scalar_lea.vmem %s4, 1
    %v403 = vld [vmem:[%s402] sm:$0x1]
    %v405 = vlaneseq
    %v406 = vshrl.u32 %v405, 7
    %v407 = vsub.s32 0, %v406
    %v408 = vrot.slane %v403, %v407
    %v411 = vsel %vm75, %v393, 0
    %v414 = vsel %vm75, %v394, 0
    %v417 = vsel %vm75, %v395, 0
    %v420 = vsel %vm75, %v396, 0
    %422 = vmatprep.subr.mxu0 0.0
    %423 = vmatpush1.msra.mxu0 %v398
    %424 = vmatprep.subr.mxu0 0.0
    %425 = vmatpush1.msra.mxu0 %v399
    %426 = vmatprep.subr.mxu0 0.0
    %427 = vmatpush1.msra.mxu0 %v400
    %428 = vmatprep.subr.mxu0 0.0
    %429 = vmatpush1.msra.mxu0 %v401
    %430 = vmatprep.subr.mxu0 0.0
    %431 = vmatpush1.msra.mxu0 0.0
    %432 = vmatprep.subr.mxu0 0.0
    %433 = vmatpush1.msra.mxu0 0.0
    %434 = vmatprep.subr.mxu0 0.0
    %435 = vmatpush1.msra.mxu0 0.0
    %436 = vmatprep.subr.mxu0 0.0
    %437 = vmatpush1.msra.mxu0 0.0
    %438 = vmatprep.subr.mxu0 0.0
    %439 = vmatpush1.msra.mxu0 0.0
    %440 = vmatprep.subr.mxu0 0.0
    %441 = vmatpush1.msra.mxu0 0.0
    %442 = vmatprep.subr.mxu0 0.0
    %443 = vmatpush1.msra.mxu0 0.0
    %444 = vmatprep.subr.mxu0 0.0
    %445 = vmatpush1.msra.mxu0 0.0
    %446 = vmatprep.subr.mxu0 0.0
    %447 = vmatpush1.msra.mxu0 0.0
    %448 = vmatprep.subr.mxu0 0.0
    %449 = vmatpush1.msra.mxu0 0.0
    %450 = vmatprep.subr.mxu0 0.0
    %451 = vmatpush1.msra.mxu0 0.0
    %452 = vmatprep.subr.mxu0 0.0
    %453 = vmatpush1.msra.mxu0 0.0
    %454 = vmatprep.subr.mxu0 0.0
    %455 = vmatpush1.msra.mxu0 0.0
    %456 = vmatprep.subr.mxu0 0.0
    %457 = vmatpush1.msra.mxu0 0.0
    %458 = vmatprep.subr.mxu0 0.0
    %459 = vmatpush1.msra.mxu0 0.0
    %460 = vmatprep.subr.mxu0 0.0
    %461 = vmatpush1.msra.mxu0 0.0
    %462 = vmatprep.subr.mxu0 0.0
    %463 = vmatpush1.msra.mxu0 0.0
    %464 = vmatprep.subr.mxu0 0.0
    %465 = vmatpush1.msra.mxu0 0.0
    %466 = vmatprep.subr.mxu0 0.0
    %467 = vmatpush1.msra.mxu0 0.0
    %468 = vmatprep.subr.mxu0 0.0
    %469 = vmatpush1.msra.mxu0 0.0
    %470 = vmatprep.subr.mxu0 0.0
    %471 = vmatpush1.msra.mxu0 0.0
    %472 = vmatprep.subr.mxu0 0.0
    %473 = vmatpush1.msra.mxu0 0.0
    %474 = vmatprep.subr.mxu0 0.0
    %475 = vmatpush1.msra.mxu0 0.0
    %476 = vmatprep.subr.mxu0 0.0
    %477 = vmatpush1.msra.mxu0 0.0
    %478 = vmatprep.subr.mxu0 0.0
    %479 = vmatpush1.msra.mxu0 0.0
    %480 = vmatprep.subr.mxu0 0.0
    %481 = vmatpush1.msra.mxu0 0.0
    %482 = vmatprep.subr.mxu0 0.0
    %483 = vmatpush1.msra.mxu0 0.0
    %484 = vmatprep.subr.mxu0 0.0
    %485 = vmatpush1.msra.mxu0 0.0
    %486 = vmatprep.mubr.f32.mxu0 0.0
    %487 = vmatmul.mubr.f32.gmra.mrb[0].mxu0 %v411
    %v488 = vpop.f32.mrb[0].mxu0
    %v489 = vadd.f32 %v408, %v488
    %v490 = vpop.f32.mrb[0].mxu0
    %491 = vmatprep.mubr.f32.mxu0 0.0
    %492 = vmatmul.mubr.f32.gmra.mrb[0].mxu0 %v414
    %v493 = vpop.f32.mrb[0].mxu0
    %v494 = vadd.f32 %v408, %v493
    %v495 = vpop.f32.mrb[0].mxu0
    %496 = vmatprep.mubr.f32.mxu0 0.0
    %497 = vmatmul.mubr.f32.gmra.mrb[0].mxu0 %v417
    %v498 = vpop.f32.mrb[0].mxu0
    %v499 = vadd.f32 %v408, %v498
    %v500 = vpop.f32.mrb[0].mxu0
    %501 = vmatprep.mubr.f32.mxu0 0.0
    %502 = vmatmul.mubr.f32.gmra.mrb[0].mxu0 %v420
    %v503 = vpop.f32.mrb[0].mxu0
    %v504 = vadd.f32 %v408, %v503
    %v505 = vpop.f32.mrb[0].mxu0
    %506 = vdwg.mxu0
    %v507 = vmax.f32 %v489, 0.0
    %v508 = vmax.f32 %v494, 0.0
    %v509 = vmax.f32 %v499, 0.0
    %v510 = vmax.f32 %v504, 0.0
    %s511 = scalar_lea.vmem %s5, 32
    %v512 = vld [vmem:[%s511] sm:$0xff]
    %v513 = vld [vmem:[%s511 + $0x8] sm:$0xff]
    %v514 = vld [vmem:[%s511 + $0x10] sm:$0xff]
    %v515 = vld [vmem:[%s511 + $0x18] sm:$0xff]
    %s516 = scalar_lea.vmem %s6, 1
    %v517 = vld [vmem:[%s516] sm:$0x1]
    %v519 = vlaneseq
    %v520 = vshrl.u32 %v519, 7
    %v521 = vsub.s32 0, %v520
    %v522 = vrot.slane %v517, %v521
    %v525 = vsel %vm75, %v507, 0
    %v528 = vsel %vm75, %v508, 0
    %v531 = vsel %vm75, %v509, 0
    %v534 = vsel %vm75, %v510, 0
    %536 = vmatprep.subr.mxu0 0.0
    %537 = vmatpush1.msra.mxu0 %v512
    %538 = vmatprep.subr.mxu0 0.0
    %539 = vmatpush1.msra.mxu0 %v513
    %540 = vmatprep.subr.mxu0 0.0
    %541 = vmatpush1.msra.mxu0 %v514
    %542 = vmatprep.subr.mxu0 0.0
    %543 = vmatpush1.msra.mxu0 %v515
    %544 = vmatprep.subr.mxu0 0.0
    %545 = vmatpush1.msra.mxu0 0.0
    %546 = vmatprep.subr.mxu0 0.0
    %547 = vmatpush1.msra.mxu0 0.0
    %548 = vmatprep.subr.mxu0 0.0
    %549 = vmatpush1.msra.mxu0 0.0
    %550 = vmatprep.subr.mxu0 0.0
    %551 = vmatpush1.msra.mxu0 0.0
    %552 = vmatprep.subr.mxu0 0.0
    %553 = vmatpush1.msra.mxu0 0.0
    %554 = vmatprep.subr.mxu0 0.0
    %555 = vmatpush1.msra.mxu0 0.0
    %556 = vmatprep.subr.mxu0 0.0
    %557 = vmatpush1.msra.mxu0 0.0
    %558 = vmatprep.subr.mxu0 0.0
    %559 = vmatpush1.msra.mxu0 0.0
    %560 = vmatprep.subr.mxu0 0.0
    %561 = vmatpush1.msra.mxu0 0.0
    %562 = vmatprep.subr.mxu0 0.0
    %563 = vmatpush1.msra.mxu0 0.0
    %564 = vmatprep.subr.mxu0 0.0
    %565 = vmatpush1.msra.mxu0 0.0
    %566 = vmatprep.subr.mxu0 0.0
    %567 = vmatpush1.msra.mxu0 0.0
    %568 = vmatprep.subr.mxu0 0.0
    %569 = vmatpush1.msra.mxu0 0.0
    %570 = vmatprep.subr.mxu0 0.0
    %571 = vmatpush1.msra.mxu0 0.0
    %572 = vmatprep.subr.mxu0 0.0
    %573 = vmatpush1.msra.mxu0 0.0
    %574 = vmatprep.subr.mxu0 0.0
    %575 = vmatpush1.msra.mxu0 0.0
    %576 = vmatprep.subr.mxu0 0.0
    %577 = vmatpush1.msra.mxu0 0.0
    %578 = vmatprep.subr.mxu0 0.0
    %579 = vmatpush1.msra.mxu0 0.0
    %580 = vmatprep.subr.mxu0 0.0
    %581 = vmatpush1.msra.mxu0 0.0
    %582 = vmatprep.subr.mxu0 0.0
    %583 = vmatpush1.msra.mxu0 0.0
    %584 = vmatprep.subr.mxu0 0.0
    %585 = vmatpush1.msra.mxu0 0.0
    %586 = vmatprep.subr.mxu0 0.0
    %587 = vmatpush1.msra.mxu0 0.0
    %588 = vmatprep.subr.mxu0 0.0
    %589 = vmatpush1.msra.mxu0 0.0
    %590 = vmatprep.subr.mxu0 0.0
    %591 = vmatpush1.msra.mxu0 0.0
    %592 = vmatprep.subr.mxu0 0.0
    %593 = vmatpush1.msra.mxu0 0.0
    %594 = vmatprep.subr.mxu0 0.0
    %595 = vmatpush1.msra.mxu0 0.0
    %596 = vmatprep.subr.mxu0 0.0
    %597 = vmatpush1.msra.mxu0 0.0
    %598 = vmatprep.subr.mxu0 0.0
    %599 = vmatpush1.msra.mxu0 0.0
    %600 = vmatprep.mubr.f32.mxu0 0.0
    %601 = vmatmul.mubr.f32.gmra.mrb[0].mxu0 %v525
    %v602 = vpop.f32.mrb[0].mxu0
    %v603 = vadd.f32 %v522, %v602
    %v604 = vpop.f32.mrb[0].mxu0
    %605 = vmatprep.mubr.f32.mxu0 0.0
    %606 = vmatmul.mubr.f32.gmra.mrb[0].mxu0 %v528
    %v607 = vpop.f32.mrb[0].mxu0
    %v608 = vadd.f32 %v522, %v607
    %v609 = vpop.f32.mrb[0].mxu0
    %610 = vmatprep.mubr.f32.mxu0 0.0
    %611 = vmatmul.mubr.f32.gmra.mrb[0].mxu0 %v531
    %v612 = vpop.f32.mrb[0].mxu0
    %v613 = vadd.f32 %v522, %v612
    %v614 = vpop.f32.mrb[0].mxu0
    %615 = vmatprep.mubr.f32.mxu0 0.0
    %616 = vmatmul.mubr.f32.gmra.mrb[0].mxu0 %v534
    %v617 = vpop.f32.mrb[0].mxu0
    %v618 = vadd.f32 %v522, %v617
    %v619 = vpop.f32.mrb[0].mxu0
    %620 = vdwg.mxu0
    %v621 = vadd.f32 %v393, %v603
    %v622 = vadd.f32 %v394, %v608
    %v623 = vadd.f32 %v395, %v613
    %v624 = vadd.f32 %v396, %v618
    %s625 = scalar_lea.vmem %s3, 64
    %v626 = vld [vmem:[%s625] sm:$0xff]
    %v627 = vld [vmem:[%s625 + $0x8] sm:$0xff]
    %v628 = vld [vmem:[%s625 + $0x10] sm:$0xff]
    %v629 = vld [vmem:[%s625 + $0x18] sm:$0xff]
    %s630 = scalar_lea.vmem %s4, 2
    %v631 = vld [vmem:[%s630] sm:$0x1]
    %v633 = vlaneseq
    %v634 = vshrl.u32 %v633, 7
    %v635 = vsub.s32 0, %v634
    %v636 = vrot.slane %v631, %v635
    %v639 = vsel %vm75, %v621, 0
    %v642 = vsel %vm75, %v622, 0
    %v645 = vsel %vm75, %v623, 0
    %v648 = vsel %vm75, %v624, 0
    %650 = vmatprep.subr.mxu0 0.0
    %651 = vmatpush1.msra.mxu0 %v626
    %652 = vmatprep.subr.mxu0 0.0
    %653 = vmatpush1.msra.mxu0 %v627
    %654 = vmatprep.subr.mxu0 0.0
    %655 = vmatpush1.msra.mxu0 %v628
    %656 = vmatprep.subr.mxu0 0.0
    %657 = vmatpush1.msra.mxu0 %v629
    %658 = vmatprep.subr.mxu0 0.0
    %659 = vmatpush1.msra.mxu0 0.0
    %660 = vmatprep.subr.mxu0 0.0
    %661 = vmatpush1.msra.mxu0 0.0
    %662 = vmatprep.subr.mxu0 0.0
    %663 = vmatpush1.msra.mxu0 0.0
    %664 = vmatprep.subr.mxu0 0.0
    %665 = vmatpush1.msra.mxu0 0.0
    %666 = vmatprep.subr.mxu0 0.0
    %667 = vmatpush1.msra.mxu0 0.0
    %668 = vmatprep.subr.mxu0 0.0
    %669 = vmatpush1.msra.mxu0 0.0
    %670 = vmatprep.subr.mxu0 0.0
    %671 = vmatpush1.msra.mxu0 0.0
    %672 = vmatprep.subr.mxu0 0.0
    %673 = vmatpush1.msra.mxu0 0.0
    %674 = vmatprep.subr.mxu0 0.0
    %675 = vmatpush1.msra.mxu0 0.0
    %676 = vmatprep.subr.mxu0 0.0
    %677 = vmatpush1.msra.mxu0 0.0
    %678 = vmatprep.subr.mxu0 0.0
    %679 = vmatpush1.msra.mxu0 0.0
    %680 = vmatprep.subr.mxu0 0.0
    %681 = vmatpush1.msra.mxu0 0.0
    %682 = vmatprep.subr.mxu0 0.0
    %683 = vmatpush1.msra.mxu0 0.0
    %684 = vmatprep.subr.mxu0 0.0
    %685 = vmatpush1.msra.mxu0 0.0
    %686 = vmatprep.subr.mxu0 0.0
    %687 = vmatpush1.msra.mxu0 0.0
    %688 = vmatprep.subr.mxu0 0.0
    %689 = vmatpush1.msra.mxu0 0.0
    %690 = vmatprep.subr.mxu0 0.0
    %691 = vmatpush1.msra.mxu0 0.0
    %692 = vmatprep.subr.mxu0 0.0
    %693 = vmatpush1.msra.mxu0 0.0
    %694 = vmatprep.subr.mxu0 0.0
    %695 = vmatpush1.msra.mxu0 0.0
    %696 = vmatprep.subr.mxu0 0.0
    %697 = vmatpush1.msra.mxu0 0.0
    %698 = vmatprep.subr.mxu0 0.0
    %699 = vmatpush1.msra.mxu0 0.0
    %700 = vmatprep.subr.mxu0 0.0
    %701 = vmatpush1.msra.mxu0 0.0
    %702 = vmatprep.subr.mxu0 0.0
    %703 = vmatpush1.msra.mxu0 0.0
    %704 = vmatprep.subr.mxu0 0.0
    %705 = vmatpush1.msra.mxu0 0.0
    %706 = vmatprep.subr.mxu0 0.0
    %707 = vmatpush1.msra.mxu0 0.0
    %708 = vmatprep.subr.mxu0 0.0
    %709 = vmatpush1.msra.mxu0 0.0
    %710 = vmatprep.subr.mxu0 0.0
    %711 = vmatpush1.msra.mxu0 0.0
    %712 = vmatprep.subr.mxu0 0.0
    %713 = vmatpush1.msra.mxu0 0.0
    %714 = vmatprep.mubr.f32.mxu0 0.0
    %715 = vmatmul.mubr.f32.gmra.mrb[0].mxu0 %v639
    %v716 = vpop.f32.mrb[0].mxu0
    %v717 = vadd.f32 %v636, %v716
    %v718 = vpop.f32.mrb[0].mxu0
    %719 = vmatprep.mubr.f32.mxu0 0.0
    %720 = vmatmul.mubr.f32.gmra.mrb[0].mxu0 %v642
    %v721 = vpop.f32.mrb[0].mxu0
    %v722 = vadd.f32 %v636, %v721
    %v723 = vpop.f32.mrb[0].mxu0
    %724 = vmatprep.mubr.f32.mxu0 0.0
    %725 = vmatmul.mubr.f32.gmra.mrb[0].mxu0 %v645
    %v726 = vpop.f32.mrb[0].mxu0
    %v727 = vadd.f32 %v636, %v726
    %v728 = vpop.f32.mrb[0].mxu0
    %729 = vmatprep.mubr.f32.mxu0 0.0
    %730 = vmatmul.mubr.f32.gmra.mrb[0].mxu0 %v648
    %v731 = vpop.f32.mrb[0].mxu0
    %v732 = vadd.f32 %v636, %v731
    %v733 = vpop.f32.mrb[0].mxu0
    %734 = vdwg.mxu0
    %v735 = vmax.f32 %v717, 0.0
    %v736 = vmax.f32 %v722, 0.0
    %v737 = vmax.f32 %v727, 0.0
    %v738 = vmax.f32 %v732, 0.0
    %s739 = scalar_lea.vmem %s5, 64
    %v740 = vld [vmem:[%s739] sm:$0xff]
    %v741 = vld [vmem:[%s739 + $0x8] sm:$0xff]
    %v742 = vld [vmem:[%s739 + $0x10] sm:$0xff]
    %v743 = vld [vmem:[%s739 + $0x18] sm:$0xff]
    %s744 = scalar_lea.vmem %s6, 2
    %v745 = vld [vmem:[%s744] sm:$0x1]
    %v747 = vlaneseq
    %v748 = vshrl.u32 %v747, 7
    %v749 = vsub.s32 0, %v748
    %v750 = vrot.slane %v745, %v749
    %v753 = vsel %vm75, %v735, 0
    %v756 = vsel %vm75, %v736, 0
    %v759 = vsel %vm75, %v737, 0
    %v762 = vsel %vm75, %v738, 0
    %764 = vmatprep.subr.mxu0 0.0
    %765 = vmatpush1.msra.mxu0 %v740
    %766 = vmatprep.subr.mxu0 0.0
    %767 = vmatpush1.msra.mxu0 %v741
    %768 = vmatprep.subr.mxu0 0.0
    %769 = vmatpush1.msra.mxu0 %v742
    %770 = vmatprep.subr.mxu0 0.0
    %771 = vmatpush1.msra.mxu0 %v743
    %772 = vmatprep.subr.mxu0 0.0
    %773 = vmatpush1.msra.mxu0 0.0
    %774 = vmatprep.subr.mxu0 0.0
    %775 = vmatpush1.msra.mxu0 0.0
    %776 = vmatprep.subr.mxu0 0.0
    %777 = vmatpush1.msra.mxu0 0.0
    %778 = vmatprep.subr.mxu0 0.0
    %779 = vmatpush1.msra.mxu0 0.0
    %780 = vmatprep.subr.mxu0 0.0
    %781 = vmatpush1.msra.mxu0 0.0
    %782 = vmatprep.subr.mxu0 0.0
    %783 = vmatpush1.msra.mxu0 0.0
    %784 = vmatprep.subr.mxu0 0.0
    %785 = vmatpush1.msra.mxu0 0.0
    %786 = vmatprep.subr.mxu0 0.0
    %787 = vmatpush1.msra.mxu0 0.0
    %788 = vmatprep.subr.mxu0 0.0
    %789 = vmatpush1.msra.mxu0 0.0
    %790 = vmatprep.subr.mxu0 0.0
    %791 = vmatpush1.msra.mxu0 0.0
    %792 = vmatprep.subr.mxu0 0.0
    %793 = vmatpush1.msra.mxu0 0.0
    %794 = vmatprep.subr.mxu0 0.0
    %795 = vmatpush1.msra.mxu0 0.0
    %796 = vmatprep.subr.mxu0 0.0
    %797 = vmatpush1.msra.mxu0 0.0
    %798 = vmatprep.subr.mxu0 0.0
    %799 = vmatpush1.msra.mxu0 0.0
    %800 = vmatprep.subr.mxu0 0.0
    %801 = vmatpush1.msra.mxu0 0.0
    %802 = vmatprep.subr.mxu0 0.0
    %803 = vmatpush1.msra.mxu0 0.0
    %804 = vmatprep.subr.mxu0 0.0
    %805 = vmatpush1.msra.mxu0 0.0
    %806 = vmatprep.subr.mxu0 0.0
    %807 = vmatpush1.msra.mxu0 0.0
    %808 = vmatprep.subr.mxu0 0.0
    %809 = vmatpush1.msra.mxu0 0.0
    %810 = vmatprep.subr.mxu0 0.0
    %811 = vmatpush1.msra.mxu0 0.0
    %812 = vmatprep.subr.mxu0 0.0
    %813 = vmatpush1.msra.mxu0 0.0
    %814 = vmatprep.subr.mxu0 0.0
    %815 = vmatpush1.msra.mxu0 0.0
    %816 = vmatprep.subr.mxu0 0.0
    %817 = vmatpush1.msra.mxu0 0.0
    %818 = vmatprep.subr.mxu0 0.0
    %819 = vmatpush1.msra.mxu0 0.0
    %820 = vmatprep.subr.mxu0 0.0
    %821 = vmatpush1.msra.mxu0 0.0
    %822 = vmatprep.subr.mxu0 0.0
    %823 = vmatpush1.msra.mxu0 0.0
    %824 = vmatprep.subr.mxu0 0.0
    %825 = vmatpush1.msra.mxu0 0.0
    %826 = vmatprep.subr.mxu0 0.0
    %827 = vmatpush1.msra.mxu0 0.0
    %828 = vmatprep.mubr.f32.mxu0 0.0
    %829 = vmatmul.mubr.f32.gmra.mrb[0].mxu0 %v753
    %v830 = vpop.f32.mrb[0].mxu0
    %v831 = vadd.f32 %v750, %v830
    %v832 = vpop.f32.mrb[0].mxu0
    %833 = vmatprep.mubr.f32.mxu0 0.0
    %834 = vmatmul.mubr.f32.gmra.mrb[0].mxu0 %v756
    %v835 = vpop.f32.mrb[0].mxu0
    %v836 = vadd.f32 %v750, %v835
    %v837 = vpop.f32.mrb[0].mxu0
    %838 = vmatprep.mubr.f32.mxu0 0.0
    %839 = vmatmul.mubr.f32.gmra.mrb[0].mxu0 %v759
    %v840 = vpop.f32.mrb[0].mxu0
    %v841 = vadd.f32 %v750, %v840
    %v842 = vpop.f32.mrb[0].mxu0
    %843 = vmatprep.mubr.f32.mxu0 0.0
    %844 = vmatmul.mubr.f32.gmra.mrb[0].mxu0 %v762
    %v845 = vpop.f32.mrb[0].mxu0
    %v846 = vadd.f32 %v750, %v845
    %v847 = vpop.f32.mrb[0].mxu0
    %848 = vdwg.mxu0
    %v849 = vadd.f32 %v621, %v831
    %v850 = vadd.f32 %v622, %v836
    %v851 = vadd.f32 %v623, %v841
    %v852 = vadd.f32 %v624, %v846
    %v853 = vld [vmem:[%s7] sm:$0xff]
    %v854 = vld [vmem:[%s7 + $0x8] sm:$0xff]
    %v855 = vld [vmem:[%s7 + $0x10] sm:$0xff]
    %v856 = vld [vmem:[%s7 + $0x18] sm:$0xff]
    %v857 = vld [vmem:[#allocation2] sm:$0x1]
    %v859 = vlaneseq
    %v860 = vshrl.u32 %v859, 7
    %v861 = vsub.s32 0, %v860
    %v862 = vrot.slane %v857, %v861
    %v865 = vsel %vm75, %v849, 0
    %v868 = vsel %vm75, %v850, 0
    %v871 = vsel %vm75, %v851, 0
    %v874 = vsel %vm75, %v852, 0
    %876 = vmatprep.subr.mxu0 0.0
    %877 = vmatpush1.msra.mxu0 %v853
    %878 = vmatprep.subr.mxu0 0.0
    %879 = vmatpush1.msra.mxu0 %v854
    %880 = vmatprep.subr.mxu0 0.0
    %881 = vmatpush1.msra.mxu0 %v855
    %882 = vmatprep.subr.mxu0 0.0
    %883 = vmatpush1.msra.mxu0 %v856
    %884 = vmatprep.subr.mxu0 0.0
    %885 = vmatpush1.msra.mxu0 0.0
    %886 = vmatprep.subr.mxu0 0.0
    %887 = vmatpush1.msra.mxu0 0.0
    %888 = vmatprep.subr.mxu0 0.0
    %889 = vmatpush1.msra.mxu0 0.0
    %890 = vmatprep.subr.mxu0 0.0
    %891 = vmatpush1.msra.mxu0 0.0
    %892 = vmatprep.subr.mxu0 0.0
    %893 = vmatpush1.msra.mxu0 0.0
    %894 = vmatprep.subr.mxu0 0.0
    %895 = vmatpush1.msra.mxu0 0.0
    %896 = vmatprep.subr.mxu0 0.0
    %897 = vmatpush1.msra.mxu0 0.0
    %898 = vmatprep.subr.mxu0 0.0
    %899 = vmatpush1.msra.mxu0 0.0
    %900 = vmatprep.subr.mxu0 0.0
    %901 = vmatpush1.msra.mxu0 0.0
    %902 = vmatprep.subr.mxu0 0.0
    %903 = vmatpush1.msra.mxu0 0.0
    %904 = vmatprep.subr.mxu0 0.0
    %905 = vmatpush1.msra.mxu0 0.0
    %906 = vmatprep.subr.mxu0 0.0
    %907 = vmatpush1.msra.mxu0 0.0
    %908 = vmatprep.subr.mxu0 0.0
    %909 = vmatpush1.msra.mxu0 0.0
    %910 = vmatprep.subr.mxu0 0.0
    %911 = vmatpush1.msra.mxu0 0.0
    %912 = vmatprep.subr.mxu0 0.0
    %913 = vmatpush1.msra.mxu0 0.0
    %914 = vmatprep.subr.mxu0 0.0
    %915 = vmatpush1.msra.mxu0 0.0
    %916 = vmatprep.subr.mxu0 0.0
    %917 = vmatpush1.msra.mxu0 0.0
    %918 = vmatprep.subr.mxu0 0.0
    %919 = vmatpush1.msra.mxu0 0.0
    %920 = vmatprep.subr.mxu0 0.0
    %921 = vmatpush1.msra.mxu0 0.0
    %922 = vmatprep.subr.mxu0 0.0
    %923 = vmatpush1.msra.mxu0 0.0
    %924 = vmatprep.subr.mxu0 0.0
    %925 = vmatpush1.msra.mxu0 0.0
    %926 = vmatprep.subr.mxu0 0.0
    %927 = vmatpush1.msra.mxu0 0.0
    %928 = vmatprep.subr.mxu0 0.0
    %929 = vmatpush1.msra.mxu0 0.0
    %930 = vmatprep.subr.mxu0 0.0
    %931 = vmatpush1.msra.mxu0 0.0
    %932 = vmatprep.subr.mxu0 0.0
    %933 = vmatpush1.msra.mxu0 0.0
    %934 = vmatprep.subr.mxu0 0.0
    %935 = vmatpush1.msra.mxu0 0.0
    %936 = vmatprep.subr.mxu0 0.0
    %937 = vmatpush1.msra.mxu0 0.0
    %938 = vmatprep.subr.mxu0 0.0
    %939 = vmatpush1.msra.mxu0 0.0
    %940 = vmatprep.mubr.f32.mxu0 0.0
    %941 = vmatmul.mubr.f32.gmra.mrb[0].mxu0 %v865
    %v942 = vpop.f32.mrb[0].mxu0
    %v943 = vadd.f32 %v862, %v942
    %v944 = vpop.f32.mrb[0].mxu0
    %945 = vmatprep.mubr.f32.mxu0 0.0
    %946 = vmatmul.mubr.f32.gmra.mrb[0].mxu0 %v868
    %v947 = vpop.f32.mrb[0].mxu0
    %v948 = vadd.f32 %v862, %v947
    %v949 = vpop.f32.mrb[0].mxu0
    %950 = vmatprep.mubr.f32.mxu0 0.0
    %951 = vmatmul.mubr.f32.gmra.mrb[0].mxu0 %v871
    %v952 = vpop.f32.mrb[0].mxu0
    %v953 = vadd.f32 %v862, %v952
    %v954 = vpop.f32.mrb[0].mxu0
    %955 = vmatprep.mubr.f32.mxu0 0.0
    %956 = vmatmul.mubr.f32.gmra.mrb[0].mxu0 %v874
    %v957 = vpop.f32.mrb[0].mxu0
    %v958 = vadd.f32 %v862, %v957
    %v959 = vpop.f32.mrb[0].mxu0
    %960 = vdwg.mxu0
    %vm961 = vcmask 7168
    %962 = vst.msk [vmem:[%s12] sm:$0xff] %vm961, %v943
    %963 = vst.msk [vmem:[%s12 + $0x8] sm:$0xff] %vm961, %v948
    %964 = vst.msk [vmem:[%s12 + $0x10] sm:$0xff] %vm961, %v953
    %965 = vst.msk [vmem:[%s12 + $0x18] sm:$0xff] %vm961, %v958
    %v966 = vld [vmem:[%s11] sm:$0x3]
    %v968 = vsel %vm75, %v966, 0
    %970 = vmatprep.subr.mxu0 0.0
    %971 = vmatpush1.msra.mxu0 %v849
    %972 = vmatprep.subr.mxu0 0.0
    %973 = vmatpush1.msra.mxu0 %v850
    %974 = vmatprep.subr.mxu0 0.0
    %975 = vmatpush1.msra.mxu0 %v851
    %976 = vmatprep.subr.mxu0 0.0
    %977 = vmatpush1.msra.mxu0 %v852
    %978 = vmatprep.subr.mxu0 0.0
    %979 = vmatpush1.msra.mxu0 0.0
    %980 = vmatprep.subr.mxu0 0.0
    %981 = vmatpush1.msra.mxu0 0.0
    %982 = vmatprep.subr.mxu0 0.0
    %983 = vmatpush1.msra.mxu0 0.0
    %984 = vmatprep.subr.mxu0 0.0
    %985 = vmatpush1.msra.mxu0 0.0
    %986 = vmatprep.subr.mxu0 0.0
    %987 = vmatpush1.msra.mxu0 0.0
    %988 = vmatprep.subr.mxu0 0.0
    %989 = vmatpush1.msra.mxu0 0.0
    %990 = vmatprep.subr.mxu0 0.0
    %991 = vmatpush1.msra.mxu0 0.0
    %992 = vmatprep.subr.mxu0 0.0
    %993 = vmatpush1.msra.mxu0 0.0
    %994 = vmatprep.subr.mxu0 0.0
    %995 = vmatpush1.msra.mxu0 0.0
    %996 = vmatprep.subr.mxu0 0.0
    %997 = vmatpush1.msra.mxu0 0.0
    %998 = vmatprep.subr.mxu0 0.0
    %999 = vmatpush1.msra.mxu0 0.0
    %1000 = vmatprep.subr.mxu0 0.0
    %1001 = vmatpush1.msra.mxu0 0.0
    %1002 = vmatprep.subr.mxu0 0.0
    %1003 = vmatpush1.msra.mxu0 0.0
    %1004 = vmatprep.subr.mxu0 0.0
    %1005 = vmatpush1.msra.mxu0 0.0
    %1006 = vmatprep.subr.mxu0 0.0
    %1007 = vmatpush1.msra.mxu0 0.0
    %1008 = vmatprep.subr.mxu0 0.0
    %1009 = vmatpush1.msra.mxu0 0.0
    %1010 = vmatprep.subr.mxu0 0.0
    %1011 = vmatpush1.msra.mxu0 0.0
    %1012 = vmatprep.subr.mxu0 0.0
    %1013 = vmatpush1.msra.mxu0 0.0
    %1014 = vmatprep.subr.mxu0 0.0
    %1015 = vmatpush1.msra.mxu0 0.0
    %1016 = vmatprep.subr.mxu0 0.0
    %1017 = vmatpush1.msra.mxu0 0.0
    %1018 = vmatprep.subr.mxu0 0.0
    %1019 = vmatpush1.msra.mxu0 0.0
    %1020 = vmatprep.subr.mxu0 0.0
    %1021 = vmatpush1.msra.mxu0 0.0
    %1022 = vmatprep.subr.mxu0 0.0
    %1023 = vmatpush1.msra.mxu0 0.0
    %1024 = vmatprep.subr.mxu0 0.0
    %1025 = vmatpush1.msra.mxu0 0.0
    %1026 = vmatprep.subr.mxu0 0.0
    %1027 = vmatpush1.msra.mxu0 0.0
    %1028 = vmatprep.subr.mxu0 0.0
    %1029 = vmatpush1.msra.mxu0 0.0
    %1030 = vmatprep.subr.mxu0 0.0
    %1031 = vmatpush1.msra.mxu0 0.0
    %1032 = vmatprep.subr.mxu0 0.0
    %1033 = vmatpush1.msra.mxu0 0.0
    %1034 = vmatprep.mubr.f32.mxu0 0.0
    %1035 = vmatmul.mubr.f32.gmra.mrb[0].mxu0 %v968
    %v1036 = vpop.f32.mrb[0].mxu0
    %v1037 = vadd.f32 0.0, %v1036
    %v1038 = vpop.f32.mrb[0].mxu0
    %1039 = vdwg.mxu0
    %v1040 = vld [vmem:[#allocation3] sm:$0xff]
    %v1041 = vld [vmem:[#allocation3 + $0x8] sm:$0xff]
    %v1042 = vld [vmem:[#allocation3 + $0x10] sm:$0xff]
    %v1043 = vld [vmem:[#allocation3 + $0x18] sm:$0xff]
    %s1044 = scalar_lea.vmem %s11, 2
    %v1045 = vld [vmem:[%s1044] sm:$0x3]
    %v1047 = vsel %vm75, %v1045, 0
    %1049 = vmatprep.subr.mxu0 0.0
    %1050 = vmatpush1.msra.mxu0 %v849
    %1051 = vmatprep.subr.mxu0 0.0
    %1052 = vmatpush1.msra.mxu0 %v850
    %1053 = vmatprep.subr.mxu0 0.0
    %1054 = vmatpush1.msra.mxu0 %v851
    %1055 = vmatprep.subr.mxu0 0.0
    %1056 = vmatpush1.msra.mxu0 %v852
    %1057 = vmatprep.subr.mxu0 0.0
    %1058 = vmatpush1.msra.mxu0 0.0
    %1059 = vmatprep.subr.mxu0 0.0
    %1060 = vmatpush1.msra.mxu0 0.0
    %1061 = vmatprep.subr.mxu0 0.0
    %1062 = vmatpush1.msra.mxu0 0.0
    %1063 = vmatprep.subr.mxu0 0.0
    %1064 = vmatpush1.msra.mxu0 0.0
    %1065 = vmatprep.subr.mxu0 0.0
    %1066 = vmatpush1.msra.mxu0 0.0
    %1067 = vmatprep.subr.mxu0 0.0
    %1068 = vmatpush1.msra.mxu0 0.0
    %1069 = vmatprep.subr.mxu0 0.0
    %1070 = vmatpush1.msra.mxu0 0.0
    %1071 = vmatprep.subr.mxu0 0.0
    %1072 = vmatpush1.msra.mxu0 0.0
    %1073 = vmatprep.subr.mxu0 0.0
    %1074 = vmatpush1.msra.mxu0 0.0
    %1075 = vmatprep.subr.mxu0 0.0
    %1076 = vmatpush1.msra.mxu0 0.0
    %1077 = vmatprep.subr.mxu0 0.0
    %1078 = vmatpush1.msra.mxu0 0.0
    %1079 = vmatprep.subr.mxu0 0.0
    %1080 = vmatpush1.msra.mxu0 0.0
    %1081 = vmatprep.subr.mxu0 0.0
    %1082 = vmatpush1.msra.mxu0 0.0
    %1083 = vmatprep.subr.mxu0 0.0
    %1084 = vmatpush1.msra.mxu0 0.0
    %1085 = vmatprep.subr.mxu0 0.0
    %1086 = vmatpush1.msra.mxu0 0.0
    %1087 = vmatprep.subr.mxu0 0.0
    %1088 = vmatpush1.msra.mxu0 0.0
    %1089 = vmatprep.subr.mxu0 0.0
    %1090 = vmatpush1.msra.mxu0 0.0
    %1091 = vmatprep.subr.mxu0 0.0
    %1092 = vmatpush1.msra.mxu0 0.0
    %1093 = vmatprep.subr.mxu0 0.0
    %1094 = vmatpush1.msra.mxu0 0.0
    %1095 = vmatprep.subr.mxu0 0.0
    %1096 = vmatpush1.msra.mxu0 0.0
    %1097 = vmatprep.subr.mxu0 0.0
    %1098 = vmatpush1.msra.mxu0 0.0
    %1099 = vmatprep.subr.mxu0 0.0
    %1100 = vmatpush1.msra.mxu0 0.0
    %1101 = vmatprep.subr.mxu0 0.0
    %1102 = vmatpush1.msra.mxu0 0.0
    %1103 = vmatprep.subr.mxu0 0.0
    %1104 = vmatpush1.msra.mxu0 0.0
    %1105 = vmatprep.subr.mxu0 0.0
    %1106 = vmatpush1.msra.mxu0 0.0
    %1107 = vmatprep.subr.mxu0 0.0
    %1108 = vmatpush1.msra.mxu0 0.0
    %1109 = vmatprep.subr.mxu0 0.0
    %1110 = vmatpush1.msra.mxu0 0.0
    %1111 = vmatprep.subr.mxu0 0.0
    %1112 = vmatpush1.msra.mxu0 0.0
    %1113 = vmatprep.mubr.f32.mxu0 0.0
    %1114 = vmatmul.mubr.f32.gmra.mrb[0].mxu0 %v1047
    %v1115 = vpop.f32.mrb[0].mxu0
    %v1116 = vadd.f32 0.0, %v1115
    %v1117 = vpop.f32.mrb[0].mxu0
    %1118 = vdwg.mxu0
    %s1119 = scalar_lea.vmem [#allocation3], 32
    %v1120 = vld [vmem:[%s1119] sm:$0xff]
    %v1121 = vld [vmem:[%s1119 + $0x8] sm:$0xff]
    %v1122 = vld [vmem:[%s1119 + $0x10] sm:$0xff]
    %v1123 = vld [vmem:[%s1119 + $0x18] sm:$0xff]
    %v1125 = vsel %vm75, %v1116, 0
    %1127 = vmatprep.subr.mxu0 0.0
    %1128 = vmatpush1.msra.mxu0 %v1120
    %1129 = vmatprep.subr.mxu0 0.0
    %1130 = vmatpush1.msra.mxu0 %v1121
    %1131 = vmatprep.subr.mxu0 0.0
    %1132 = vmatpush1.msra.mxu0 %v1122
    %1133 = vmatprep.subr.mxu0 0.0
    %1134 = vmatpush1.msra.mxu0 %v1123
    %1135 = vmatprep.subr.mxu0 0.0
    %1136 = vmatpush1.msra.mxu0 0.0
    %1137 = vmatprep.subr.mxu0 0.0
    %1138 = vmatpush1.msra.mxu0 0.0
    %1139 = vmatprep.subr.mxu0 0.0
    %1140 = vmatpush1.msra.mxu0 0.0
    %1141 = vmatprep.subr.mxu0 0.0
    %1142 = vmatpush1.msra.mxu0 0.0
    %1143 = vmatprep.subr.mxu0 0.0
    %1144 = vmatpush1.msra.mxu0 0.0
    %1145 = vmatprep.subr.mxu0 0.0
    %1146 = vmatpush1.msra.mxu0 0.0
    %1147 = vmatprep.subr.mxu0 0.0
    %1148 = vmatpush1.msra.mxu0 0.0
    %1149 = vmatprep.subr.mxu0 0.0
    %1150 = vmatpush1.msra.mxu0 0.0
    %1151 = vmatprep.subr.mxu0 0.0
    %1152 = vmatpush1.msra.mxu0 0.0
    %1153 = vmatprep.subr.mxu0 0.0
    %1154 = vmatpush1.msra.mxu0 0.0
    %1155 = vmatprep.subr.mxu0 0.0
    %1156 = vmatpush1.msra.mxu0 0.0
    %1157 = vmatprep.subr.mxu0 0.0
    %1158 = vmatpush1.msra.mxu0 0.0
    %1159 = vmatprep.subr.mxu0 0.0
    %1160 = vmatpush1.msra.mxu0 0.0
    %1161 = vmatprep.subr.mxu0 0.0
    %1162 = vmatpush1.msra.mxu0 0.0
    %1163 = vmatprep.subr.mxu0 0.0
    %1164 = vmatpush1.msra.mxu0 0.0
    %1165 = vmatprep.subr.mxu0 0.0
    %1166 = vmatpush1.msra.mxu0 0.0
    %1167 = vmatprep.subr.mxu0 0.0
    %1168 = vmatpush1.msra.mxu0 0.0
    %1169 = vmatprep.subr.mxu0 0.0
    %1170 = vmatpush1.msra.mxu0 0.0
    %1171 = vmatprep.subr.mxu0 0.0
    %1172 = vmatpush1.msra.mxu0 0.0
    %1173 = vmatprep.subr.mxu0 0.0
    %1174 = vmatpush1.msra.mxu0 0.0
    %1175 = vmatprep.subr.mxu0 0.0
    %1176 = vmatpush1.msra.mxu0 0.0
    %1177 = vmatprep.subr.mxu0 0.0
    %1178 = vmatpush1.msra.mxu0 0.0
    %1179 = vmatprep.subr.mxu0 0.0
    %1180 = vmatpush1.msra.mxu0 0.0
    %1181 = vmatprep.subr.mxu0 0.0
    %1182 = vmatpush1.msra.mxu0 0.0
    %1183 = vmatprep.subr.mxu0 0.0
    %1184 = vmatpush1.msra.mxu0 0.0
    %1185 = vmatprep.subr.mxu0 0.0
    %1186 = vmatpush1.msra.mxu0 0.0
    %1187 = vmatprep.subr.mxu0 0.0
    %1188 = vmatpush1.msra.mxu0 0.0
    %1189 = vmatprep.subr.mxu0 0.0
    %1190 = vmatpush1.msra.mxu0 0.0
    %1191 = vmatprep.mubr.f32.mxu0 0.0
    %1192 = vmatmul.mubr.f32.gmra.mrb[0].mxu0 %v1125
    %v1193 = vpop.f32.mrb[0].mxu0
    %v1194 = vadd.f32 0.0, %v1193
    %v1195 = vpop.f32.mrb[0].mxu0
    %1196 = vdwg.mxu0
    %v1198 = vsel %vm75, %v1037, 0
    %1200 = vmatprep.subr.mxu0 0.0
    %1201 = vmatpush1.msra.mxu0 %v1040
    %1202 = vmatprep.subr.mxu0 0.0
    %1203 = vmatpush1.msra.mxu0 %v1041
    %1204 = vmatprep.subr.mxu0 0.0
    %1205 = vmatpush1.msra.mxu0 %v1042
    %1206 = vmatprep.subr.mxu0 0.0
    %1207 = vmatpush1.msra.mxu0 %v1043
    %1208 = vmatprep.subr.mxu0 0.0
    %1209 = vmatpush1.msra.mxu0 0.0
    %1210 = vmatprep.subr.mxu0 0.0
    %1211 = vmatpush1.msra.mxu0 0.0
    %1212 = vmatprep.subr.mxu0 0.0
    %1213 = vmatpush1.msra.mxu0 0.0
    %1214 = vmatprep.subr.mxu0 0.0
    %1215 = vmatpush1.msra.mxu0 0.0
    %1216 = vmatprep.subr.mxu0 0.0
    %1217 = vmatpush1.msra.mxu0 0.0
    %1218 = vmatprep.subr.mxu0 0.0
    %1219 = vmatpush1.msra.mxu0 0.0
    %1220 = vmatprep.subr.mxu0 0.0
    %1221 = vmatpush1.msra.mxu0 0.0
    %1222 = vmatprep.subr.mxu0 0.0
    %1223 = vmatpush1.msra.mxu0 0.0
    %1224 = vmatprep.subr.mxu0 0.0
    %1225 = vmatpush1.msra.mxu0 0.0
    %1226 = vmatprep.subr.mxu0 0.0
    %1227 = vmatpush1.msra.mxu0 0.0
    %1228 = vmatprep.subr.mxu0 0.0
    %1229 = vmatpush1.msra.mxu0 0.0
    %1230 = vmatprep.subr.mxu0 0.0
    %1231 = vmatpush1.msra.mxu0 0.0
    %1232 = vmatprep.subr.mxu0 0.0
    %1233 = vmatpush1.msra.mxu0 0.0
    %1234 = vmatprep.subr.mxu0 0.0
    %1235 = vmatpush1.msra.mxu0 0.0
    %1236 = vmatprep.subr.mxu0 0.0
    %1237 = vmatpush1.msra.mxu0 0.0
    %1238 = vmatprep.subr.mxu0 0.0
    %1239 = vmatpush1.msra.mxu0 0.0
    %1240 = vmatprep.subr.mxu0 0.0
    %1241 = vmatpush1.msra.mxu0 0.0
    %1242 = vmatprep.subr.mxu0 0.0
    %1243 = vmatpush1.msra.mxu0 0.0
    %1244 = vmatprep.subr.mxu0 0.0
    %1245 = vmatpush1.msra.mxu0 0.0
    %1246 = vmatprep.subr.mxu0 0.0
    %1247 = vmatpush1.msra.mxu0 0.0
    %1248 = vmatprep.subr.mxu0 0.0
    %1249 = vmatpush1.msra.mxu0 0.0
    %1250 = vmatprep.subr.mxu0 0.0
    %1251 = vmatpush1.msra.mxu0 0.0
    %1252 = vmatprep.subr.mxu0 0.0
    %1253 = vmatpush1.msra.mxu0 0.0
    %1254 = vmatprep.subr.mxu0 0.0
    %1255 = vmatpush1.msra.mxu0 0.0
    %1256 = vmatprep.subr.mxu0 0.0
    %1257 = vmatpush1.msra.mxu0 0.0
    %1258 = vmatprep.subr.mxu0 0.0
    %1259 = vmatpush1.msra.mxu0 0.0
    %1260 = vmatprep.subr.mxu0 0.0
    %1261 = vmatpush1.msra.mxu0 0.0
    %1262 = vmatprep.subr.mxu0 0.0
    %1263 = vmatpush1.msra.mxu0 0.0
    %1264 = vmatprep.mubr.f32.mxu0 0.0
    %1265 = vmatmul.mubr.f32.gmra.mrb[0].mxu0 %v1198
    %v1266 = vpop.f32.mrb[0].mxu0
    %v1267 = vadd.f32 %v1194, %v1266
    %v1268 = vpop.f32.mrb[0].mxu0
    %1269 = vdwg.mxu0
    %s1270 = scalar_lea.vmem %s11, 4
    %v1271 = vld [vmem:[%s1270] sm:$0x3]
    %v1273 = vsel %vm75, %v1271, 0
    %1275 = vmatprep.subr.mxu0 0.0
    %1276 = vmatpush1.msra.mxu0 %v849
    %1277 = vmatprep.subr.mxu0 0.0
    %1278 = vmatpush1.msra.mxu0 %v850
    %1279 = vmatprep.subr.mxu0 0.0
    %1280 = vmatpush1.msra.mxu0 %v851
    %1281 = vmatprep.subr.mxu0 0.0
    %1282 = vmatpush1.msra.mxu0 %v852
    %1283 = vmatprep.subr.mxu0 0.0
    %1284 = vmatpush1.msra.mxu0 0.0
    %1285 = vmatprep.subr.mxu0 0.0
    %1286 = vmatpush1.msra.mxu0 0.0
    %1287 = vmatprep.subr.mxu0 0.0
    %1288 = vmatpush1.msra.mxu0 0.0
    %1289 = vmatprep.subr.mxu0 0.0
    %1290 = vmatpush1.msra.mxu0 0.0
    %1291 = vmatprep.subr.mxu0 0.0
    %1292 = vmatpush1.msra.mxu0 0.0
    %1293 = vmatprep.subr.mxu0 0.0
    %1294 = vmatpush1.msra.mxu0 0.0
    %1295 = vmatprep.subr.mxu0 0.0
    %1296 = vmatpush1.msra.mxu0 0.0
    %1297 = vmatprep.subr.mxu0 0.0
    %1298 = vmatpush1.msra.mxu0 0.0
    %1299 = vmatprep.subr.mxu0 0.0
    %1300 = vmatpush1.msra.mxu0 0.0
    %1301 = vmatprep.subr.mxu0 0.0
    %1302 = vmatpush1.msra.mxu0 0.0
    %1303 = vmatprep.subr.mxu0 0.0
    %1304 = vmatpush1.msra.mxu0 0.0
    %1305 = vmatprep.subr.mxu0 0.0
    %1306 = vmatpush1.msra.mxu0 0.0
    %1307 = vmatprep.subr.mxu0 0.0
    %1308 = vmatpush1.msra.mxu0 0.0
    %1309 = vmatprep.subr.mxu0 0.0
    %1310 = vmatpush1.msra.mxu0 0.0
    %1311 = vmatprep.subr.mxu0 0.0
    %1312 = vmatpush1.msra.mxu0 0.0
    %1313 = vmatprep.subr.mxu0 0.0
    %1314 = vmatpush1.msra.mxu0 0.0
    %1315 = vmatprep.subr.mxu0 0.0
    %1316 = vmatpush1.msra.mxu0 0.0
    %1317 = vmatprep.subr.mxu0 0.0
    %1318 = vmatpush1.msra.mxu0 0.0
    %1319 = vmatprep.subr.mxu0 0.0
    %1320 = vmatpush1.msra.mxu0 0.0
    %1321 = vmatprep.subr.mxu0 0.0
    %1322 = vmatpush1.msra.mxu0 0.0
    %1323 = vmatprep.subr.mxu0 0.0
    %1324 = vmatpush1.msra.mxu0 0.0
    %1325 = vmatprep.subr.mxu0 0.0
    %1326 = vmatpush1.msra.mxu0 0.0
    %1327 = vmatprep.subr.mxu0 0.0
    %1328 = vmatpush1.msra.mxu0 0.0
    %1329 = vmatprep.subr.mxu0 0.0
    %1330 = vmatpush1.msra.mxu0 0.0
    %1331 = vmatprep.subr.mxu0 0.0
    %1332 = vmatpush1.msra.mxu0 0.0
    %1333 = vmatprep.subr.mxu0 0.0
    %1334 = vmatpush1.msra.mxu0 0.0
    %1335 = vmatprep.subr.mxu0 0.0
    %1336 = vmatpush1.msra.mxu0 0.0
    %1337 = vmatprep.subr.mxu0 0.0
    %1338 = vmatpush1.msra.mxu0 0.0
    %1339 = vmatprep.mubr.f32.mxu0 0.0
    %1340 = vmatmul.mubr.f32.gmra.mrb[0].mxu0 %v1273
    %v1341 = vpop.f32.mrb[0].mxu0
    %v1342 = vadd.f32 0.0, %v1341
    %v1343 = vpop.f32.mrb[0].mxu0
    %1344 = vdwg.mxu0
    %s1345 = scalar_lea.vmem [#allocation3], 64
    %v1346 = vld [vmem:[%s1345] sm:$0xff]
    %v1347 = vld [vmem:[%s1345 + $0x8] sm:$0xff]
    %v1348 = vld [vmem:[%s1345 + $0x10] sm:$0xff]
    %v1349 = vld [vmem:[%s1345 + $0x18] sm:$0xff]
    %v1351 = vsel %vm75, %v1342, 0
    %1353 = vmatprep.subr.mxu0 0.0
    %1354 = vmatpush1.msra.mxu0 %v1346
    %1355 = vmatprep.subr.mxu0 0.0
    %1356 = vmatpush1.msra.mxu0 %v1347
    %1357 = vmatprep.subr.mxu0 0.0
    %1358 = vmatpush1.msra.mxu0 %v1348
    %1359 = vmatprep.subr.mxu0 0.0
    %1360 = vmatpush1.msra.mxu0 %v1349
    %1361 = vmatprep.subr.mxu0 0.0
    %1362 = vmatpush1.msra.mxu0 0.0
    %1363 = vmatprep.subr.mxu0 0.0
    %1364 = vmatpush1.msra.mxu0 0.0
    %1365 = vmatprep.subr.mxu0 0.0
    %1366 = vmatpush1.msra.mxu0 0.0
    %1367 = vmatprep.subr.mxu0 0.0
    %1368 = vmatpush1.msra.mxu0 0.0
    %1369 = vmatprep.subr.mxu0 0.0
    %1370 = vmatpush1.msra.mxu0 0.0
    %1371 = vmatprep.subr.mxu0 0.0
    %1372 = vmatpush1.msra.mxu0 0.0
    %1373 = vmatprep.subr.mxu0 0.0
    %1374 = vmatpush1.msra.mxu0 0.0
    %1375 = vmatprep.subr.mxu0 0.0
    %1376 = vmatpush1.msra.mxu0 0.0
    %1377 = vmatprep.subr.mxu0 0.0
    %1378 = vmatpush1.msra.mxu0 0.0
    %1379 = vmatprep.subr.mxu0 0.0
    %1380 = vmatpush1.msra.mxu0 0.0
    %1381 = vmatprep.subr.mxu0 0.0
    %1382 = vmatpush1.msra.mxu0 0.0
    %1383 = vmatprep.subr.mxu0 0.0
    %1384 = vmatpush1.msra.mxu0 0.0
    %1385 = vmatprep.subr.mxu0 0.0
    %1386 = vmatpush1.msra.mxu0 0.0
    %1387 = vmatprep.subr.mxu0 0.0
    %1388 = vmatpush1.msra.mxu0 0.0
    %1389 = vmatprep.subr.mxu0 0.0
    %1390 = vmatpush1.msra.mxu0 0.0
    %1391 = vmatprep.subr.mxu0 0.0
    %1392 = vmatpush1.msra.mxu0 0.0
    %1393 = vmatprep.subr.mxu0 0.0
    %1394 = vmatpush1.msra.mxu0 0.0
    %1395 = vmatprep.subr.mxu0 0.0
    %1396 = vmatpush1.msra.mxu0 0.0
    %1397 = vmatprep.subr.mxu0 0.0
    %1398 = vmatpush1.msra.mxu0 0.0
    %1399 = vmatprep.subr.mxu0 0.0
    %1400 = vmatpush1.msra.mxu0 0.0
    %1401 = vmatprep.subr.mxu0 0.0
    %1402 = vmatpush1.msra.mxu0 0.0
    %1403 = vmatprep.subr.mxu0 0.0
    %1404 = vmatpush1.msra.mxu0 0.0
    %1405 = vmatprep.subr.mxu0 0.0
    %1406 = vmatpush1.msra.mxu0 0.0
    %1407 = vmatprep.subr.mxu0 0.0
    %1408 = vmatpush1.msra.mxu0 0.0
    %1409 = vmatprep.subr.mxu0 0.0
    %1410 = vmatpush1.msra.mxu0 0.0
    %1411 = vmatprep.subr.mxu0 0.0
    %1412 = vmatpush1.msra.mxu0 0.0
    %1413 = vmatprep.subr.mxu0 0.0
    %1414 = vmatpush1.msra.mxu0 0.0
    %1415 = vmatprep.subr.mxu0 0.0
    %1416 = vmatpush1.msra.mxu0 0.0
    %1417 = vmatprep.mubr.f32.mxu0 0.0
    %1418 = vmatmul.mubr.f32.gmra.mrb[0].mxu0 %v1351
    %v1419 = vpop.f32.mrb[0].mxu0
    %v1420 = vadd.f32 0.0, %v1419
    %v1421 = vpop.f32.mrb[0].mxu0
    %1422 = vdwg.mxu0
    %v1423 = vadd.f32 %v1267, %v1420
    %s1424 = scalar_lea.vmem %s11, 6
    %v1425 = vld [vmem:[%s1424] sm:$0x3]
    %v1427 = vsel %vm75, %v1425, 0
    %1429 = vmatprep.subr.mxu0 0.0
    %1430 = vmatpush1.msra.mxu0 %v849
    %1431 = vmatprep.subr.mxu0 0.0
    %1432 = vmatpush1.msra.mxu0 %v850
    %1433 = vmatprep.subr.mxu0 0.0
    %1434 = vmatpush1.msra.mxu0 %v851
    %1435 = vmatprep.subr.mxu0 0.0
    %1436 = vmatpush1.msra.mxu0 %v852
    %1437 = vmatprep.subr.mxu0 0.0
    %1438 = vmatpush1.msra.mxu0 0.0
    %1439 = vmatprep.subr.mxu0 0.0
    %1440 = vmatpush1.msra.mxu0 0.0
    %1441 = vmatprep.subr.mxu0 0.0
    %1442 = vmatpush1.msra.mxu0 0.0
    %1443 = vmatprep.subr.mxu0 0.0
    %1444 = vmatpush1.msra.mxu0 0.0
    %1445 = vmatprep.subr.mxu0 0.0
    %1446 = vmatpush1.msra.mxu0 0.0
    %1447 = vmatprep.subr.mxu0 0.0
    %1448 = vmatpush1.msra.mxu0 0.0
    %1449 = vmatprep.subr.mxu0 0.0
    %1450 = vmatpush1.msra.mxu0 0.0
    %1451 = vmatprep.subr.mxu0 0.0
    %1452 = vmatpush1.msra.mxu0 0.0
    %1453 = vmatprep.subr.mxu0 0.0
    %1454 = vmatpush1.msra.mxu0 0.0
    %1455 = vmatprep.subr.mxu0 0.0
    %1456 = vmatpush1.msra.mxu0 0.0
    %1457 = vmatprep.subr.mxu0 0.0
    %1458 = vmatpush1.msra.mxu0 0.0
    %1459 = vmatprep.subr.mxu0 0.0
    %1460 = vmatpush1.msra.mxu0 0.0
    %1461 = vmatprep.subr.mxu0 0.0
    %1462 = vmatpush1.msra.mxu0 0.0
    %1463 = vmatprep.subr.mxu0 0.0
    %1464 = vmatpush1.msra.mxu0 0.0
    %1465 = vmatprep.subr.mxu0 0.0
    %1466 = vmatpush1.msra.mxu0 0.0
    %1467 = vmatprep.subr.mxu0 0.0
    %1468 = vmatpush1.msra.mxu0 0.0
    %1469 = vmatprep.subr.mxu0 0.0
    %1470 = vmatpush1.msra.mxu0 0.0
    %1471 = vmatprep.subr.mxu0 0.0
    %1472 = vmatpush1.msra.mxu0 0.0
    %1473 = vmatprep.subr.mxu0 0.0
    %1474 = vmatpush1.msra.mxu0 0.0
    %1475 = vmatprep.subr.mxu0 0.0
    %1476 = vmatpush1.msra.mxu0 0.0
    %1477 = vmatprep.subr.mxu0 0.0
    %1478 = vmatpush1.msra.mxu0 0.0
    %1479 = vmatprep.subr.mxu0 0.0
    %1480 = vmatpush1.msra.mxu0 0.0
    %1481 = vmatprep.subr.mxu0 0.0
    %1482 = vmatpush1.msra.mxu0 0.0
    %1483 = vmatprep.subr.mxu0 0.0
    %1484 = vmatpush1.msra.mxu0 0.0
    %1485 = vmatprep.subr.mxu0 0.0
    %1486 = vmatpush1.msra.mxu0 0.0
    %1487 = vmatprep.subr.mxu0 0.0
    %1488 = vmatpush1.msra.mxu0 0.0
    %1489 = vmatprep.subr.mxu0 0.0
    %1490 = vmatpush1.msra.mxu0 0.0
    %1491 = vmatprep.subr.mxu0 0.0
    %1492 = vmatpush1.msra.mxu0 0.0
    %1493 = vmatprep.mubr.f32.mxu0 0.0
    %1494 = vmatmul.mubr.f32.gmra.mrb[0].mxu0 %v1427
    %v1495 = vpop.f32.mrb[0].mxu0
    %v1496 = vadd.f32 0.0, %v1495
    %v1497 = vpop.f32.mrb[0].mxu0
    %1498 = vdwg.mxu0
    %s1499 = scalar_lea.vmem [#allocation3], 96
    %v1500 = vld [vmem:[%s1499] sm:$0xff]
    %v1501 = vld [vmem:[%s1499 + $0x8] sm:$0xff]
    %v1502 = vld [vmem:[%s1499 + $0x10] sm:$0xff]
    %v1503 = vld [vmem:[%s1499 + $0x18] sm:$0xff]
    %v1505 = vsel %vm75, %v1496, 0
    %1507 = vmatprep.subr.mxu0 0.0
    %1508 = vmatpush1.msra.mxu0 %v1500
    %1509 = vmatprep.subr.mxu0 0.0
    %1510 = vmatpush1.msra.mxu0 %v1501
    %1511 = vmatprep.subr.mxu0 0.0
    %1512 = vmatpush1.msra.mxu0 %v1502
    %1513 = vmatprep.subr.mxu0 0.0
    %1514 = vmatpush1.msra.mxu0 %v1503
    %1515 = vmatprep.subr.mxu0 0.0
    %1516 = vmatpush1.msra.mxu0 0.0
    %1517 = vmatprep.subr.mxu0 0.0
    %1518 = vmatpush1.msra.mxu0 0.0
    %1519 = vmatprep.subr.mxu0 0.0
    %1520 = vmatpush1.msra.mxu0 0.0
    %1521 = vmatprep.subr.mxu0 0.0
    %1522 = vmatpush1.msra.mxu0 0.0
    %1523 = vmatprep.subr.mxu0 0.0
    %1524 = vmatpush1.msra.mxu0 0.0
    %1525 = vmatprep.subr.mxu0 0.0
    %1526 = vmatpush1.msra.mxu0 0.0
    %1527 = vmatprep.subr.mxu0 0.0
    %1528 = vmatpush1.msra.mxu0 0.0
    %1529 = vmatprep.subr.mxu0 0.0
    %1530 = vmatpush1.msra.mxu0 0.0
    %1531 = vmatprep.subr.mxu0 0.0
    %1532 = vmatpush1.msra.mxu0 0.0
    %1533 = vmatprep.subr.mxu0 0.0
    %1534 = vmatpush1.msra.mxu0 0.0
    %1535 = vmatprep.subr.mxu0 0.0
    %1536 = vmatpush1.msra.mxu0 0.0
    %1537 = vmatprep.subr.mxu0 0.0
    %1538 = vmatpush1.msra.mxu0 0.0
    %1539 = vmatprep.subr.mxu0 0.0
    %1540 = vmatpush1.msra.mxu0 0.0
    %1541 = vmatprep.subr.mxu0 0.0
    %1542 = vmatpush1.msra.mxu0 0.0
    %1543 = vmatprep.subr.mxu0 0.0
    %1544 = vmatpush1.msra.mxu0 0.0
    %1545 = vmatprep.subr.mxu0 0.0
    %1546 = vmatpush1.msra.mxu0 0.0
    %1547 = vmatprep.subr.mxu0 0.0
    %1548 = vmatpush1.msra.mxu0 0.0
    %1549 = vmatprep.subr.mxu0 0.0
    %1550 = vmatpush1.msra.mxu0 0.0
    %1551 = vmatprep.subr.mxu0 0.0
    %1552 = vmatpush1.msra.mxu0 0.0
    %1553 = vmatprep.subr.mxu0 0.0
    %1554 = vmatpush1.msra.mxu0 0.0
    %1555 = vmatprep.subr.mxu0 0.0
    %1556 = vmatpush1.msra.mxu0 0.0
    %1557 = vmatprep.subr.mxu0 0.0
    %1558 = vmatpush1.msra.mxu0 0.0
    %1559 = vmatprep.subr.mxu0 0.0
    %1560 = vmatpush1.msra.mxu0 0.0
    %1561 = vmatprep.subr.mxu0 0.0
    %1562 = vmatpush1.msra.mxu0 0.0
    %1563 = vmatprep.subr.mxu0 0.0
    %1564 = vmatpush1.msra.mxu0 0.0
    %1565 = vmatprep.subr.mxu0 0.0
    %1566 = vmatpush1.msra.mxu0 0.0
    %1567 = vmatprep.subr.mxu0 0.0
    %1568 = vmatpush1.msra.mxu0 0.0
    %1569 = vmatprep.subr.mxu0 0.0
    %1570 = vmatpush1.msra.mxu0 0.0
    %1571 = vmatprep.mubr.f32.mxu0 0.0
    %1572 = vmatmul.mubr.f32.gmra.mrb[0].mxu0 %v1505
    %v1573 = vpop.f32.mrb[0].mxu0
    %v1574 = vadd.f32 0.0, %v1573
    %v1575 = vpop.f32.mrb[0].mxu0
    %1576 = vdwg.mxu0
    %v1577 = vadd.f32 %v1423, %v1574
    %s1578 = scalar_lea.vmem %s11, 8
    %v1579 = vld [vmem:[%s1578] sm:$0x3]
    %v1581 = vsel %vm75, %v1579, 0
    %1583 = vmatprep.subr.mxu0 0.0
    %1584 = vmatpush1.msra.mxu0 %v849
    %1585 = vmatprep.subr.mxu0 0.0
    %1586 = vmatpush1.msra.mxu0 %v850
    %1587 = vmatprep.subr.mxu0 0.0
    %1588 = vmatpush1.msra.mxu0 %v851
    %1589 = vmatprep.subr.mxu0 0.0
    %1590 = vmatpush1.msra.mxu0 %v852
    %1591 = vmatprep.subr.mxu0 0.0
    %1592 = vmatpush1.msra.mxu0 0.0
    %1593 = vmatprep.subr.mxu0 0.0
    %1594 = vmatpush1.msra.mxu0 0.0
    %1595 = vmatprep.subr.mxu0 0.0
    %1596 = vmatpush1.msra.mxu0 0.0
    %1597 = vmatprep.subr.mxu0 0.0
    %1598 = vmatpush1.msra.mxu0 0.0
    %1599 = vmatprep.subr.mxu0 0.0
    %1600 = vmatpush1.msra.mxu0 0.0
    %1601 = vmatprep.subr.mxu0 0.0
    %1602 = vmatpush1.msra.mxu0 0.0
    %1603 = vmatprep.subr.mxu0 0.0
    %1604 = vmatpush1.msra.mxu0 0.0
    %1605 = vmatprep.subr.mxu0 0.0
    %1606 = vmatpush1.msra.mxu0 0.0
    %1607 = vmatprep.subr.mxu0 0.0
    %1608 = vmatpush1.msra.mxu0 0.0
    %1609 = vmatprep.subr.mxu0 0.0
    %1610 = vmatpush1.msra.mxu0 0.0
    %1611 = vmatprep.subr.mxu0 0.0
    %1612 = vmatpush1.msra.mxu0 0.0
    %1613 = vmatprep.subr.mxu0 0.0
    %1614 = vmatpush1.msra.mxu0 0.0
    %1615 = vmatprep.subr.mxu0 0.0
    %1616 = vmatpush1.msra.mxu0 0.0
    %1617 = vmatprep.subr.mxu0 0.0
    %1618 = vmatpush1.msra.mxu0 0.0
    %1619 = vmatprep.subr.mxu0 0.0
    %1620 = vmatpush1.msra.mxu0 0.0
    %1621 = vmatprep.subr.mxu0 0.0
    %1622 = vmatpush1.msra.mxu0 0.0
    %1623 = vmatprep.subr.mxu0 0.0
    %1624 = vmatpush1.msra.mxu0 0.0
    %1625 = vmatprep.subr.mxu0 0.0
    %1626 = vmatpush1.msra.mxu0 0.0
    %1627 = vmatprep.subr.mxu0 0.0
    %1628 = vmatpush1.msra.mxu0 0.0
    %1629 = vmatprep.subr.mxu0 0.0
    %1630 = vmatpush1.msra.mxu0 0.0
    %1631 = vmatprep.subr.mxu0 0.0
    %1632 = vmatpush1.msra.mxu0 0.0
    %1633 = vmatprep.subr.mxu0 0.0
    %1634 = vmatpush1.msra.mxu0 0.0
    %1635 = vmatprep.subr.mxu0 0.0
    %1636 = vmatpush1.msra.mxu0 0.0
    %1637 = vmatprep.subr.mxu0 0.0
    %1638 = vmatpush1.msra.mxu0 0.0
    %1639 = vmatprep.subr.mxu0 0.0
    %1640 = vmatpush1.msra.mxu0 0.0
    %1641 = vmatprep.subr.mxu0 0.0
    %1642 = vmatpush1.msra.mxu0 0.0
    %1643 = vmatprep.subr.mxu0 0.0
    %1644 = vmatpush1.msra.mxu0 0.0
    %1645 = vmatprep.subr.mxu0 0.0
    %1646 = vmatpush1.msra.mxu0 0.0
    %1647 = vmatprep.mubr.f32.mxu0 0.0
    %1648 = vmatmul.mubr.f32.gmra.mrb[0].mxu0 %v1581
    %v1649 = vpop.f32.mrb[0].mxu0
    %v1650 = vadd.f32 0.0, %v1649
    %v1651 = vpop.f32.mrb[0].mxu0
    %1652 = vdwg.mxu0
    %s1653 = scalar_lea.vmem [#allocation3], 128
    %v1654 = vld [vmem:[%s1653] sm:$0xff]
    %v1655 = vld [vmem:[%s1653 + $0x8] sm:$0xff]
    %v1656 = vld [vmem:[%s1653 + $0x10] sm:$0xff]
    %v1657 = vld [vmem:[%s1653 + $0x18] sm:$0xff]
    %v1659 = vsel %vm75, %v1650, 0
    %1661 = vmatprep.subr.mxu0 0.0
    %1662 = vmatpush1.msra.mxu0 %v1654
    %1663 = vmatprep.subr.mxu0 0.0
    %1664 = vmatpush1.msra.mxu0 %v1655
    %1665 = vmatprep.subr.mxu0 0.0
    %1666 = vmatpush1.msra.mxu0 %v1656
    %1667 = vmatprep.subr.mxu0 0.0
    %1668 = vmatpush1.msra.mxu0 %v1657
    %1669 = vmatprep.subr.mxu0 0.0
    %1670 = vmatpush1.msra.mxu0 0.0
    %1671 = vmatprep.subr.mxu0 0.0
    %1672 = vmatpush1.msra.mxu0 0.0
    %1673 = vmatprep.subr.mxu0 0.0
    %1674 = vmatpush1.msra.mxu0 0.0
    %1675 = vmatprep.subr.mxu0 0.0
    %1676 = vmatpush1.msra.mxu0 0.0
    %1677 = vmatprep.subr.mxu0 0.0
    %1678 = vmatpush1.msra.mxu0 0.0
    %1679 = vmatprep.subr.mxu0 0.0
    %1680 = vmatpush1.msra.mxu0 0.0
    %1681 = vmatprep.subr.mxu0 0.0
    %1682 = vmatpush1.msra.mxu0 0.0
    %1683 = vmatprep.subr.mxu0 0.0
    %1684 = vmatpush1.msra.mxu0 0.0
    %1685 = vmatprep.subr.mxu0 0.0
    %1686 = vmatpush1.msra.mxu0 0.0
    %1687 = vmatprep.subr.mxu0 0.0
    %1688 = vmatpush1.msra.mxu0 0.0
    %1689 = vmatprep.subr.mxu0 0.0
    %1690 = vmatpush1.msra.mxu0 0.0
    %1691 = vmatprep.subr.mxu0 0.0
    %1692 = vmatpush1.msra.mxu0 0.0
    %1693 = vmatprep.subr.mxu0 0.0
    %1694 = vmatpush1.msra.mxu0 0.0
    %1695 = vmatprep.subr.mxu0 0.0
    %1696 = vmatpush1.msra.mxu0 0.0
    %1697 = vmatprep.subr.mxu0 0.0
    %1698 = vmatpush1.msra.mxu0 0.0
    %1699 = vmatprep.subr.mxu0 0.0
    %1700 = vmatpush1.msra.mxu0 0.0
    %1701 = vmatprep.subr.mxu0 0.0
    %1702 = vmatpush1.msra.mxu0 0.0
    %1703 = vmatprep.subr.mxu0 0.0
    %1704 = vmatpush1.msra.mxu0 0.0
    %1705 = vmatprep.subr.mxu0 0.0
    %1706 = vmatpush1.msra.mxu0 0.0
    %1707 = vmatprep.subr.mxu0 0.0
    %1708 = vmatpush1.msra.mxu0 0.0
    %1709 = vmatprep.subr.mxu0 0.0
    %1710 = vmatpush1.msra.mxu0 0.0
    %1711 = vmatprep.subr.mxu0 0.0
    %1712 = vmatpush1.msra.mxu0 0.0
    %1713 = vmatprep.subr.mxu0 0.0
    %1714 = vmatpush1.msra.mxu0 0.0
    %1715 = vmatprep.subr.mxu0 0.0
    %1716 = vmatpush1.msra.mxu0 0.0
    %1717 = vmatprep.subr.mxu0 0.0
    %1718 = vmatpush1.msra.mxu0 0.0
    %1719 = vmatprep.subr.mxu0 0.0
    %1720 = vmatpush1.msra.mxu0 0.0
    %1721 = vmatprep.subr.mxu0 0.0
    %1722 = vmatpush1.msra.mxu0 0.0
    %1723 = vmatprep.subr.mxu0 0.0
    %1724 = vmatpush1.msra.mxu0 0.0
    %1725 = vmatprep.mubr.f32.mxu0 0.0
    %1726 = vmatmul.mubr.f32.gmra.mrb[0].mxu0 %v1659
    %v1727 = vpop.f32.mrb[0].mxu0
    %v1728 = vadd.f32 0.0, %v1727
    %v1729 = vpop.f32.mrb[0].mxu0
    %1730 = vdwg.mxu0
    %v1731 = vadd.f32 %v1577, %v1728
    %s1732 = scalar_lea.vmem %s11, 10
    %v1733 = vld [vmem:[%s1732] sm:$0x3]
    %v1735 = vsel %vm75, %v1733, 0
    %1737 = vmatprep.subr.mxu0 0.0
    %1738 = vmatpush1.msra.mxu0 %v849
    %1739 = vmatprep.subr.mxu0 0.0
    %1740 = vmatpush1.msra.mxu0 %v850
    %1741 = vmatprep.subr.mxu0 0.0
    %1742 = vmatpush1.msra.mxu0 %v851
    %1743 = vmatprep.subr.mxu0 0.0
    %1744 = vmatpush1.msra.mxu0 %v852
    %1745 = vmatprep.subr.mxu0 0.0
    %1746 = vmatpush1.msra.mxu0 0.0
    %1747 = vmatprep.subr.mxu0 0.0
    %1748 = vmatpush1.msra.mxu0 0.0
    %1749 = vmatprep.subr.mxu0 0.0
    %1750 = vmatpush1.msra.mxu0 0.0
    %1751 = vmatprep.subr.mxu0 0.0
    %1752 = vmatpush1.msra.mxu0 0.0
    %1753 = vmatprep.subr.mxu0 0.0
    %1754 = vmatpush1.msra.mxu0 0.0
    %1755 = vmatprep.subr.mxu0 0.0
    %1756 = vmatpush1.msra.mxu0 0.0
    %1757 = vmatprep.subr.mxu0 0.0
    %1758 = vmatpush1.msra.mxu0 0.0
    %1759 = vmatprep.subr.mxu0 0.0
    %1760 = vmatpush1.msra.mxu0 0.0
    %1761 = vmatprep.subr.mxu0 0.0
    %1762 = vmatpush1.msra.mxu0 0.0
    %1763 = vmatprep.subr.mxu0 0.0
    %1764 = vmatpush1.msra.mxu0 0.0
    %1765 = vmatprep.subr.mxu0 0.0
    %1766 = vmatpush1.msra.mxu0 0.0
    %1767 = vmatprep.subr.mxu0 0.0
    %1768 = vmatpush1.msra.mxu0 0.0
    %1769 = vmatprep.subr.mxu0 0.0
    %1770 = vmatpush1.msra.mxu0 0.0
    %1771 = vmatprep.subr.mxu0 0.0
    %1772 = vmatpush1.msra.mxu0 0.0
    %1773 = vmatprep.subr.mxu0 0.0
    %1774 = vmatpush1.msra.mxu0 0.0
    %1775 = vmatprep.subr.mxu0 0.0
    %1776 = vmatpush1.msra.mxu0 0.0
    %1777 = vmatprep.subr.mxu0 0.0
    %1778 = vmatpush1.msra.mxu0 0.0
    %1779 = vmatprep.subr.mxu0 0.0
    %1780 = vmatpush1.msra.mxu0 0.0
    %1781 = vmatprep.subr.mxu0 0.0
    %1782 = vmatpush1.msra.mxu0 0.0
    %1783 = vmatprep.subr.mxu0 0.0
    %1784 = vmatpush1.msra.mxu0 0.0
    %1785 = vmatprep.subr.mxu0 0.0
    %1786 = vmatpush1.msra.mxu0 0.0
    %1787 = vmatprep.subr.mxu0 0.0
    %1788 = vmatpush1.msra.mxu0 0.0
    %1789 = vmatprep.subr.mxu0 0.0
    %1790 = vmatpush1.msra.mxu0 0.0
    %1791 = vmatprep.subr.mxu0 0.0
    %1792 = vmatpush1.msra.mxu0 0.0
    %1793 = vmatprep.subr.mxu0 0.0
    %1794 = vmatpush1.msra.mxu0 0.0
    %1795 = vmatprep.subr.mxu0 0.0
    %1796 = vmatpush1.msra.mxu0 0.0
    %1797 = vmatprep.subr.mxu0 0.0
    %1798 = vmatpush1.msra.mxu0 0.0
    %1799 = vmatprep.subr.mxu0 0.0
    %1800 = vmatpush1.msra.mxu0 0.0
    %1801 = vmatprep.mubr.f32.mxu0 0.0
    %1802 = vmatmul.mubr.f32.gmra.mrb[0].mxu0 %v1735
    %v1803 = vpop.f32.mrb[0].mxu0
    %v1804 = vadd.f32 0.0, %v1803
    %v1805 = vpop.f32.mrb[0].mxu0
    %1806 = vdwg.mxu0
    %s1807 = scalar_lea.vmem [#allocation3], 160
    %v1808 = vld [vmem:[%s1807] sm:$0xff]
    %v1809 = vld [vmem:[%s1807 + $0x8] sm:$0xff]
    %v1810 = vld [vmem:[%s1807 + $0x10] sm:$0xff]
    %v1811 = vld [vmem:[%s1807 + $0x18] sm:$0xff]
    %v1813 = vsel %vm75, %v1804, 0
    %1815 = vmatprep.subr.mxu0 0.0
    %1816 = vmatpush1.msra.mxu0 %v1808
    %1817 = vmatprep.subr.mxu0 0.0
    %1818 = vmatpush1.msra.mxu0 %v1809
    %1819 = vmatprep.subr.mxu0 0.0
    %1820 = vmatpush1.msra.mxu0 %v1810
    %1821 = vmatprep.subr.mxu0 0.0
    %1822 = vmatpush1.msra.mxu0 %v1811
    %1823 = vmatprep.subr.mxu0 0.0
    %1824 = vmatpush1.msra.mxu0 0.0
    %1825 = vmatprep.subr.mxu0 0.0
    %1826 = vmatpush1.msra.mxu0 0.0
    %1827 = vmatprep.subr.mxu0 0.0
    %1828 = vmatpush1.msra.mxu0 0.0
    %1829 = vmatprep.subr.mxu0 0.0
    %1830 = vmatpush1.msra.mxu0 0.0
    %1831 = vmatprep.subr.mxu0 0.0
    %1832 = vmatpush1.msra.mxu0 0.0
    %1833 = vmatprep.subr.mxu0 0.0
    %1834 = vmatpush1.msra.mxu0 0.0
    %1835 = vmatprep.subr.mxu0 0.0
    %1836 = vmatpush1.msra.mxu0 0.0
    %1837 = vmatprep.subr.mxu0 0.0
    %1838 = vmatpush1.msra.mxu0 0.0
    %1839 = vmatprep.subr.mxu0 0.0
    %1840 = vmatpush1.msra.mxu0 0.0
    %1841 = vmatprep.subr.mxu0 0.0
    %1842 = vmatpush1.msra.mxu0 0.0
    %1843 = vmatprep.subr.mxu0 0.0
    %1844 = vmatpush1.msra.mxu0 0.0
    %1845 = vmatprep.subr.mxu0 0.0
    %1846 = vmatpush1.msra.mxu0 0.0
    %1847 = vmatprep.subr.mxu0 0.0
    %1848 = vmatpush1.msra.mxu0 0.0
    %1849 = vmatprep.subr.mxu0 0.0
    %1850 = vmatpush1.msra.mxu0 0.0
    %1851 = vmatprep.subr.mxu0 0.0
    %1852 = vmatpush1.msra.mxu0 0.0
    %1853 = vmatprep.subr.mxu0 0.0
    %1854 = vmatpush1.msra.mxu0 0.0
    %1855 = vmatprep.subr.mxu0 0.0
    %1856 = vmatpush1.msra.mxu0 0.0
    %1857 = vmatprep.subr.mxu0 0.0
    %1858 = vmatpush1.msra.mxu0 0.0
    %1859 = vmatprep.subr.mxu0 0.0
    %1860 = vmatpush1.msra.mxu0 0.0
    %1861 = vmatprep.subr.mxu0 0.0
    %1862 = vmatpush1.msra.mxu0 0.0
    %1863 = vmatprep.subr.mxu0 0.0
    %1864 = vmatpush1.msra.mxu0 0.0
    %1865 = vmatprep.subr.mxu0 0.0
    %1866 = vmatpush1.msra.mxu0 0.0
    %1867 = vmatprep.subr.mxu0 0.0
    %1868 = vmatpush1.msra.mxu0 0.0
    %1869 = vmatprep.subr.mxu0 0.0
    %1870 = vmatpush1.msra.mxu0 0.0
    %1871 = vmatprep.subr.mxu0 0.0
    %1872 = vmatpush1.msra.mxu0 0.0
    %1873 = vmatprep.subr.mxu0 0.0
    %1874 = vmatpush1.msra.mxu0 0.0
    %1875 = vmatprep.subr.mxu0 0.0
    %1876 = vmatpush1.msra.mxu0 0.0
    %1877 = vmatprep.subr.mxu0 0.0
    %1878 = vmatpush1.msra.mxu0 0.0
    %1879 = vmatprep.mubr.f32.mxu0 0.0
    %1880 = vmatmul.mubr.f32.gmra.mrb[0].mxu0 %v1813
    %v1881 = vpop.f32.mrb[0].mxu0
    %v1882 = vadd.f32 0.0, %v1881
    %v1883 = vpop.f32.mrb[0].mxu0
    %1884 = vdwg.mxu0
    %v1885 = vadd.f32 %v1731, %v1882
    %s1886 = scalar_lea.vmem %s11, 12
    %v1887 = vld [vmem:[%s1886] sm:$0x3]
    %v1889 = vsel %vm75, %v1887, 0
    %1891 = vmatprep.subr.mxu0 0.0
    %1892 = vmatpush1.msra.mxu0 %v849
    %1893 = vmatprep.subr.mxu0 0.0
    %1894 = vmatpush1.msra.mxu0 %v850
    %1895 = vmatprep.subr.mxu0 0.0
    %1896 = vmatpush1.msra.mxu0 %v851
    %1897 = vmatprep.subr.mxu0 0.0
    %1898 = vmatpush1.msra.mxu0 %v852
    %1899 = vmatprep.subr.mxu0 0.0
    %1900 = vmatpush1.msra.mxu0 0.0
    %1901 = vmatprep.subr.mxu0 0.0
    %1902 = vmatpush1.msra.mxu0 0.0
    %1903 = vmatprep.subr.mxu0 0.0
    %1904 = vmatpush1.msra.mxu0 0.0
    %1905 = vmatprep.subr.mxu0 0.0
    %1906 = vmatpush1.msra.mxu0 0.0
    %1907 = vmatprep.subr.mxu0 0.0
    %1908 = vmatpush1.msra.mxu0 0.0
    %1909 = vmatprep.subr.mxu0 0.0
    %1910 = vmatpush1.msra.mxu0 0.0
    %1911 = vmatprep.subr.mxu0 0.0
    %1912 = vmatpush1.msra.mxu0 0.0
    %1913 = vmatprep.subr.mxu0 0.0
    %1914 = vmatpush1.msra.mxu0 0.0
    %1915 = vmatprep.subr.mxu0 0.0
    %1916 = vmatpush1.msra.mxu0 0.0
    %1917 = vmatprep.subr.mxu0 0.0
    %1918 = vmatpush1.msra.mxu0 0.0
    %1919 = vmatprep.subr.mxu0 0.0
    %1920 = vmatpush1.msra.mxu0 0.0
    %1921 = vmatprep.subr.mxu0 0.0
    %1922 = vmatpush1.msra.mxu0 0.0
    %1923 = vmatprep.subr.mxu0 0.0
    %1924 = vmatpush1.msra.mxu0 0.0
    %1925 = vmatprep.subr.mxu0 0.0
    %1926 = vmatpush1.msra.mxu0 0.0
    %1927 = vmatprep.subr.mxu0 0.0
    %1928 = vmatpush1.msra.mxu0 0.0
    %1929 = vmatprep.subr.mxu0 0.0
    %1930 = vmatpush1.msra.mxu0 0.0
    %1931 = vmatprep.subr.mxu0 0.0
    %1932 = vmatpush1.msra.mxu0 0.0
    %1933 = vmatprep.subr.mxu0 0.0
    %1934 = vmatpush1.msra.mxu0 0.0
    %1935 = vmatprep.subr.mxu0 0.0
    %1936 = vmatpush1.msra.mxu0 0.0
    %1937 = vmatprep.subr.mxu0 0.0
    %1938 = vmatpush1.msra.mxu0 0.0
    %1939 = vmatprep.subr.mxu0 0.0
    %1940 = vmatpush1.msra.mxu0 0.0
    %1941 = vmatprep.subr.mxu0 0.0
    %1942 = vmatpush1.msra.mxu0 0.0
    %1943 = vmatprep.subr.mxu0 0.0
    %1944 = vmatpush1.msra.mxu0 0.0
    %1945 = vmatprep.subr.mxu0 0.0
    %1946 = vmatpush1.msra.mxu0 0.0
    %1947 = vmatprep.subr.mxu0 0.0
    %1948 = vmatpush1.msra.mxu0 0.0
    %1949 = vmatprep.subr.mxu0 0.0
    %1950 = vmatpush1.msra.mxu0 0.0
    %1951 = vmatprep.subr.mxu0 0.0
    %1952 = vmatpush1.msra.mxu0 0.0
    %1953 = vmatprep.subr.mxu0 0.0
    %1954 = vmatpush1.msra.mxu0 0.0
    %1955 = vmatprep.mubr.f32.mxu0 0.0
    %1956 = vmatmul.mubr.f32.gmra.mrb[0].mxu0 %v1889
    %v1957 = vpop.f32.mrb[0].mxu0
    %v1958 = vadd.f32 0.0, %v1957
    %v1959 = vpop.f32.mrb[0].mxu0
    %1960 = vdwg.mxu0
    %s1961 = scalar_lea.vmem [#allocation3], 192
    %v1962 = vld [vmem:[%s1961] sm:$0xff]
    %v1963 = vld [vmem:[%s1961 + $0x8] sm:$0xff]
    %v1964 = vld [vmem:[%s1961 + $0x10] sm:$0xff]
    %v1965 = vld [vmem:[%s1961 + $0x18] sm:$0xff]
    %v1967 = vsel %vm75, %v1958, 0
    %1969 = vmatprep.subr.mxu0 0.0
    %1970 = vmatpush1.msra.mxu0 %v1962
    %1971 = vmatprep.subr.mxu0 0.0
    %1972 = vmatpush1.msra.mxu0 %v1963
    %1973 = vmatprep.subr.mxu0 0.0
    %1974 = vmatpush1.msra.mxu0 %v1964
    %1975 = vmatprep.subr.mxu0 0.0
    %1976 = vmatpush1.msra.mxu0 %v1965
    %1977 = vmatprep.subr.mxu0 0.0
    %1978 = vmatpush1.msra.mxu0 0.0
    %1979 = vmatprep.subr.mxu0 0.0
    %1980 = vmatpush1.msra.mxu0 0.0
    %1981 = vmatprep.subr.mxu0 0.0
    %1982 = vmatpush1.msra.mxu0 0.0
    %1983 = vmatprep.subr.mxu0 0.0
    %1984 = vmatpush1.msra.mxu0 0.0
    %1985 = vmatprep.subr.mxu0 0.0
    %1986 = vmatpush1.msra.mxu0 0.0
    %1987 = vmatprep.subr.mxu0 0.0
    %1988 = vmatpush1.msra.mxu0 0.0
    %1989 = vmatprep.subr.mxu0 0.0
    %1990 = vmatpush1.msra.mxu0 0.0
    %1991 = vmatprep.subr.mxu0 0.0
    %1992 = vmatpush1.msra.mxu0 0.0
    %1993 = vmatprep.subr.mxu0 0.0
    %1994 = vmatpush1.msra.mxu0 0.0
    %1995 = vmatprep.subr.mxu0 0.0
    %1996 = vmatpush1.msra.mxu0 0.0
    %1997 = vmatprep.subr.mxu0 0.0
    %1998 = vmatpush1.msra.mxu0 0.0
    %1999 = vmatprep.subr.mxu0 0.0
    %2000 = vmatpush1.msra.mxu0 0.0
    %2001 = vmatprep.subr.mxu0 0.0
    %2002 = vmatpush1.msra.mxu0 0.0
    %2003 = vmatprep.subr.mxu0 0.0
    %2004 = vmatpush1.msra.mxu0 0.0
    %2005 = vmatprep.subr.mxu0 0.0
    %2006 = vmatpush1.msra.mxu0 0.0
    %2007 = vmatprep.subr.mxu0 0.0
    %2008 = vmatpush1.msra.mxu0 0.0
    %2009 = vmatprep.subr.mxu0 0.0
    %2010 = vmatpush1.msra.mxu0 0.0
    %2011 = vmatprep.subr.mxu0 0.0
    %2012 = vmatpush1.msra.mxu0 0.0
    %2013 = vmatprep.subr.mxu0 0.0
    %2014 = vmatpush1.msra.mxu0 0.0
    %2015 = vmatprep.subr.mxu0 0.0
    %2016 = vmatpush1.msra.mxu0 0.0
    %2017 = vmatprep.subr.mxu0 0.0
    %2018 = vmatpush1.msra.mxu0 0.0
    %2019 = vmatprep.subr.mxu0 0.0
    %2020 = vmatpush1.msra.mxu0 0.0
    %2021 = vmatprep.subr.mxu0 0.0
    %2022 = vmatpush1.msra.mxu0 0.0
    %2023 = vmatprep.subr.mxu0 0.0
    %2024 = vmatpush1.msra.mxu0 0.0
    %2025 = vmatprep.subr.mxu0 0.0
    %2026 = vmatpush1.msra.mxu0 0.0
    %2027 = vmatprep.subr.mxu0 0.0
    %2028 = vmatpush1.msra.mxu0 0.0
    %2029 = vmatprep.subr.mxu0 0.0
    %2030 = vmatpush1.msra.mxu0 0.0
    %2031 = vmatprep.subr.mxu0 0.0
    %2032 = vmatpush1.msra.mxu0 0.0
    %2033 = vmatprep.mubr.f32.mxu0 0.0
    %2034 = vmatmul.mubr.f32.gmra.mrb[0].mxu0 %v1967
    %v2035 = vpop.f32.mrb[0].mxu0
    %v2036 = vadd.f32 0.0, %v2035
    %v2037 = vpop.f32.mrb[0].mxu0
    %2038 = vdwg.mxu0
    %v2039 = vadd.f32 %v1885, %v2036
    %s2040 = scalar_lea.vmem %s11, 14
    %v2041 = vld [vmem:[%s2040] sm:$0x3]
    %v2043 = vsel %vm75, %v2041, 0
    %2045 = vmatprep.subr.mxu0 0.0
    %2046 = vmatpush1.msra.mxu0 %v849
    %2047 = vmatprep.subr.mxu0 0.0
    %2048 = vmatpush1.msra.mxu0 %v850
    %2049 = vmatprep.subr.mxu0 0.0
    %2050 = vmatpush1.msra.mxu0 %v851
    %2051 = vmatprep.subr.mxu0 0.0
    %2052 = vmatpush1.msra.mxu0 %v852
    %2053 = vmatprep.subr.mxu0 0.0
    %2054 = vmatpush1.msra.mxu0 0.0
    %2055 = vmatprep.subr.mxu0 0.0
    %2056 = vmatpush1.msra.mxu0 0.0
    %2057 = vmatprep.subr.mxu0 0.0
    %2058 = vmatpush1.msra.mxu0 0.0
    %2059 = vmatprep.subr.mxu0 0.0
    %2060 = vmatpush1.msra.mxu0 0.0
    %2061 = vmatprep.subr.mxu0 0.0
    %2062 = vmatpush1.msra.mxu0 0.0
    %2063 = vmatprep.subr.mxu0 0.0
    %2064 = vmatpush1.msra.mxu0 0.0
    %2065 = vmatprep.subr.mxu0 0.0
    %2066 = vmatpush1.msra.mxu0 0.0
    %2067 = vmatprep.subr.mxu0 0.0
    %2068 = vmatpush1.msra.mxu0 0.0
    %2069 = vmatprep.subr.mxu0 0.0
    %2070 = vmatpush1.msra.mxu0 0.0
    %2071 = vmatprep.subr.mxu0 0.0
    %2072 = vmatpush1.msra.mxu0 0.0
    %2073 = vmatprep.subr.mxu0 0.0
    %2074 = vmatpush1.msra.mxu0 0.0
    %2075 = vmatprep.subr.mxu0 0.0
    %2076 = vmatpush1.msra.mxu0 0.0
    %2077 = vmatprep.subr.mxu0 0.0
    %2078 = vmatpush1.msra.mxu0 0.0
    %2079 = vmatprep.subr.mxu0 0.0
    %2080 = vmatpush1.msra.mxu0 0.0
    %2081 = vmatprep.subr.mxu0 0.0
    %2082 = vmatpush1.msra.mxu0 0.0
    %2083 = vmatprep.subr.mxu0 0.0
    %2084 = vmatpush1.msra.mxu0 0.0
    %2085 = vmatprep.subr.mxu0 0.0
    %2086 = vmatpush1.msra.mxu0 0.0
    %2087 = vmatprep.subr.mxu0 0.0
    %2088 = vmatpush1.msra.mxu0 0.0
    %2089 = vmatprep.subr.mxu0 0.0
    %2090 = vmatpush1.msra.mxu0 0.0
    %2091 = vmatprep.subr.mxu0 0.0
    %2092 = vmatpush1.msra.mxu0 0.0
    %2093 = vmatprep.subr.mxu0 0.0
    %2094 = vmatpush1.msra.mxu0 0.0
    %2095 = vmatprep.subr.mxu0 0.0
    %2096 = vmatpush1.msra.mxu0 0.0
    %2097 = vmatprep.subr.mxu0 0.0
    %2098 = vmatpush1.msra.mxu0 0.0
    %2099 = vmatprep.subr.mxu0 0.0
    %2100 = vmatpush1.msra.mxu0 0.0
    %2101 = vmatprep.subr.mxu0 0.0
    %2102 = vmatpush1.msra.mxu0 0.0
    %2103 = vmatprep.subr.mxu0 0.0
    %2104 = vmatpush1.msra.mxu0 0.0
    %2105 = vmatprep.subr.mxu0 0.0
    %2106 = vmatpush1.msra.mxu0 0.0
    %2107 = vmatprep.subr.mxu0 0.0
    %2108 = vmatpush1.msra.mxu0 0.0
    %2109 = vmatprep.mubr.f32.mxu0 0.0
    %2110 = vmatmul.mubr.f32.gmra.mrb[0].mxu0 %v2043
    %v2111 = vpop.f32.mrb[0].mxu0
    %v2112 = vadd.f32 0.0, %v2111
    %v2113 = vpop.f32.mrb[0].mxu0
    %2114 = vdwg.mxu0
    %s2115 = scalar_lea.vmem [#allocation3], 224
    %v2116 = vld [vmem:[%s2115] sm:$0xff]
    %v2117 = vld [vmem:[%s2115 + $0x8] sm:$0xff]
    %v2118 = vld [vmem:[%s2115 + $0x10] sm:$0xff]
    %v2119 = vld [vmem:[%s2115 + $0x18] sm:$0xff]
    %v2121 = vsel %vm75, %v2112, 0
    %2123 = vmatprep.subr.mxu0 0.0
    %2124 = vmatpush1.msra.mxu0 %v2116
    %2125 = vmatprep.subr.mxu0 0.0
    %2126 = vmatpush1.msra.mxu0 %v2117
    %2127 = vmatprep.subr.mxu0 0.0
    %2128 = vmatpush1.msra.mxu0 %v2118
    %2129 = vmatprep.subr.mxu0 0.0
    %2130 = vmatpush1.msra.mxu0 %v2119
    %2131 = vmatprep.subr.mxu0 0.0
    %2132 = vmatpush1.msra.mxu0 0.0
    %2133 = vmatprep.subr.mxu0 0.0
    %2134 = vmatpush1.msra.mxu0 0.0
    %2135 = vmatprep.subr.mxu0 0.0
    %2136 = vmatpush1.msra.mxu0 0.0
    %2137 = vmatprep.subr.mxu0 0.0
    %2138 = vmatpush1.msra.mxu0 0.0
    %2139 = vmatprep.subr.mxu0 0.0
    %2140 = vmatpush1.msra.mxu0 0.0
    %2141 = vmatprep.subr.mxu0 0.0
    %2142 = vmatpush1.msra.mxu0 0.0
    %2143 = vmatprep.subr.mxu0 0.0
    %2144 = vmatpush1.msra.mxu0 0.0
    %2145 = vmatprep.subr.mxu0 0.0
    %2146 = vmatpush1.msra.mxu0 0.0
    %2147 = vmatprep.subr.mxu0 0.0
    %2148 = vmatpush1.msra.mxu0 0.0
    %2149 = vmatprep.subr.mxu0 0.0
    %2150 = vmatpush1.msra.mxu0 0.0
    %2151 = vmatprep.subr.mxu0 0.0
    %2152 = vmatpush1.msra.mxu0 0.0
    %2153 = vmatprep.subr.mxu0 0.0
    %2154 = vmatpush1.msra.mxu0 0.0
    %2155 = vmatprep.subr.mxu0 0.0
    %2156 = vmatpush1.msra.mxu0 0.0
    %2157 = vmatprep.subr.mxu0 0.0
    %2158 = vmatpush1.msra.mxu0 0.0
    %2159 = vmatprep.subr.mxu0 0.0
    %2160 = vmatpush1.msra.mxu0 0.0
    %2161 = vmatprep.subr.mxu0 0.0
    %2162 = vmatpush1.msra.mxu0 0.0
    %2163 = vmatprep.subr.mxu0 0.0
    %2164 = vmatpush1.msra.mxu0 0.0
    %2165 = vmatprep.subr.mxu0 0.0
    %2166 = vmatpush1.msra.mxu0 0.0
    %2167 = vmatprep.subr.mxu0 0.0
    %2168 = vmatpush1.msra.mxu0 0.0
    %2169 = vmatprep.subr.mxu0 0.0
    %2170 = vmatpush1.msra.mxu0 0.0
    %2171 = vmatprep.subr.mxu0 0.0
    %2172 = vmatpush1.msra.mxu0 0.0
    %2173 = vmatprep.subr.mxu0 0.0
    %2174 = vmatpush1.msra.mxu0 0.0
    %2175 = vmatprep.subr.mxu0 0.0
    %2176 = vmatpush1.msra.mxu0 0.0
    %2177 = vmatprep.subr.mxu0 0.0
    %2178 = vmatpush1.msra.mxu0 0.0
    %2179 = vmatprep.subr.mxu0 0.0
    %2180 = vmatpush1.msra.mxu0 0.0
    %2181 = vmatprep.subr.mxu0 0.0
    %2182 = vmatpush1.msra.mxu0 0.0
    %2183 = vmatprep.subr.mxu0 0.0
    %2184 = vmatpush1.msra.mxu0 0.0
    %2185 = vmatprep.subr.mxu0 0.0
    %2186 = vmatpush1.msra.mxu0 0.0
    %2187 = vmatprep.mubr.f32.mxu0 0.0
    %2188 = vmatmul.mubr.f32.gmra.mrb[0].mxu0 %v2121
    %v2189 = vpop.f32.mrb[0].mxu0
    %v2190 = vadd.f32 0.0, %v2189
    %v2191 = vpop.f32.mrb[0].mxu0
    %2192 = vdwg.mxu0
    %v2193 = vadd.f32 %v2039, %v2190
    %s2194 = scalar_lea.vmem %s11, 16
    %v2195 = vld [vmem:[%s2194] sm:$0x3]
    %v2197 = vsel %vm75, %v2195, 0
    %2199 = vmatprep.subr.mxu0 0.0
    %2200 = vmatpush1.msra.mxu0 %v849
    %2201 = vmatprep.subr.mxu0 0.0
    %2202 = vmatpush1.msra.mxu0 %v850
    %2203 = vmatprep.subr.mxu0 0.0
    %2204 = vmatpush1.msra.mxu0 %v851
    %2205 = vmatprep.subr.mxu0 0.0
    %2206 = vmatpush1.msra.mxu0 %v852
    %2207 = vmatprep.subr.mxu0 0.0
    %2208 = vmatpush1.msra.mxu0 0.0
    %2209 = vmatprep.subr.mxu0 0.0
    %2210 = vmatpush1.msra.mxu0 0.0
    %2211 = vmatprep.subr.mxu0 0.0
    %2212 = vmatpush1.msra.mxu0 0.0
    %2213 = vmatprep.subr.mxu0 0.0
    %2214 = vmatpush1.msra.mxu0 0.0
    %2215 = vmatprep.subr.mxu0 0.0
    %2216 = vmatpush1.msra.mxu0 0.0
    %2217 = vmatprep.subr.mxu0 0.0
    %2218 = vmatpush1.msra.mxu0 0.0
    %2219 = vmatprep.subr.mxu0 0.0
    %2220 = vmatpush1.msra.mxu0 0.0
    %2221 = vmatprep.subr.mxu0 0.0
    %2222 = vmatpush1.msra.mxu0 0.0
    %2223 = vmatprep.subr.mxu0 0.0
    %2224 = vmatpush1.msra.mxu0 0.0
    %2225 = vmatprep.subr.mxu0 0.0
    %2226 = vmatpush1.msra.mxu0 0.0
    %2227 = vmatprep.subr.mxu0 0.0
    %2228 = vmatpush1.msra.mxu0 0.0
    %2229 = vmatprep.subr.mxu0 0.0
    %2230 = vmatpush1.msra.mxu0 0.0
    %2231 = vmatprep.subr.mxu0 0.0
    %2232 = vmatpush1.msra.mxu0 0.0
    %2233 = vmatprep.subr.mxu0 0.0
    %2234 = vmatpush1.msra.mxu0 0.0
    %2235 = vmatprep.subr.mxu0 0.0
    %2236 = vmatpush1.msra.mxu0 0.0
    %2237 = vmatprep.subr.mxu0 0.0
    %2238 = vmatpush1.msra.mxu0 0.0
    %2239 = vmatprep.subr.mxu0 0.0
    %2240 = vmatpush1.msra.mxu0 0.0
    %2241 = vmatprep.subr.mxu0 0.0
    %2242 = vmatpush1.msra.mxu0 0.0
    %2243 = vmatprep.subr.mxu0 0.0
    %2244 = vmatpush1.msra.mxu0 0.0
    %2245 = vmatprep.subr.mxu0 0.0
    %2246 = vmatpush1.msra.mxu0 0.0
    %2247 = vmatprep.subr.mxu0 0.0
    %2248 = vmatpush1.msra.mxu0 0.0
    %2249 = vmatprep.subr.mxu0 0.0
    %2250 = vmatpush1.msra.mxu0 0.0
    %2251 = vmatprep.subr.mxu0 0.0
    %2252 = vmatpush1.msra.mxu0 0.0
    %2253 = vmatprep.subr.mxu0 0.0
    %2254 = vmatpush1.msra.mxu0 0.0
    %2255 = vmatprep.subr.mxu0 0.0
    %2256 = vmatpush1.msra.mxu0 0.0
    %2257 = vmatprep.subr.mxu0 0.0
    %2258 = vmatpush1.msra.mxu0 0.0
    %2259 = vmatprep.subr.mxu0 0.0
    %2260 = vmatpush1.msra.mxu0 0.0
    %2261 = vmatprep.subr.mxu0 0.0
    %2262 = vmatpush1.msra.mxu0 0.0
    %2263 = vmatprep.mubr.f32.mxu0 0.0
    %2264 = vmatmul.mubr.f32.gmra.mrb[0].mxu0 %v2197
    %v2265 = vpop.f32.mrb[0].mxu0
    %v2266 = vadd.f32 0.0, %v2265
    %v2267 = vpop.f32.mrb[0].mxu0
    %2268 = vdwg.mxu0
    %s2269 = scalar_lea.vmem [#allocation3], 256
    %v2270 = vld [vmem:[%s2269] sm:$0xff]
    %v2271 = vld [vmem:[%s2269 + $0x8] sm:$0xff]
    %v2272 = vld [vmem:[%s2269 + $0x10] sm:$0xff]
    %v2273 = vld [vmem:[%s2269 + $0x18] sm:$0xff]
    %v2275 = vsel %vm75, %v2266, 0
    %2277 = vmatprep.subr.mxu0 0.0
    %2278 = vmatpush1.msra.mxu0 %v2270
    %2279 = vmatprep.subr.mxu0 0.0
    %2280 = vmatpush1.msra.mxu0 %v2271
    %2281 = vmatprep.subr.mxu0 0.0
    %2282 = vmatpush1.msra.mxu0 %v2272
    %2283 = vmatprep.subr.mxu0 0.0
    %2284 = vmatpush1.msra.mxu0 %v2273
    %2285 = vmatprep.subr.mxu0 0.0
    %2286 = vmatpush1.msra.mxu0 0.0
    %2287 = vmatprep.subr.mxu0 0.0
    %2288 = vmatpush1.msra.mxu0 0.0
    %2289 = vmatprep.subr.mxu0 0.0
    %2290 = vmatpush1.msra.mxu0 0.0
    %2291 = vmatprep.subr.mxu0 0.0
    %2292 = vmatpush1.msra.mxu0 0.0
    %2293 = vmatprep.subr.mxu0 0.0
    %2294 = vmatpush1.msra.mxu0 0.0
    %2295 = vmatprep.subr.mxu0 0.0
    %2296 = vmatpush1.msra.mxu0 0.0
    %2297 = vmatprep.subr.mxu0 0.0
    %2298 = vmatpush1.msra.mxu0 0.0
    %2299 = vmatprep.subr.mxu0 0.0
    %2300 = vmatpush1.msra.mxu0 0.0
    %2301 = vmatprep.subr.mxu0 0.0
    %2302 = vmatpush1.msra.mxu0 0.0
    %2303 = vmatprep.subr.mxu0 0.0
    %2304 = vmatpush1.msra.mxu0 0.0
    %2305 = vmatprep.subr.mxu0 0.0
    %2306 = vmatpush1.msra.mxu0 0.0
    %2307 = vmatprep.subr.mxu0 0.0
    %2308 = vmatpush1.msra.mxu0 0.0
    %2309 = vmatprep.subr.mxu0 0.0
    %2310 = vmatpush1.msra.mxu0 0.0
    %2311 = vmatprep.subr.mxu0 0.0
    %2312 = vmatpush1.msra.mxu0 0.0
    %2313 = vmatprep.subr.mxu0 0.0
    %2314 = vmatpush1.msra.mxu0 0.0
    %2315 = vmatprep.subr.mxu0 0.0
    %2316 = vmatpush1.msra.mxu0 0.0
    %2317 = vmatprep.subr.mxu0 0.0
    %2318 = vmatpush1.msra.mxu0 0.0
    %2319 = vmatprep.subr.mxu0 0.0
    %2320 = vmatpush1.msra.mxu0 0.0
    %2321 = vmatprep.subr.mxu0 0.0
    %2322 = vmatpush1.msra.mxu0 0.0
    %2323 = vmatprep.subr.mxu0 0.0
    %2324 = vmatpush1.msra.mxu0 0.0
    %2325 = vmatprep.subr.mxu0 0.0
    %2326 = vmatpush1.msra.mxu0 0.0
    %2327 = vmatprep.subr.mxu0 0.0
    %2328 = vmatpush1.msra.mxu0 0.0
    %2329 = vmatprep.subr.mxu0 0.0
    %2330 = vmatpush1.msra.mxu0 0.0
    %2331 = vmatprep.subr.mxu0 0.0
    %2332 = vmatpush1.msra.mxu0 0.0
    %2333 = vmatprep.subr.mxu0 0.0
    %2334 = vmatpush1.msra.mxu0 0.0
    %2335 = vmatprep.subr.mxu0 0.0
    %2336 = vmatpush1.msra.mxu0 0.0
    %2337 = vmatprep.subr.mxu0 0.0
    %2338 = vmatpush1.msra.mxu0 0.0
    %2339 = vmatprep.subr.mxu0 0.0
    %2340 = vmatpush1.msra.mxu0 0.0
    %2341 = vmatprep.mubr.f32.mxu0 0.0
    %2342 = vmatmul.mubr.f32.gmra.mrb[0].mxu0 %v2275
    %v2343 = vpop.f32.mrb[0].mxu0
    %v2344 = vadd.f32 0.0, %v2343
    %v2345 = vpop.f32.mrb[0].mxu0
    %2346 = vdwg.mxu0
    %v2347 = vadd.f32 %v2193, %v2344
    %s2348 = scalar_lea.vmem %s11, 18
    %v2349 = vld [vmem:[%s2348] sm:$0x3]
    %v2351 = vsel %vm75, %v2349, 0
    %2353 = vmatprep.subr.mxu0 0.0
    %2354 = vmatpush1.msra.mxu0 %v849
    %2355 = vmatprep.subr.mxu0 0.0
    %2356 = vmatpush1.msra.mxu0 %v850
    %2357 = vmatprep.subr.mxu0 0.0
    %2358 = vmatpush1.msra.mxu0 %v851
    %2359 = vmatprep.subr.mxu0 0.0
    %2360 = vmatpush1.msra.mxu0 %v852
    %2361 = vmatprep.subr.mxu0 0.0
    %2362 = vmatpush1.msra.mxu0 0.0
    %2363 = vmatprep.subr.mxu0 0.0
    %2364 = vmatpush1.msra.mxu0 0.0
    %2365 = vmatprep.subr.mxu0 0.0
    %2366 = vmatpush1.msra.mxu0 0.0
    %2367 = vmatprep.subr.mxu0 0.0
    %2368 = vmatpush1.msra.mxu0 0.0
    %2369 = vmatprep.subr.mxu0 0.0
    %2370 = vmatpush1.msra.mxu0 0.0
    %2371 = vmatprep.subr.mxu0 0.0
    %2372 = vmatpush1.msra.mxu0 0.0
    %2373 = vmatprep.subr.mxu0 0.0
    %2374 = vmatpush1.msra.mxu0 0.0
    %2375 = vmatprep.subr.mxu0 0.0
    %2376 = vmatpush1.msra.mxu0 0.0
    %2377 = vmatprep.subr.mxu0 0.0
    %2378 = vmatpush1.msra.mxu0 0.0
    %2379 = vmatprep.subr.mxu0 0.0
    %2380 = vmatpush1.msra.mxu0 0.0
    %2381 = vmatprep.subr.mxu0 0.0
    %2382 = vmatpush1.msra.mxu0 0.0
    %2383 = vmatprep.subr.mxu0 0.0
    %2384 = vmatpush1.msra.mxu0 0.0
    %2385 = vmatprep.subr.mxu0 0.0
    %2386 = vmatpush1.msra.mxu0 0.0
    %2387 = vmatprep.subr.mxu0 0.0
    %2388 = vmatpush1.msra.mxu0 0.0
    %2389 = vmatprep.subr.mxu0 0.0
    %2390 = vmatpush1.msra.mxu0 0.0
    %2391 = vmatprep.subr.mxu0 0.0
    %2392 = vmatpush1.msra.mxu0 0.0
    %2393 = vmatprep.subr.mxu0 0.0
    %2394 = vmatpush1.msra.mxu0 0.0
    %2395 = vmatprep.subr.mxu0 0.0
    %2396 = vmatpush1.msra.mxu0 0.0
    %2397 = vmatprep.subr.mxu0 0.0
    %2398 = vmatpush1.msra.mxu0 0.0
    %2399 = vmatprep.subr.mxu0 0.0
    %2400 = vmatpush1.msra.mxu0 0.0
    %2401 = vmatprep.subr.mxu0 0.0
    %2402 = vmatpush1.msra.mxu0 0.0
    %2403 = vmatprep.subr.mxu0 0.0
    %2404 = vmatpush1.msra.mxu0 0.0
    %2405 = vmatprep.subr.mxu0 0.0
    %2406 = vmatpush1.msra.mxu0 0.0
    %2407 = vmatprep.subr.mxu0 0.0
    %2408 = vmatpush1.msra.mxu0 0.0
    %2409 = vmatprep.subr.mxu0 0.0
    %2410 = vmatpush1.msra.mxu0 0.0
    %2411 = vmatprep.subr.mxu0 0.0
    %2412 = vmatpush1.msra.mxu0 0.0
    %2413 = vmatprep.subr.mxu0 0.0
    %2414 = vmatpush1.msra.mxu0 0.0
    %2415 = vmatprep.subr.mxu0 0.0
    %2416 = vmatpush1.msra.mxu0 0.0
    %2417 = vmatprep.mubr.f32.mxu0 0.0
    %2418 = vmatmul.mubr.f32.gmra.mrb[0].mxu0 %v2351
    %v2419 = vpop.f32.mrb[0].mxu0
    %v2420 = vadd.f32 0.0, %v2419
    %v2421 = vpop.f32.mrb[0].mxu0
    %2422 = vdwg.mxu0
    %s2423 = scalar_lea.vmem [#allocation3], 288
    %v2424 = vld [vmem:[%s2423] sm:$0xff]
    %v2425 = vld [vmem:[%s2423 + $0x8] sm:$0xff]
    %v2426 = vld [vmem:[%s2423 + $0x10] sm:$0xff]
    %v2427 = vld [vmem:[%s2423 + $0x18] sm:$0xff]
    %v2429 = vsel %vm75, %v2420, 0
    %2431 = vmatprep.subr.mxu0 0.0
    %2432 = vmatpush1.msra.mxu0 %v2424
    %2433 = vmatprep.subr.mxu0 0.0
    %2434 = vmatpush1.msra.mxu0 %v2425
    %2435 = vmatprep.subr.mxu0 0.0
    %2436 = vmatpush1.msra.mxu0 %v2426
    %2437 = vmatprep.subr.mxu0 0.0
    %2438 = vmatpush1.msra.mxu0 %v2427
    %2439 = vmatprep.subr.mxu0 0.0
    %2440 = vmatpush1.msra.mxu0 0.0
    %2441 = vmatprep.subr.mxu0 0.0
    %2442 = vmatpush1.msra.mxu0 0.0
    %2443 = vmatprep.subr.mxu0 0.0
    %2444 = vmatpush1.msra.mxu0 0.0
    %2445 = vmatprep.subr.mxu0 0.0
    %2446 = vmatpush1.msra.mxu0 0.0
    %2447 = vmatprep.subr.mxu0 0.0
    %2448 = vmatpush1.msra.mxu0 0.0
    %2449 = vmatprep.subr.mxu0 0.0
    %2450 = vmatpush1.msra.mxu0 0.0
    %2451 = vmatprep.subr.mxu0 0.0
    %2452 = vmatpush1.msra.mxu0 0.0
    %2453 = vmatprep.subr.mxu0 0.0
    %2454 = vmatpush1.msra.mxu0 0.0
    %2455 = vmatprep.subr.mxu0 0.0
    %2456 = vmatpush1.msra.mxu0 0.0
    %2457 = vmatprep.subr.mxu0 0.0
    %2458 = vmatpush1.msra.mxu0 0.0
    %2459 = vmatprep.subr.mxu0 0.0
    %2460 = vmatpush1.msra.mxu0 0.0
    %2461 = vmatprep.subr.mxu0 0.0
    %2462 = vmatpush1.msra.mxu0 0.0
    %2463 = vmatprep.subr.mxu0 0.0
    %2464 = vmatpush1.msra.mxu0 0.0
    %2465 = vmatprep.subr.mxu0 0.0
    %2466 = vmatpush1.msra.mxu0 0.0
    %2467 = vmatprep.subr.mxu0 0.0
    %2468 = vmatpush1.msra.mxu0 0.0
    %2469 = vmatprep.subr.mxu0 0.0
    %2470 = vmatpush1.msra.mxu0 0.0
    %2471 = vmatprep.subr.mxu0 0.0
    %2472 = vmatpush1.msra.mxu0 0.0
    %2473 = vmatprep.subr.mxu0 0.0
    %2474 = vmatpush1.msra.mxu0 0.0
    %2475 = vmatprep.subr.mxu0 0.0
    %2476 = vmatpush1.msra.mxu0 0.0
    %2477 = vmatprep.subr.mxu0 0.0
    %2478 = vmatpush1.msra.mxu0 0.0
    %2479 = vmatprep.subr.mxu0 0.0
    %2480 = vmatpush1.msra.mxu0 0.0
    %2481 = vmatprep.subr.mxu0 0.0
    %2482 = vmatpush1.msra.mxu0 0.0
    %2483 = vmatprep.subr.mxu0 0.0
    %2484 = vmatpush1.msra.mxu0 0.0
    %2485 = vmatprep.subr.mxu0 0.0
    %2486 = vmatpush1.msra.mxu0 0.0
    %2487 = vmatprep.subr.mxu0 0.0
    %2488 = vmatpush1.msra.mxu0 0.0
    %2489 = vmatprep.subr.mxu0 0.0
    %2490 = vmatpush1.msra.mxu0 0.0
    %2491 = vmatprep.subr.mxu0 0.0
    %2492 = vmatpush1.msra.mxu0 0.0
    %2493 = vmatprep.subr.mxu0 0.0
    %2494 = vmatpush1.msra.mxu0 0.0
    %2495 = vmatprep.mubr.f32.mxu0 0.0
    %2496 = vmatmul.mubr.f32.gmra.mrb[0].mxu0 %v2429
    %v2497 = vpop.f32.mrb[0].mxu0
    %v2498 = vadd.f32 0.0, %v2497
    %v2499 = vpop.f32.mrb[0].mxu0
    %2500 = vdwg.mxu0
    %v2501 = vadd.f32 %v2347, %v2498
    %s2502 = scalar_lea.vmem %s11, 20
    %v2503 = vld [vmem:[%s2502] sm:$0x3]
    %v2505 = vsel %vm75, %v2503, 0
    %2507 = vmatprep.subr.mxu0 0.0
    %2508 = vmatpush1.msra.mxu0 %v849
    %2509 = vmatprep.subr.mxu0 0.0
    %2510 = vmatpush1.msra.mxu0 %v850
    %2511 = vmatprep.subr.mxu0 0.0
    %2512 = vmatpush1.msra.mxu0 %v851
    %2513 = vmatprep.subr.mxu0 0.0
    %2514 = vmatpush1.msra.mxu0 %v852
    %2515 = vmatprep.subr.mxu0 0.0
    %2516 = vmatpush1.msra.mxu0 0.0
    %2517 = vmatprep.subr.mxu0 0.0
    %2518 = vmatpush1.msra.mxu0 0.0
    %2519 = vmatprep.subr.mxu0 0.0
    %2520 = vmatpush1.msra.mxu0 0.0
    %2521 = vmatprep.subr.mxu0 0.0
    %2522 = vmatpush1.msra.mxu0 0.0
    %2523 = vmatprep.subr.mxu0 0.0
    %2524 = vmatpush1.msra.mxu0 0.0
    %2525 = vmatprep.subr.mxu0 0.0
    %2526 = vmatpush1.msra.mxu0 0.0
    %2527 = vmatprep.subr.mxu0 0.0
    %2528 = vmatpush1.msra.mxu0 0.0
    %2529 = vmatprep.subr.mxu0 0.0
    %2530 = vmatpush1.msra.mxu0 0.0
    %2531 = vmatprep.subr.mxu0 0.0
    %2532 = vmatpush1.msra.mxu0 0.0
    %2533 = vmatprep.subr.mxu0 0.0
    %2534 = vmatpush1.msra.mxu0 0.0
    %2535 = vmatprep.subr.mxu0 0.0
    %2536 = vmatpush1.msra.mxu0 0.0
    %2537 = vmatprep.subr.mxu0 0.0
    %2538 = vmatpush1.msra.mxu0 0.0
    %2539 = vmatprep.subr.mxu0 0.0
    %2540 = vmatpush1.msra.mxu0 0.0
    %2541 = vmatprep.subr.mxu0 0.0
    %2542 = vmatpush1.msra.mxu0 0.0
    %2543 = vmatprep.subr.mxu0 0.0
    %2544 = vmatpush1.msra.mxu0 0.0
    %2545 = vmatprep.subr.mxu0 0.0
    %2546 = vmatpush1.msra.mxu0 0.0
    %2547 = vmatprep.subr.mxu0 0.0
    %2548 = vmatpush1.msra.mxu0 0.0
    %2549 = vmatprep.subr.mxu0 0.0
    %2550 = vmatpush1.msra.mxu0 0.0
    %2551 = vmatprep.subr.mxu0 0.0
    %2552 = vmatpush1.msra.mxu0 0.0
    %2553 = vmatprep.subr.mxu0 0.0
    %2554 = vmatpush1.msra.mxu0 0.0
    %2555 = vmatprep.subr.mxu0 0.0
    %2556 = vmatpush1.msra.mxu0 0.0
    %2557 = vmatprep.subr.mxu0 0.0
    %2558 = vmatpush1.msra.mxu0 0.0
    %2559 = vmatprep.subr.mxu0 0.0
    %2560 = vmatpush1.msra.mxu0 0.0
    %2561 = vmatprep.subr.mxu0 0.0
    %2562 = vmatpush1.msra.mxu0 0.0
    %2563 = vmatprep.subr.mxu0 0.0
    %2564 = vmatpush1.msra.mxu0 0.0
    %2565 = vmatprep.subr.mxu0 0.0
    %2566 = vmatpush1.msra.mxu0 0.0
    %2567 = vmatprep.subr.mxu0 0.0
    %2568 = vmatpush1.msra.mxu0 0.0
    %2569 = vmatprep.subr.mxu0 0.0
    %2570 = vmatpush1.msra.mxu0 0.0
    %2571 = vmatprep.mubr.f32.mxu0 0.0
    %2572 = vmatmul.mubr.f32.gmra.mrb[0].mxu0 %v2505
    %v2573 = vpop.f32.mrb[0].mxu0
    %v2574 = vadd.f32 0.0, %v2573
    %v2575 = vpop.f32.mrb[0].mxu0
    %2576 = vdwg.mxu0
    %s2577 = scalar_lea.vmem [#allocation3], 320
    %v2578 = vld [vmem:[%s2577] sm:$0xff]
    %v2579 = vld [vmem:[%s2577 + $0x8] sm:$0xff]
    %v2580 = vld [vmem:[%s2577 + $0x10] sm:$0xff]
    %v2581 = vld [vmem:[%s2577 + $0x18] sm:$0xff]
    %v2583 = vsel %vm75, %v2574, 0
    %2585 = vmatprep.subr.mxu0 0.0
    %2586 = vmatpush1.msra.mxu0 %v2578
    %2587 = vmatprep.subr.mxu0 0.0
    %2588 = vmatpush1.msra.mxu0 %v2579
    %2589 = vmatprep.subr.mxu0 0.0
    %2590 = vmatpush1.msra.mxu0 %v2580
    %2591 = vmatprep.subr.mxu0 0.0
    %2592 = vmatpush1.msra.mxu0 %v2581
    %2593 = vmatprep.subr.mxu0 0.0
    %2594 = vmatpush1.msra.mxu0 0.0
    %2595 = vmatprep.subr.mxu0 0.0
    %2596 = vmatpush1.msra.mxu0 0.0
    %2597 = vmatprep.subr.mxu0 0.0
    %2598 = vmatpush1.msra.mxu0 0.0
    %2599 = vmatprep.subr.mxu0 0.0
    %2600 = vmatpush1.msra.mxu0 0.0
    %2601 = vmatprep.subr.mxu0 0.0
    %2602 = vmatpush1.msra.mxu0 0.0
    %2603 = vmatprep.subr.mxu0 0.0
    %2604 = vmatpush1.msra.mxu0 0.0
    %2605 = vmatprep.subr.mxu0 0.0
    %2606 = vmatpush1.msra.mxu0 0.0
    %2607 = vmatprep.subr.mxu0 0.0
    %2608 = vmatpush1.msra.mxu0 0.0
    %2609 = vmatprep.subr.mxu0 0.0
    %2610 = vmatpush1.msra.mxu0 0.0
    %2611 = vmatprep.subr.mxu0 0.0
    %2612 = vmatpush1.msra.mxu0 0.0
    %2613 = vmatprep.subr.mxu0 0.0
    %2614 = vmatpush1.msra.mxu0 0.0
    %2615 = vmatprep.subr.mxu0 0.0
    %2616 = vmatpush1.msra.mxu0 0.0
    %2617 = vmatprep.subr.mxu0 0.0
    %2618 = vmatpush1.msra.mxu0 0.0
    %2619 = vmatprep.subr.mxu0 0.0
    %2620 = vmatpush1.msra.mxu0 0.0
    %2621 = vmatprep.subr.mxu0 0.0
    %2622 = vmatpush1.msra.mxu0 0.0
    %2623 = vmatprep.subr.mxu0 0.0
    %2624 = vmatpush1.msra.mxu0 0.0
    %2625 = vmatprep.subr.mxu0 0.0
    %2626 = vmatpush1.msra.mxu0 0.0
    %2627 = vmatprep.subr.mxu0 0.0
    %2628 = vmatpush1.msra.mxu0 0.0
    %2629 = vmatprep.subr.mxu0 0.0
    %2630 = vmatpush1.msra.mxu0 0.0
    %2631 = vmatprep.subr.mxu0 0.0
    %2632 = vmatpush1.msra.mxu0 0.0
    %2633 = vmatprep.subr.mxu0 0.0
    %2634 = vmatpush1.msra.mxu0 0.0
    %2635 = vmatprep.subr.mxu0 0.0
    %2636 = vmatpush1.msra.mxu0 0.0
    %2637 = vmatprep.subr.mxu0 0.0
    %2638 = vmatpush1.msra.mxu0 0.0
    %2639 = vmatprep.subr.mxu0 0.0
    %2640 = vmatpush1.msra.mxu0 0.0
    %2641 = vmatprep.subr.mxu0 0.0
    %2642 = vmatpush1.msra.mxu0 0.0
    %2643 = vmatprep.subr.mxu0 0.0
    %2644 = vmatpush1.msra.mxu0 0.0
    %2645 = vmatprep.subr.mxu0 0.0
    %2646 = vmatpush1.msra.mxu0 0.0
    %2647 = vmatprep.subr.mxu0 0.0
    %2648 = vmatpush1.msra.mxu0 0.0
    %2649 = vmatprep.mubr.f32.mxu0 0.0
    %2650 = vmatmul.mubr.f32.gmra.mrb[0].mxu0 %v2583
    %v2651 = vpop.f32.mrb[0].mxu0
    %v2652 = vadd.f32 0.0, %v2651
    %v2653 = vpop.f32.mrb[0].mxu0
    %2654 = vdwg.mxu0
    %v2655 = vadd.f32 %v2501, %v2652
    %s2656 = scalar_lea.vmem %s11, 22
    %v2657 = vld [vmem:[%s2656] sm:$0x3]
    %v2659 = vsel %vm75, %v2657, 0
    %2661 = vmatprep.subr.mxu0 0.0
    %2662 = vmatpush1.msra.mxu0 %v849
    %2663 = vmatprep.subr.mxu0 0.0
    %2664 = vmatpush1.msra.mxu0 %v850
    %2665 = vmatprep.subr.mxu0 0.0
    %2666 = vmatpush1.msra.mxu0 %v851
    %2667 = vmatprep.subr.mxu0 0.0
    %2668 = vmatpush1.msra.mxu0 %v852
    %2669 = vmatprep.subr.mxu0 0.0
    %2670 = vmatpush1.msra.mxu0 0.0
    %2671 = vmatprep.subr.mxu0 0.0
    %2672 = vmatpush1.msra.mxu0 0.0
    %2673 = vmatprep.subr.mxu0 0.0
    %2674 = vmatpush1.msra.mxu0 0.0
    %2675 = vmatprep.subr.mxu0 0.0
    %2676 = vmatpush1.msra.mxu0 0.0
    %2677 = vmatprep.subr.mxu0 0.0
    %2678 = vmatpush1.msra.mxu0 0.0
    %2679 = vmatprep.subr.mxu0 0.0
    %2680 = vmatpush1.msra.mxu0 0.0
    %2681 = vmatprep.subr.mxu0 0.0
    %2682 = vmatpush1.msra.mxu0 0.0
    %2683 = vmatprep.subr.mxu0 0.0
    %2684 = vmatpush1.msra.mxu0 0.0
    %2685 = vmatprep.subr.mxu0 0.0
    %2686 = vmatpush1.msra.mxu0 0.0
    %2687 = vmatprep.subr.mxu0 0.0
    %2688 = vmatpush1.msra.mxu0 0.0
    %2689 = vmatprep.subr.mxu0 0.0
    %2690 = vmatpush1.msra.mxu0 0.0
    %2691 = vmatprep.subr.mxu0 0.0
    %2692 = vmatpush1.msra.mxu0 0.0
    %2693 = vmatprep.subr.mxu0 0.0
    %2694 = vmatpush1.msra.mxu0 0.0
    %2695 = vmatprep.subr.mxu0 0.0
    %2696 = vmatpush1.msra.mxu0 0.0
    %2697 = vmatprep.subr.mxu0 0.0
    %2698 = vmatpush1.msra.mxu0 0.0
    %2699 = vmatprep.subr.mxu0 0.0
    %2700 = vmatpush1.msra.mxu0 0.0
    %2701 = vmatprep.subr.mxu0 0.0
    %2702 = vmatpush1.msra.mxu0 0.0
    %2703 = vmatprep.subr.mxu0 0.0
    %2704 = vmatpush1.msra.mxu0 0.0
    %2705 = vmatprep.subr.mxu0 0.0
    %2706 = vmatpush1.msra.mxu0 0.0
    %2707 = vmatprep.subr.mxu0 0.0
    %2708 = vmatpush1.msra.mxu0 0.0
    %2709 = vmatprep.subr.mxu0 0.0
    %2710 = vmatpush1.msra.mxu0 0.0
    %2711 = vmatprep.subr.mxu0 0.0
    %2712 = vmatpush1.msra.mxu0 0.0
    %2713 = vmatprep.subr.mxu0 0.0
    %2714 = vmatpush1.msra.mxu0 0.0
    %2715 = vmatprep.subr.mxu0 0.0
    %2716 = vmatpush1.msra.mxu0 0.0
    %2717 = vmatprep.subr.mxu0 0.0
    %2718 = vmatpush1.msra.mxu0 0.0
    %2719 = vmatprep.subr.mxu0 0.0
    %2720 = vmatpush1.msra.mxu0 0.0
    %2721 = vmatprep.subr.mxu0 0.0
    %2722 = vmatpush1.msra.mxu0 0.0
    %2723 = vmatprep.subr.mxu0 0.0
    %2724 = vmatpush1.msra.mxu0 0.0
    %2725 = vmatprep.mubr.f32.mxu0 0.0
    %2726 = vmatmul.mubr.f32.gmra.mrb[0].mxu0 %v2659
    %v2727 = vpop.f32.mrb[0].mxu0
    %v2728 = vadd.f32 0.0, %v2727
    %v2729 = vpop.f32.mrb[0].mxu0
    %2730 = vdwg.mxu0
    %s2731 = scalar_lea.vmem [#allocation3], 352
    %v2732 = vld [vmem:[%s2731] sm:$0xff]
    %v2733 = vld [vmem:[%s2731 + $0x8] sm:$0xff]
    %v2734 = vld [vmem:[%s2731 + $0x10] sm:$0xff]
    %v2735 = vld [vmem:[%s2731 + $0x18] sm:$0xff]
    %v2737 = vsel %vm75, %v2728, 0
    %2739 = vmatprep.subr.mxu0 0.0
    %2740 = vmatpush1.msra.mxu0 %v2732
    %2741 = vmatprep.subr.mxu0 0.0
    %2742 = vmatpush1.msra.mxu0 %v2733
    %2743 = vmatprep.subr.mxu0 0.0
    %2744 = vmatpush1.msra.mxu0 %v2734
    %2745 = vmatprep.subr.mxu0 0.0
    %2746 = vmatpush1.msra.mxu0 %v2735
    %2747 = vmatprep.subr.mxu0 0.0
    %2748 = vmatpush1.msra.mxu0 0.0
    %2749 = vmatprep.subr.mxu0 0.0
    %2750 = vmatpush1.msra.mxu0 0.0
    %2751 = vmatprep.subr.mxu0 0.0
    %2752 = vmatpush1.msra.mxu0 0.0
    %2753 = vmatprep.subr.mxu0 0.0
    %2754 = vmatpush1.msra.mxu0 0.0
    %2755 = vmatprep.subr.mxu0 0.0
    %2756 = vmatpush1.msra.mxu0 0.0
    %2757 = vmatprep.subr.mxu0 0.0
    %2758 = vmatpush1.msra.mxu0 0.0
    %2759 = vmatprep.subr.mxu0 0.0
    %2760 = vmatpush1.msra.mxu0 0.0
    %2761 = vmatprep.subr.mxu0 0.0
    %2762 = vmatpush1.msra.mxu0 0.0
    %2763 = vmatprep.subr.mxu0 0.0
    %2764 = vmatpush1.msra.mxu0 0.0
    %2765 = vmatprep.subr.mxu0 0.0
    %2766 = vmatpush1.msra.mxu0 0.0
    %2767 = vmatprep.subr.mxu0 0.0
    %2768 = vmatpush1.msra.mxu0 0.0
    %2769 = vmatprep.subr.mxu0 0.0
    %2770 = vmatpush1.msra.mxu0 0.0
    %2771 = vmatprep.subr.mxu0 0.0
    %2772 = vmatpush1.msra.mxu0 0.0
    %2773 = vmatprep.subr.mxu0 0.0
    %2774 = vmatpush1.msra.mxu0 0.0
    %2775 = vmatprep.subr.mxu0 0.0
    %2776 = vmatpush1.msra.mxu0 0.0
    %2777 = vmatprep.subr.mxu0 0.0
    %2778 = vmatpush1.msra.mxu0 0.0
    %2779 = vmatprep.subr.mxu0 0.0
    %2780 = vmatpush1.msra.mxu0 0.0
    %2781 = vmatprep.subr.mxu0 0.0
    %2782 = vmatpush1.msra.mxu0 0.0
    %2783 = vmatprep.subr.mxu0 0.0
    %2784 = vmatpush1.msra.mxu0 0.0
    %2785 = vmatprep.subr.mxu0 0.0
    %2786 = vmatpush1.msra.mxu0 0.0
    %2787 = vmatprep.subr.mxu0 0.0
    %2788 = vmatpush1.msra.mxu0 0.0
    %2789 = vmatprep.subr.mxu0 0.0
    %2790 = vmatpush1.msra.mxu0 0.0
    %2791 = vmatprep.subr.mxu0 0.0
    %2792 = vmatpush1.msra.mxu0 0.0
    %2793 = vmatprep.subr.mxu0 0.0
    %2794 = vmatpush1.msra.mxu0 0.0
    %2795 = vmatprep.subr.mxu0 0.0
    %2796 = vmatpush1.msra.mxu0 0.0
    %2797 = vmatprep.subr.mxu0 0.0
    %2798 = vmatpush1.msra.mxu0 0.0
    %2799 = vmatprep.subr.mxu0 0.0
    %2800 = vmatpush1.msra.mxu0 0.0
    %2801 = vmatprep.subr.mxu0 0.0
    %2802 = vmatpush1.msra.mxu0 0.0
    %2803 = vmatprep.mubr.f32.mxu0 0.0
    %2804 = vmatmul.mubr.f32.gmra.mrb[0].mxu0 %v2737
    %v2805 = vpop.f32.mrb[0].mxu0
    %v2806 = vadd.f32 0.0, %v2805
    %v2807 = vpop.f32.mrb[0].mxu0
    %2808 = vdwg.mxu0
    %v2809 = vadd.f32 %v2655, %v2806
    %s2810 = scalar_lea.vmem %s11, 24
    %v2811 = vld [vmem:[%s2810] sm:$0x3]
    %v2813 = vsel %vm75, %v2811, 0
    %2815 = vmatprep.subr.mxu0 0.0
    %2816 = vmatpush1.msra.mxu0 %v849
    %2817 = vmatprep.subr.mxu0 0.0
    %2818 = vmatpush1.msra.mxu0 %v850
    %2819 = vmatprep.subr.mxu0 0.0
    %2820 = vmatpush1.msra.mxu0 %v851
    %2821 = vmatprep.subr.mxu0 0.0
    %2822 = vmatpush1.msra.mxu0 %v852
    %2823 = vmatprep.subr.mxu0 0.0
    %2824 = vmatpush1.msra.mxu0 0.0
    %2825 = vmatprep.subr.mxu0 0.0
    %2826 = vmatpush1.msra.mxu0 0.0
    %2827 = vmatprep.subr.mxu0 0.0
    %2828 = vmatpush1.msra.mxu0 0.0
    %2829 = vmatprep.subr.mxu0 0.0
    %2830 = vmatpush1.msra.mxu0 0.0
    %2831 = vmatprep.subr.mxu0 0.0
    %2832 = vmatpush1.msra.mxu0 0.0
    %2833 = vmatprep.subr.mxu0 0.0
    %2834 = vmatpush1.msra.mxu0 0.0
    %2835 = vmatprep.subr.mxu0 0.0
    %2836 = vmatpush1.msra.mxu0 0.0
    %2837 = vmatprep.subr.mxu0 0.0
    %2838 = vmatpush1.msra.mxu0 0.0
    %2839 = vmatprep.subr.mxu0 0.0
    %2840 = vmatpush1.msra.mxu0 0.0
    %2841 = vmatprep.subr.mxu0 0.0
    %2842 = vmatpush1.msra.mxu0 0.0
    %2843 = vmatprep.subr.mxu0 0.0
    %2844 = vmatpush1.msra.mxu0 0.0
    %2845 = vmatprep.subr.mxu0 0.0
    %2846 = vmatpush1.msra.mxu0 0.0
    %2847 = vmatprep.subr.mxu0 0.0
    %2848 = vmatpush1.msra.mxu0 0.0
    %2849 = vmatprep.subr.mxu0 0.0
    %2850 = vmatpush1.msra.mxu0 0.0
    %2851 = vmatprep.subr.mxu0 0.0
    %2852 = vmatpush1.msra.mxu0 0.0
    %2853 = vmatprep.subr.mxu0 0.0
    %2854 = vmatpush1.msra.mxu0 0.0
    %2855 = vmatprep.subr.mxu0 0.0
    %2856 = vmatpush1.msra.mxu0 0.0
    %2857 = vmatprep.subr.mxu0 0.0
    %2858 = vmatpush1.msra.mxu0 0.0
    %2859 = vmatprep.subr.mxu0 0.0
    %2860 = vmatpush1.msra.mxu0 0.0
    %2861 = vmatprep.subr.mxu0 0.0
    %2862 = vmatpush1.msra.mxu0 0.0
    %2863 = vmatprep.subr.mxu0 0.0
    %2864 = vmatpush1.msra.mxu0 0.0
    %2865 = vmatprep.subr.mxu0 0.0
    %2866 = vmatpush1.msra.mxu0 0.0
    %2867 = vmatprep.subr.mxu0 0.0
    %2868 = vmatpush1.msra.mxu0 0.0
    %2869 = vmatprep.subr.mxu0 0.0
    %2870 = vmatpush1.msra.mxu0 0.0
    %2871 = vmatprep.subr.mxu0 0.0
    %2872 = vmatpush1.msra.mxu0 0.0
    %2873 = vmatprep.subr.mxu0 0.0
    %2874 = vmatpush1.msra.mxu0 0.0
    %2875 = vmatprep.subr.mxu0 0.0
    %2876 = vmatpush1.msra.mxu0 0.0
    %2877 = vmatprep.subr.mxu0 0.0
    %2878 = vmatpush1.msra.mxu0 0.0
    %2879 = vmatprep.mubr.f32.mxu0 0.0
    %2880 = vmatmul.mubr.f32.gmra.mrb[0].mxu0 %v2813
    %v2881 = vpop.f32.mrb[0].mxu0
    %v2882 = vadd.f32 0.0, %v2881
    %v2883 = vpop.f32.mrb[0].mxu0
    %2884 = vdwg.mxu0
    %s2885 = scalar_lea.vmem [#allocation3], 384
    %v2886 = vld [vmem:[%s2885] sm:$0xff]
    %v2887 = vld [vmem:[%s2885 + $0x8] sm:$0xff]
    %v2888 = vld [vmem:[%s2885 + $0x10] sm:$0xff]
    %v2889 = vld [vmem:[%s2885 + $0x18] sm:$0xff]
    %v2891 = vsel %vm75, %v2882, 0
    %2893 = vmatprep.subr.mxu0 0.0
    %2894 = vmatpush1.msra.mxu0 %v2886
    %2895 = vmatprep.subr.mxu0 0.0
    %2896 = vmatpush1.msra.mxu0 %v2887
    %2897 = vmatprep.subr.mxu0 0.0
    %2898 = vmatpush1.msra.mxu0 %v2888
    %2899 = vmatprep.subr.mxu0 0.0
    %2900 = vmatpush1.msra.mxu0 %v2889
    %2901 = vmatprep.subr.mxu0 0.0
    %2902 = vmatpush1.msra.mxu0 0.0
    %2903 = vmatprep.subr.mxu0 0.0
    %2904 = vmatpush1.msra.mxu0 0.0
    %2905 = vmatprep.subr.mxu0 0.0
    %2906 = vmatpush1.msra.mxu0 0.0
    %2907 = vmatprep.subr.mxu0 0.0
    %2908 = vmatpush1.msra.mxu0 0.0
    %2909 = vmatprep.subr.mxu0 0.0
    %2910 = vmatpush1.msra.mxu0 0.0
    %2911 = vmatprep.subr.mxu0 0.0
    %2912 = vmatpush1.msra.mxu0 0.0
    %2913 = vmatprep.subr.mxu0 0.0
    %2914 = vmatpush1.msra.mxu0 0.0
    %2915 = vmatprep.subr.mxu0 0.0
    %2916 = vmatpush1.msra.mxu0 0.0
    %2917 = vmatprep.subr.mxu0 0.0
    %2918 = vmatpush1.msra.mxu0 0.0
    %2919 = vmatprep.subr.mxu0 0.0
    %2920 = vmatpush1.msra.mxu0 0.0
    %2921 = vmatprep.subr.mxu0 0.0
    %2922 = vmatpush1.msra.mxu0 0.0
    %2923 = vmatprep.subr.mxu0 0.0
    %2924 = vmatpush1.msra.mxu0 0.0
    %2925 = vmatprep.subr.mxu0 0.0
    %2926 = vmatpush1.msra.mxu0 0.0
    %2927 = vmatprep.subr.mxu0 0.0
    %2928 = vmatpush1.msra.mxu0 0.0
    %2929 = vmatprep.subr.mxu0 0.0
    %2930 = vmatpush1.msra.mxu0 0.0
    %2931 = vmatprep.subr.mxu0 0.0
    %2932 = vmatpush1.msra.mxu0 0.0
    %2933 = vmatprep.subr.mxu0 0.0
    %2934 = vmatpush1.msra.mxu0 0.0
    %2935 = vmatprep.subr.mxu0 0.0
    %2936 = vmatpush1.msra.mxu0 0.0
    %2937 = vmatprep.subr.mxu0 0.0
    %2938 = vmatpush1.msra.mxu0 0.0
    %2939 = vmatprep.subr.mxu0 0.0
    %2940 = vmatpush1.msra.mxu0 0.0
    %2941 = vmatprep.subr.mxu0 0.0
    %2942 = vmatpush1.msra.mxu0 0.0
    %2943 = vmatprep.subr.mxu0 0.0
    %2944 = vmatpush1.msra.mxu0 0.0
    %2945 = vmatprep.subr.mxu0 0.0
    %2946 = vmatpush1.msra.mxu0 0.0
    %2947 = vmatprep.subr.mxu0 0.0
    %2948 = vmatpush1.msra.mxu0 0.0
    %2949 = vmatprep.subr.mxu0 0.0
    %2950 = vmatpush1.msra.mxu0 0.0
    %2951 = vmatprep.subr.mxu0 0.0
    %2952 = vmatpush1.msra.mxu0 0.0
    %2953 = vmatprep.subr.mxu0 0.0
    %2954 = vmatpush1.msra.mxu0 0.0
    %2955 = vmatprep.subr.mxu0 0.0
    %2956 = vmatpush1.msra.mxu0 0.0
    %2957 = vmatprep.mubr.f32.mxu0 0.0
    %2958 = vmatmul.mubr.f32.gmra.mrb[0].mxu0 %v2891
    %v2959 = vpop.f32.mrb[0].mxu0
    %v2960 = vadd.f32 0.0, %v2959
    %v2961 = vpop.f32.mrb[0].mxu0
    %2962 = vdwg.mxu0
    %v2963 = vadd.f32 %v2809, %v2960
    %s2964 = scalar_lea.vmem %s11, 26
    %v2965 = vld [vmem:[%s2964] sm:$0x3]
    %v2967 = vsel %vm75, %v2965, 0
    %2969 = vmatprep.subr.mxu0 0.0
    %2970 = vmatpush1.msra.mxu0 %v849
    %2971 = vmatprep.subr.mxu0 0.0
    %2972 = vmatpush1.msra.mxu0 %v850
    %2973 = vmatprep.subr.mxu0 0.0
    %2974 = vmatpush1.msra.mxu0 %v851
    %2975 = vmatprep.subr.mxu0 0.0
    %2976 = vmatpush1.msra.mxu0 %v852
    %2977 = vmatprep.subr.mxu0 0.0
    %2978 = vmatpush1.msra.mxu0 0.0
    %2979 = vmatprep.subr.mxu0 0.0
    %2980 = vmatpush1.msra.mxu0 0.0
    %2981 = vmatprep.subr.mxu0 0.0
    %2982 = vmatpush1.msra.mxu0 0.0
    %2983 = vmatprep.subr.mxu0 0.0
    %2984 = vmatpush1.msra.mxu0 0.0
    %2985 = vmatprep.subr.mxu0 0.0
    %2986 = vmatpush1.msra.mxu0 0.0
    %2987 = vmatprep.subr.mxu0 0.0
    %2988 = vmatpush1.msra.mxu0 0.0
    %2989 = vmatprep.subr.mxu0 0.0
    %2990 = vmatpush1.msra.mxu0 0.0
    %2991 = vmatprep.subr.mxu0 0.0
    %2992 = vmatpush1.msra.mxu0 0.0
    %2993 = vmatprep.subr.mxu0 0.0
    %2994 = vmatpush1.msra.mxu0 0.0
    %2995 = vmatprep.subr.mxu0 0.0
    %2996 = vmatpush1.msra.mxu0 0.0
    %2997 = vmatprep.subr.mxu0 0.0
    %2998 = vmatpush1.msra.mxu0 0.0
    %2999 = vmatprep.subr.mxu0 0.0
    %3000 = vmatpush1.msra.mxu0 0.0
    %3001 = vmatprep.subr.mxu0 0.0
    %3002 = vmatpush1.msra.mxu0 0.0
    %3003 = vmatprep.subr.mxu0 0.0
    %3004 = vmatpush1.msra.mxu0 0.0
    %3005 = vmatprep.subr.mxu0 0.0
    %3006 = vmatpush1.msra.mxu0 0.0
    %3007 = vmatprep.subr.mxu0 0.0
    %3008 = vmatpush1.msra.mxu0 0.0
    %3009 = vmatprep.subr.mxu0 0.0
    %3010 = vmatpush1.msra.mxu0 0.0
    %3011 = vmatprep.subr.mxu0 0.0
    %3012 = vmatpush1.msra.mxu0 0.0
    %3013 = vmatprep.subr.mxu0 0.0
    %3014 = vmatpush1.msra.mxu0 0.0
    %3015 = vmatprep.subr.mxu0 0.0
    %3016 = vmatpush1.msra.mxu0 0.0
    %3017 = vmatprep.subr.mxu0 0.0
    %3018 = vmatpush1.msra.mxu0 0.0
    %3019 = vmatprep.subr.mxu0 0.0
    %3020 = vmatpush1.msra.mxu0 0.0
    %3021 = vmatprep.subr.mxu0 0.0
    %3022 = vmatpush1.msra.mxu0 0.0
    %3023 = vmatprep.subr.mxu0 0.0
    %3024 = vmatpush1.msra.mxu0 0.0
    %3025 = vmatprep.subr.mxu0 0.0
    %3026 = vmatpush1.msra.mxu0 0.0
    %3027 = vmatprep.subr.mxu0 0.0
    %3028 = vmatpush1.msra.mxu0 0.0
    %3029 = vmatprep.subr.mxu0 0.0
    %3030 = vmatpush1.msra.mxu0 0.0
    %3031 = vmatprep.subr.mxu0 0.0
    %3032 = vmatpush1.msra.mxu0 0.0
    %3033 = vmatprep.mubr.f32.mxu0 0.0
    %3034 = vmatmul.mubr.f32.gmra.mrb[0].mxu0 %v2967
    %v3035 = vpop.f32.mrb[0].mxu0
    %v3036 = vadd.f32 0.0, %v3035
    %v3037 = vpop.f32.mrb[0].mxu0
    %3038 = vdwg.mxu0
    %s3039 = scalar_lea.vmem [#allocation3], 416
    %v3040 = vld [vmem:[%s3039] sm:$0xff]
    %v3041 = vld [vmem:[%s3039 + $0x8] sm:$0xff]
    %v3042 = vld [vmem:[%s3039 + $0x10] sm:$0xff]
    %v3043 = vld [vmem:[%s3039 + $0x18] sm:$0xff]
    %v3045 = vsel %vm75, %v3036, 0
    %3047 = vmatprep.subr.mxu0 0.0
    %3048 = vmatpush1.msra.mxu0 %v3040
    %3049 = vmatprep.subr.mxu0 0.0
    %3050 = vmatpush1.msra.mxu0 %v3041
    %3051 = vmatprep.subr.mxu0 0.0
    %3052 = vmatpush1.msra.mxu0 %v3042
    %3053 = vmatprep.subr.mxu0 0.0
    %3054 = vmatpush1.msra.mxu0 %v3043
    %3055 = vmatprep.subr.mxu0 0.0
    %3056 = vmatpush1.msra.mxu0 0.0
    %3057 = vmatprep.subr.mxu0 0.0
    %3058 = vmatpush1.msra.mxu0 0.0
    %3059 = vmatprep.subr.mxu0 0.0
    %3060 = vmatpush1.msra.mxu0 0.0
    %3061 = vmatprep.subr.mxu0 0.0
    %3062 = vmatpush1.msra.mxu0 0.0
    %3063 = vmatprep.subr.mxu0 0.0
    %3064 = vmatpush1.msra.mxu0 0.0
    %3065 = vmatprep.subr.mxu0 0.0
    %3066 = vmatpush1.msra.mxu0 0.0
    %3067 = vmatprep.subr.mxu0 0.0
    %3068 = vmatpush1.msra.mxu0 0.0
    %3069 = vmatprep.subr.mxu0 0.0
    %3070 = vmatpush1.msra.mxu0 0.0
    %3071 = vmatprep.subr.mxu0 0.0
    %3072 = vmatpush1.msra.mxu0 0.0
    %3073 = vmatprep.subr.mxu0 0.0
    %3074 = vmatpush1.msra.mxu0 0.0
    %3075 = vmatprep.subr.mxu0 0.0
    %3076 = vmatpush1.msra.mxu0 0.0
    %3077 = vmatprep.subr.mxu0 0.0
    %3078 = vmatpush1.msra.mxu0 0.0
    %3079 = vmatprep.subr.mxu0 0.0
    %3080 = vmatpush1.msra.mxu0 0.0
    %3081 = vmatprep.subr.mxu0 0.0
    %3082 = vmatpush1.msra.mxu0 0.0
    %3083 = vmatprep.subr.mxu0 0.0
    %3084 = vmatpush1.msra.mxu0 0.0
    %3085 = vmatprep.subr.mxu0 0.0
    %3086 = vmatpush1.msra.mxu0 0.0
    %3087 = vmatprep.subr.mxu0 0.0
    %3088 = vmatpush1.msra.mxu0 0.0
    %3089 = vmatprep.subr.mxu0 0.0
    %3090 = vmatpush1.msra.mxu0 0.0
    %3091 = vmatprep.subr.mxu0 0.0
    %3092 = vmatpush1.msra.mxu0 0.0
    %3093 = vmatprep.subr.mxu0 0.0
    %3094 = vmatpush1.msra.mxu0 0.0
    %3095 = vmatprep.subr.mxu0 0.0
    %3096 = vmatpush1.msra.mxu0 0.0
    %3097 = vmatprep.subr.mxu0 0.0
    %3098 = vmatpush1.msra.mxu0 0.0
    %3099 = vmatprep.subr.mxu0 0.0
    %3100 = vmatpush1.msra.mxu0 0.0
    %3101 = vmatprep.subr.mxu0 0.0
    %3102 = vmatpush1.msra.mxu0 0.0
    %3103 = vmatprep.subr.mxu0 0.0
    %3104 = vmatpush1.msra.mxu0 0.0
    %3105 = vmatprep.subr.mxu0 0.0
    %3106 = vmatpush1.msra.mxu0 0.0
    %3107 = vmatprep.subr.mxu0 0.0
    %3108 = vmatpush1.msra.mxu0 0.0
    %3109 = vmatprep.subr.mxu0 0.0
    %3110 = vmatpush1.msra.mxu0 0.0
    %3111 = vmatprep.mubr.f32.mxu0 0.0
    %3112 = vmatmul.mubr.f32.gmra.mrb[0].mxu0 %v3045
    %v3113 = vpop.f32.mrb[0].mxu0
    %v3114 = vadd.f32 0.0, %v3113
    %v3115 = vpop.f32.mrb[0].mxu0
    %3116 = vdwg.mxu0
    %v3117 = vadd.f32 %v2963, %v3114
    %s3118 = scalar_lea.vmem %s11, 28
    %v3119 = vld [vmem:[%s3118] sm:$0x3]
    %v3121 = vsel %vm75, %v3119, 0
    %3123 = vmatprep.subr.mxu0 0.0
    %3124 = vmatpush1.msra.mxu0 %v849
    %3125 = vmatprep.subr.mxu0 0.0
    %3126 = vmatpush1.msra.mxu0 %v850
    %3127 = vmatprep.subr.mxu0 0.0
    %3128 = vmatpush1.msra.mxu0 %v851
    %3129 = vmatprep.subr.mxu0 0.0
    %3130 = vmatpush1.msra.mxu0 %v852
    %3131 = vmatprep.subr.mxu0 0.0
    %3132 = vmatpush1.msra.mxu0 0.0
    %3133 = vmatprep.subr.mxu0 0.0
    %3134 = vmatpush1.msra.mxu0 0.0
    %3135 = vmatprep.subr.mxu0 0.0
    %3136 = vmatpush1.msra.mxu0 0.0
    %3137 = vmatprep.subr.mxu0 0.0
    %3138 = vmatpush1.msra.mxu0 0.0
    %3139 = vmatprep.subr.mxu0 0.0
    %3140 = vmatpush1.msra.mxu0 0.0
    %3141 = vmatprep.subr.mxu0 0.0
    %3142 = vmatpush1.msra.mxu0 0.0
    %3143 = vmatprep.subr.mxu0 0.0
    %3144 = vmatpush1.msra.mxu0 0.0
    %3145 = vmatprep.subr.mxu0 0.0
    %3146 = vmatpush1.msra.mxu0 0.0
    %3147 = vmatprep.subr.mxu0 0.0
    %3148 = vmatpush1.msra.mxu0 0.0
    %3149 = vmatprep.subr.mxu0 0.0
    %3150 = vmatpush1.msra.mxu0 0.0
    %3151 = vmatprep.subr.mxu0 0.0
    %3152 = vmatpush1.msra.mxu0 0.0
    %3153 = vmatprep.subr.mxu0 0.0
    %3154 = vmatpush1.msra.mxu0 0.0
    %3155 = vmatprep.subr.mxu0 0.0
    %3156 = vmatpush1.msra.mxu0 0.0
    %3157 = vmatprep.subr.mxu0 0.0
    %3158 = vmatpush1.msra.mxu0 0.0
    %3159 = vmatprep.subr.mxu0 0.0
    %3160 = vmatpush1.msra.mxu0 0.0
    %3161 = vmatprep.subr.mxu0 0.0
    %3162 = vmatpush1.msra.mxu0 0.0
    %3163 = vmatprep.subr.mxu0 0.0
    %3164 = vmatpush1.msra.mxu0 0.0
    %3165 = vmatprep.subr.mxu0 0.0
    %3166 = vmatpush1.msra.mxu0 0.0
    %3167 = vmatprep.subr.mxu0 0.0
    %3168 = vmatpush1.msra.mxu0 0.0
    %3169 = vmatprep.subr.mxu0 0.0
    %3170 = vmatpush1.msra.mxu0 0.0
    %3171 = vmatprep.subr.mxu0 0.0
    %3172 = vmatpush1.msra.mxu0 0.0
    %3173 = vmatprep.subr.mxu0 0.0
    %3174 = vmatpush1.msra.mxu0 0.0
    %3175 = vmatprep.subr.mxu0 0.0
    %3176 = vmatpush1.msra.mxu0 0.0
    %3177 = vmatprep.subr.mxu0 0.0
    %3178 = vmatpush1.msra.mxu0 0.0
    %3179 = vmatprep.subr.mxu0 0.0
    %3180 = vmatpush1.msra.mxu0 0.0
    %3181 = vmatprep.subr.mxu0 0.0
    %3182 = vmatpush1.msra.mxu0 0.0
    %3183 = vmatprep.subr.mxu0 0.0
    %3184 = vmatpush1.msra.mxu0 0.0
    %3185 = vmatprep.subr.mxu0 0.0
    %3186 = vmatpush1.msra.mxu0 0.0
    %3187 = vmatprep.mubr.f32.mxu0 0.0
    %3188 = vmatmul.mubr.f32.gmra.mrb[0].mxu0 %v3121
    %v3189 = vpop.f32.mrb[0].mxu0
    %v3190 = vadd.f32 0.0, %v3189
    %v3191 = vpop.f32.mrb[0].mxu0
    %3192 = vdwg.mxu0
    %s3193 = scalar_lea.vmem [#allocation3], 448
    %v3194 = vld [vmem:[%s3193] sm:$0xff]
    %v3195 = vld [vmem:[%s3193 + $0x8] sm:$0xff]
    %v3196 = vld [vmem:[%s3193 + $0x10] sm:$0xff]
    %v3197 = vld [vmem:[%s3193 + $0x18] sm:$0xff]
    %v3199 = vsel %vm75, %v3190, 0
    %3201 = vmatprep.subr.mxu0 0.0
    %3202 = vmatpush1.msra.mxu0 %v3194
    %3203 = vmatprep.subr.mxu0 0.0
    %3204 = vmatpush1.msra.mxu0 %v3195
    %3205 = vmatprep.subr.mxu0 0.0
    %3206 = vmatpush1.msra.mxu0 %v3196
    %3207 = vmatprep.subr.mxu0 0.0
    %3208 = vmatpush1.msra.mxu0 %v3197
    %3209 = vmatprep.subr.mxu0 0.0
    %3210 = vmatpush1.msra.mxu0 0.0
    %3211 = vmatprep.subr.mxu0 0.0
    %3212 = vmatpush1.msra.mxu0 0.0
    %3213 = vmatprep.subr.mxu0 0.0
    %3214 = vmatpush1.msra.mxu0 0.0
    %3215 = vmatprep.subr.mxu0 0.0
    %3216 = vmatpush1.msra.mxu0 0.0
    %3217 = vmatprep.subr.mxu0 0.0
    %3218 = vmatpush1.msra.mxu0 0.0
    %3219 = vmatprep.subr.mxu0 0.0
    %3220 = vmatpush1.msra.mxu0 0.0
    %3221 = vmatprep.subr.mxu0 0.0
    %3222 = vmatpush1.msra.mxu0 0.0
    %3223 = vmatprep.subr.mxu0 0.0
    %3224 = vmatpush1.msra.mxu0 0.0
    %3225 = vmatprep.subr.mxu0 0.0
    %3226 = vmatpush1.msra.mxu0 0.0
    %3227 = vmatprep.subr.mxu0 0.0
    %3228 = vmatpush1.msra.mxu0 0.0
    %3229 = vmatprep.subr.mxu0 0.0
    %3230 = vmatpush1.msra.mxu0 0.0
    %3231 = vmatprep.subr.mxu0 0.0
    %3232 = vmatpush1.msra.mxu0 0.0
    %3233 = vmatprep.subr.mxu0 0.0
    %3234 = vmatpush1.msra.mxu0 0.0
    %3235 = vmatprep.subr.mxu0 0.0
    %3236 = vmatpush1.msra.mxu0 0.0
    %3237 = vmatprep.subr.mxu0 0.0
    %3238 = vmatpush1.msra.mxu0 0.0
    %3239 = vmatprep.subr.mxu0 0.0
    %3240 = vmatpush1.msra.mxu0 0.0
    %3241 = vmatprep.subr.mxu0 0.0
    %3242 = vmatpush1.msra.mxu0 0.0
    %3243 = vmatprep.subr.mxu0 0.0
    %3244 = vmatpush1.msra.mxu0 0.0
    %3245 = vmatprep.subr.mxu0 0.0
    %3246 = vmatpush1.msra.mxu0 0.0
    %3247 = vmatprep.subr.mxu0 0.0
    %3248 = vmatpush1.msra.mxu0 0.0
    %3249 = vmatprep.subr.mxu0 0.0
    %3250 = vmatpush1.msra.mxu0 0.0
    %3251 = vmatprep.subr.mxu0 0.0
    %3252 = vmatpush1.msra.mxu0 0.0
    %3253 = vmatprep.subr.mxu0 0.0
    %3254 = vmatpush1.msra.mxu0 0.0
    %3255 = vmatprep.subr.mxu0 0.0
    %3256 = vmatpush1.msra.mxu0 0.0
    %3257 = vmatprep.subr.mxu0 0.0
    %3258 = vmatpush1.msra.mxu0 0.0
    %3259 = vmatprep.subr.mxu0 0.0
    %3260 = vmatpush1.msra.mxu0 0.0
    %3261 = vmatprep.subr.mxu0 0.0
    %3262 = vmatpush1.msra.mxu0 0.0
    %3263 = vmatprep.subr.mxu0 0.0
    %3264 = vmatpush1.msra.mxu0 0.0
    %3265 = vmatprep.mubr.f32.mxu0 0.0
    %3266 = vmatmul.mubr.f32.gmra.mrb[0].mxu0 %v3199
    %v3267 = vpop.f32.mrb[0].mxu0
    %v3268 = vadd.f32 0.0, %v3267
    %v3269 = vpop.f32.mrb[0].mxu0
    %3270 = vdwg.mxu0
    %v3271 = vadd.f32 %v3117, %v3268
    %s3272 = scalar_lea.vmem %s11, 30
    %v3273 = vld [vmem:[%s3272] sm:$0x3]
    %v3275 = vsel %vm75, %v3273, 0
    %3277 = vmatprep.subr.mxu0 0.0
    %3278 = vmatpush1.msra.mxu0 %v849
    %3279 = vmatprep.subr.mxu0 0.0
    %3280 = vmatpush1.msra.mxu0 %v850
    %3281 = vmatprep.subr.mxu0 0.0
    %3282 = vmatpush1.msra.mxu0 %v851
    %3283 = vmatprep.subr.mxu0 0.0
    %3284 = vmatpush1.msra.mxu0 %v852
    %3285 = vmatprep.subr.mxu0 0.0
    %3286 = vmatpush1.msra.mxu0 0.0
    %3287 = vmatprep.subr.mxu0 0.0
    %3288 = vmatpush1.msra.mxu0 0.0
    %3289 = vmatprep.subr.mxu0 0.0
    %3290 = vmatpush1.msra.mxu0 0.0
    %3291 = vmatprep.subr.mxu0 0.0
    %3292 = vmatpush1.msra.mxu0 0.0
    %3293 = vmatprep.subr.mxu0 0.0
    %3294 = vmatpush1.msra.mxu0 0.0
    %3295 = vmatprep.subr.mxu0 0.0
    %3296 = vmatpush1.msra.mxu0 0.0
    %3297 = vmatprep.subr.mxu0 0.0
    %3298 = vmatpush1.msra.mxu0 0.0
    %3299 = vmatprep.subr.mxu0 0.0
    %3300 = vmatpush1.msra.mxu0 0.0
    %3301 = vmatprep.subr.mxu0 0.0
    %3302 = vmatpush1.msra.mxu0 0.0
    %3303 = vmatprep.subr.mxu0 0.0
    %3304 = vmatpush1.msra.mxu0 0.0
    %3305 = vmatprep.subr.mxu0 0.0
    %3306 = vmatpush1.msra.mxu0 0.0
    %3307 = vmatprep.subr.mxu0 0.0
    %3308 = vmatpush1.msra.mxu0 0.0
    %3309 = vmatprep.subr.mxu0 0.0
    %3310 = vmatpush1.msra.mxu0 0.0
    %3311 = vmatprep.subr.mxu0 0.0
    %3312 = vmatpush1.msra.mxu0 0.0
    %3313 = vmatprep.subr.mxu0 0.0
    %3314 = vmatpush1.msra.mxu0 0.0
    %3315 = vmatprep.subr.mxu0 0.0
    %3316 = vmatpush1.msra.mxu0 0.0
    %3317 = vmatprep.subr.mxu0 0.0
    %3318 = vmatpush1.msra.mxu0 0.0
    %3319 = vmatprep.subr.mxu0 0.0
    %3320 = vmatpush1.msra.mxu0 0.0
    %3321 = vmatprep.subr.mxu0 0.0
    %3322 = vmatpush1.msra.mxu0 0.0
    %3323 = vmatprep.subr.mxu0 0.0
    %3324 = vmatpush1.msra.mxu0 0.0
    %3325 = vmatprep.subr.mxu0 0.0
    %3326 = vmatpush1.msra.mxu0 0.0
    %3327 = vmatprep.subr.mxu0 0.0
    %3328 = vmatpush1.msra.mxu0 0.0
    %3329 = vmatprep.subr.mxu0 0.0
    %3330 = vmatpush1.msra.mxu0 0.0
    %3331 = vmatprep.subr.mxu0 0.0
    %3332 = vmatpush1.msra.mxu0 0.0
    %3333 = vmatprep.subr.mxu0 0.0
    %3334 = vmatpush1.msra.mxu0 0.0
    %3335 = vmatprep.subr.mxu0 0.0
    %3336 = vmatpush1.msra.mxu0 0.0
    %3337 = vmatprep.subr.mxu0 0.0
    %3338 = vmatpush1.msra.mxu0 0.0
    %3339 = vmatprep.subr.mxu0 0.0
    %3340 = vmatpush1.msra.mxu0 0.0
    %3341 = vmatprep.mubr.f32.mxu0 0.0
    %3342 = vmatmul.mubr.f32.gmra.mrb[0].mxu0 %v3275
    %v3343 = vpop.f32.mrb[0].mxu0
    %v3344 = vadd.f32 0.0, %v3343
    %v3345 = vpop.f32.mrb[0].mxu0
    %3346 = vdwg.mxu0
    %s3347 = scalar_lea.vmem [#allocation3], 480
    %v3348 = vld [vmem:[%s3347] sm:$0xff]
    %v3349 = vld [vmem:[%s3347 + $0x8] sm:$0xff]
    %v3350 = vld [vmem:[%s3347 + $0x10] sm:$0xff]
    %v3351 = vld [vmem:[%s3347 + $0x18] sm:$0xff]
    %v3353 = vsel %vm75, %v3344, 0
    %3355 = vmatprep.subr.mxu0 0.0
    %3356 = vmatpush1.msra.mxu0 %v3348
    %3357 = vmatprep.subr.mxu0 0.0
    %3358 = vmatpush1.msra.mxu0 %v3349
    %3359 = vmatprep.subr.mxu0 0.0
    %3360 = vmatpush1.msra.mxu0 %v3350
    %3361 = vmatprep.subr.mxu0 0.0
    %3362 = vmatpush1.msra.mxu0 %v3351
    %3363 = vmatprep.subr.mxu0 0.0
    %3364 = vmatpush1.msra.mxu0 0.0
    %3365 = vmatprep.subr.mxu0 0.0
    %3366 = vmatpush1.msra.mxu0 0.0
    %3367 = vmatprep.subr.mxu0 0.0
    %3368 = vmatpush1.msra.mxu0 0.0
    %3369 = vmatprep.subr.mxu0 0.0
    %3370 = vmatpush1.msra.mxu0 0.0
    %3371 = vmatprep.subr.mxu0 0.0
    %3372 = vmatpush1.msra.mxu0 0.0
    %3373 = vmatprep.subr.mxu0 0.0
    %3374 = vmatpush1.msra.mxu0 0.0
    %3375 = vmatprep.subr.mxu0 0.0
    %3376 = vmatpush1.msra.mxu0 0.0
    %3377 = vmatprep.subr.mxu0 0.0
    %3378 = vmatpush1.msra.mxu0 0.0
    %3379 = vmatprep.subr.mxu0 0.0
    %3380 = vmatpush1.msra.mxu0 0.0
    %3381 = vmatprep.subr.mxu0 0.0
    %3382 = vmatpush1.msra.mxu0 0.0
    %3383 = vmatprep.subr.mxu0 0.0
    %3384 = vmatpush1.msra.mxu0 0.0
    %3385 = vmatprep.subr.mxu0 0.0
    %3386 = vmatpush1.msra.mxu0 0.0
    %3387 = vmatprep.subr.mxu0 0.0
    %3388 = vmatpush1.msra.mxu0 0.0
    %3389 = vmatprep.subr.mxu0 0.0
    %3390 = vmatpush1.msra.mxu0 0.0
    %3391 = vmatprep.subr.mxu0 0.0
    %3392 = vmatpush1.msra.mxu0 0.0
    %3393 = vmatprep.subr.mxu0 0.0
    %3394 = vmatpush1.msra.mxu0 0.0
    %3395 = vmatprep.subr.mxu0 0.0
    %3396 = vmatpush1.msra.mxu0 0.0
    %3397 = vmatprep.subr.mxu0 0.0
    %3398 = vmatpush1.msra.mxu0 0.0
    %3399 = vmatprep.subr.mxu0 0.0
    %3400 = vmatpush1.msra.mxu0 0.0
    %3401 = vmatprep.subr.mxu0 0.0
    %3402 = vmatpush1.msra.mxu0 0.0
    %3403 = vmatprep.subr.mxu0 0.0
    %3404 = vmatpush1.msra.mxu0 0.0
    %3405 = vmatprep.subr.mxu0 0.0
    %3406 = vmatpush1.msra.mxu0 0.0
    %3407 = vmatprep.subr.mxu0 0.0
    %3408 = vmatpush1.msra.mxu0 0.0
    %3409 = vmatprep.subr.mxu0 0.0
    %3410 = vmatpush1.msra.mxu0 0.0
    %3411 = vmatprep.subr.mxu0 0.0
    %3412 = vmatpush1.msra.mxu0 0.0
    %3413 = vmatprep.subr.mxu0 0.0
    %3414 = vmatpush1.msra.mxu0 0.0
    %3415 = vmatprep.subr.mxu0 0.0
    %3416 = vmatpush1.msra.mxu0 0.0
    %3417 = vmatprep.subr.mxu0 0.0
    %3418 = vmatpush1.msra.mxu0 0.0
    %3419 = vmatprep.mubr.f32.mxu0 0.0
    %3420 = vmatmul.mubr.f32.gmra.mrb[0].mxu0 %v3353
    %v3421 = vpop.f32.mrb[0].mxu0
    %v3422 = vadd.f32 0.0, %v3421
    %v3423 = vpop.f32.mrb[0].mxu0
    %3424 = vdwg.mxu0
    %v3425 = vadd.f32 %v3271, %v3422
    %v3426 = vld [vmem:[%s10] sm:$0x1]
    %v3428 = vlaneseq
    %v3429 = vshrl.u32 %v3428, 7
    %v3430 = vsub.s32 0, %v3429
    %v3431 = vrot.slane %v3426, %v3430
    %v3433 = vadd.f32 %v3425, %v3431
    %vm3434 = vcmask 558080
    %3435 = vst.msk [vmem:[#allocation6] sm:$0x3] %vm3434, %v3433
    // Predicated region
    $region54: #{stid_forward.1} parent=1 // pred_check
      _
    $region55: #{stid_forward.1} parent=1 // pred_check_branch
      %3437 = sbr.rel (0) target = $region57
    $region56: #{stid_forward.1} parent=1 // pred_region
      _
    $region57: #{stid_forward.1} parent=1 // pred_fallthru
      _
    // Predicated region
    $region58: #{stid_forward.1} parent=1 // pred_check
      _
    $region59: #{stid_forward.1} parent=1 // pred_check_branch
      %3439 = sbr.rel (0) target = $region61
    $region60: #{stid_forward.1} parent=1 // pred_region
      %s3441 = ssub.s32 32, 32
      %3442 = vsyncadd [#allocation5], %s3441
      %s3444 = sshll.u32 [#allocation6], 4
      %s3445 = int_to_ptr.vmem [resolvable:$true] %s3444
      %3447 = dma.vmem_to_hbm [thread:$0]  %s3445, 32, %s13, [#allocation5]
    $region61: #{stid_forward.1} parent=1 // pred_fallthru
      _
    // Predicated region
    $region62: #{stid_forward.1} parent=1 // pred_check
      _
    $region63: #{stid_forward.1} parent=1 // pred_check_branch
      %3449 = sbr.rel (0) target = $region65
    $region64: #{stid_forward.1} parent=1 // pred_region
      _
    $region65: #{stid_forward.1} parent=1 // pred_fallthru
      _
    // Predicated region
    $region66: #{stid_forward.1} parent=1 // pred_check
      _
    $region67: #{stid_forward.1} parent=1 // pred_check_branch
      %3451 = sbr.rel (0) target = $region69
    $region68: #{stid_forward.1} parent=1 // pred_region
      %3452 = dma.done [#allocation5], 32
    $region69: #{stid_forward.1} parent=1 // pred_fallthru
      _
    %3453 = vsyncpa [#allocation4], 1
    %3454 = vsyncpa [#allocation5], 1

</llo_original>
